<compile_context>
chip_gen: v6e
topology: v6e:2x2x1
jax: 0.10.0
libtpu: 0.0.40
codegen_flags: <defaults>
</compile_context>

<pallas_src>
import math

import jax
import jax.numpy as jnp
from jax.experimental import pallas as pl
from jax.experimental.pallas import tpu as pltpu


def _make_kernel(num_layers, num_parallels):
    L = num_layers
    P = num_parallels

    def kernel(x_ref, att_ref, prev_c_ref, prev_h_ref,
               a2a_both_w, a2a_both_b, h2a_w, h2a_b, h2a1_w, h2a1_b,
               d2d_w, d2d_b, d2d1_w, d2d1_b,
               lstm_w, lstm_b, proj_w, proj_b,
               out_c_ref, out_h_ref, logsoft_ref):
        B, A, R = att_ref.shape
        PR = P * R
        bf = jnp.bfloat16

        x = x_ref[...]                                   # (B, R)  (input_size == rnn_size)
        att = att_ref[...]                               # (B, A, R)
        att_flat = att.reshape(B * A, R)

        # ---------------- layer-invariant attention projections (hoisted) -------
        # one fused MXU call for a2a and a2a1: (B*A, R) @ (R, 2A)
        av_both = jnp.dot(att_flat.astype(bf), a2a_both_w[...],
                          preferred_element_type=jnp.float32) + a2a_both_b[...]
        av0 = av_both[:, 0:A].reshape(B, A, A)           # attention block 0
        av1 = av_both[:, A:2 * A].reshape(B, A, A)       # attention block 1

        # ---------------- attention block 0, batched over ALL layers ------------
        prev_h_all = prev_h_ref[...].reshape(L * B, R)            # (L*B, R)
        ah0 = jnp.dot(prev_h_all.astype(bf), h2a_w[...],
                      preferred_element_type=jnp.float32) + h2a_b[...]  # (L*B, A)
        av0_rep = jnp.concatenate([av0] * L, axis=0)              # (L*B, A, A)
        att_rep = jnp.concatenate([att] * L, axis=0)              # (L*B, A, R)
        dot0 = jnp.tanh(av0_rep + ah0[:, :, None])                # (L*B, A, A)
        score0 = jnp.sum(dot0 * d2d_w[...], axis=2) + d2d_b[...]  # (L*B, A)
        m0 = jnp.max(score0, axis=1, keepdims=True)
        e0 = jnp.exp(score0 - m0)
        w0 = e0 / jnp.sum(e0, axis=1, keepdims=True)
        prev_att_res_all = jnp.sum(att_rep * w0[:, :, None], axis=1)   # (L*B, R)

        inv_p = 1.0 / float(P)
        top_h = None
        for i in range(L):
            prev_c_i = prev_c_ref[i]                              # (B, R)
            prev_h_i = prev_h_ref[i]                              # (B, R)
            xt = x if i == 0 else x + top_h                       # needs input_size == rnn_size
            p_att = prev_att_res_all[i * B:(i + 1) * B]           # (B, R)

            # ---------------- fused parallel LSTM cells ----------------
            # one matmul (B, 3R) @ (3R, 4*P*R); columns are gate-major.
            zin = jnp.concatenate([xt, prev_h_i, p_att], axis=1)  # (B, 3R)
            sums = jnp.dot(zin.astype(bf), lstm_w[i],
                           preferred_element_type=jnp.float32) + lstm_b[i]   # (B, 4*P*R)

            # single tanh pass: sigmoid(x) = 0.5*(1 + tanh(x/2)) on gate lanes
            lane = jax.lax.broadcasted_iota(jnp.int32, sums.shape, 1)
            is_sig = lane < 3 * PR
            t = jnp.tanh(jnp.where(is_sig, 0.5 * sums, sums))
            act = jnp.where(is_sig, 0.5 * (t + 1.0), t)

            in_all = act[:, 0:PR]                                 # (B, P*R)
            fg_all = act[:, PR:2 * PR]
            out_all = act[:, 2 * PR:3 * PR]
            tr_all = act[:, 3 * PR:4 * PR]
            prev_c_rep = jnp.concatenate([prev_c_i] * P, axis=1)  # (B, P*R)

            nc_all = fg_all * prev_c_rep + in_all * tr_all        # (B, P*R)
            nh_all = out_all * jnp.tanh(nc_all)                   # (B, P*R)

            next_c = sum(nc_all[:, j * R:(j + 1) * R] for j in range(P)) * inv_p
            next_h = sum(nh_all[:, j * R:(j + 1) * R] for j in range(P)) * inv_p

            # ---------------- attention block 1 (per layer, depends on next_h) --
            ah1 = jnp.dot(next_h.astype(bf), h2a1_w[...],
                          preferred_element_type=jnp.float32) + h2a1_b[...]  # (B, A)
            dot1 = jnp.tanh(av1 + ah1[:, :, None])                           # (B, A, A)
            score1 = jnp.sum(dot1 * d2d1_w[...], axis=2) + d2d1_b[...]       # (B, A)
            m1 = jnp.max(score1, axis=1, keepdims=True)
            e1 = jnp.exp(score1 - m1)
            w1 = e1 / jnp.sum(e1, axis=1, keepdims=True)
            att_res1 = jnp.sum(att * w1[:, :, None], axis=1)                 # (B, R)
            top_h = att_res1 + next_h

            out_c_ref[i] = next_c
            out_h_ref[i] = top_h

        # ---------------- projection + log-softmax ----------------
        logits = jnp.dot(top_h.astype(bf), proj_w[...],
                         preferred_element_type=jnp.float32) + proj_b[...]
        m = jnp.max(logits, axis=1, keepdims=True)
        shifted = logits - m
        lse = jnp.log(jnp.sum(jnp.exp(shifted), axis=1, keepdims=True))
        logsoft_ref[...] = shifted - lse

    return kernel


def lstm_double_att_forward(params, x, att, prev_c, prev_h,
                            num_layers, num_parallels):
    B, input_size = x.shape
    _, A, R = att.shape
    assert input_size == R, "module requires input_size == rnn_size (x + outputs[-1])"
    L, P = num_layers, num_parallels
    O = params["proj_w"].shape[1]
    bf = jnp.bfloat16

    # ---- pack / pre-cast weights (outside the kernel, halves weight DMA) ----
    a2a_both_w = jnp.concatenate([params["a2a_w"], params["a2a1_w"]], axis=1).astype(bf)  # (R, 2A)
    a2a_both_b = jnp.concatenate([params["a2a_b"], params["a2a1_b"]], axis=1)             # (1, 2A)

    # stacked per-(layer,parallel) cell weights (L*P, R, 4R) -> gate-major packed
    # fused weights (L, 3R, 4*P*R): column index = gate*P*R + parallel*R + r
    w_cat = jnp.concatenate([params["i2h_w"], params["h2h_w"], params["a2h_w"]], axis=1)  # (LP, 3R, 4R)
    w_cat = w_cat.reshape(L, P, 3 * R, 4, R)
    w_cat = jnp.transpose(w_cat, (0, 2, 3, 1, 4))                                         # (L, 3R, 4, P, R)
    lstm_w = w_cat.reshape(L, 3 * R, 4 * P * R).astype(bf)

    b_cat = params["i2h_b"] + params["h2h_b"] + params["a2h_b"]                           # (LP, 1, 4R)
    b_cat = b_cat.reshape(L, P, 4, R)
    b_cat = jnp.transpose(b_cat, (0, 2, 1, 3))                                            # (L, 4, P, R)
    lstm_b = b_cat.reshape(L, 1, 4 * P * R)                                               # f32

    args = [x, att, prev_c, prev_h,
            a2a_both_w, a2a_both_b,
            params["h2a_w"].astype(bf), params["h2a_b"],
            params["h2a1_w"].astype(bf), params["h2a1_b"],
            params["d2d_w"], params["d2d_b"],
            params["d2d1_w"], params["d2d1_b"],
            lstm_w, lstm_b,
            params["proj_w"].astype(bf), params["proj_b"]]

    vmem = pl.BlockSpec(memory_space=pltpu.MemorySpace.VMEM)
    out_shape = (
        jax.ShapeDtypeStruct((L, B, R), jnp.float32),   # next_c per layer
        jax.ShapeDtypeStruct((L, B, R), jnp.float32),   # top_h per layer
        jax.ShapeDtypeStruct((B, O), jnp.float32),      # log_softmax(proj(top_h))
    )
    fn = pl.pallas_call(
        _make_kernel(L, P),
        out_shape=out_shape,
        in_specs=[vmem] * len(args),
        out_specs=(vmem, vmem, vmem),
    )
    return fn(*args)


def init_params(key, input_size, output_size, num_layers, num_parallels,
                rnn_size, att_size):
    LP = num_layers * num_parallels
    keys = iter(jax.random.split(key, 32))

    def xavier(k, fan_in, fan_out, lead=None):
        std = math.sqrt(2.0 / (fan_in + fan_out))
        shape = (fan_in, fan_out) if lead is None else (lead, fan_in, fan_out)
        return jax.random.normal(k, shape, jnp.float32) * std

    def bias(k, fan_in, fan_out, lead=None):
        bound = 1.0 / math.sqrt(fan_in)
        shape = (1, fan_out) if lead is None else (lead, 1, fan_out)
        return jax.random.uniform(k, shape, jnp.float32, -bound, bound)

    p = {}
    # attention block 0
    p["a2a_w"] = xavier(next(keys), rnn_size, att_size)
    p["a2a_b"] = bias(next(keys), rnn_size, att_size)
    p["h2a_w"] = xavier(next(keys), rnn_size, att_size)
    p["h2a_b"] = bias(next(keys), rnn_size, att_size)
    p["d2d_w"] = xavier(next(keys), att_size, 1).T          # stored as (1, att_size)
    p["d2d_b"] = bias(next(keys), att_size, 1)              # (1, 1)
    # attention block 1
    p["a2a1_w"] = xavier(next(keys), rnn_size, att_size)
    p["a2a1_b"] = bias(next(keys), rnn_size, att_size)
    p["h2a1_w"] = xavier(next(keys), rnn_size, att_size)
    p["h2a1_b"] = bias(next(keys), rnn_size, att_size)
    p["d2d1_w"] = xavier(next(keys), att_size, 1).T
    p["d2d1_b"] = bias(next(keys), att_size, 1)
    # stacked LSTM cell weights: [L*P, in, 4*rnn]
    p["i2h_w"] = xavier(next(keys), input_size, 4 * rnn_size, lead=LP)
    p["i2h_b"] = bias(next(keys), input_size, 4 * rnn_size, lead=LP)
    p["h2h_w"] = xavier(next(keys), rnn_size, 4 * rnn_size, lead=LP)
    p["h2h_b"] = bias(next(keys), rnn_size, 4 * rnn_size, lead=LP)
    p["a2h_w"] = xavier(next(keys), rnn_size, 4 * rnn_size, lead=LP)
    p["a2h_b"] = bias(next(keys), rnn_size, 4 * rnn_size, lead=LP)
    # output projection
    p["proj_w"] = xavier(next(keys), rnn_size, output_size)
    p["proj_b"] = bias(next(keys), rnn_size, output_size)
    return p


if __name__ == "__main__":
    # small, module-consistent shapes (input_size must equal rnn_size because
    # the reference does x + outputs[-1] across layers)
    B = 8
    rnn_size = 32
    input_size = rnn_size
    att_size = 32
    output_size = 16
    num_layers = 2
    num_parallels = 2

    key = jax.random.PRNGKey(0)
    k1, k2, k3, k4, kp = jax.random.split(key, 5)
    x = jax.random.normal(k1, (B, input_size), jnp.float32)
    att = jax.random.normal(k2, (B, att_size, rnn_size), jnp.float32)
    prev_c = jax.random.normal(k3, (num_layers, B, rnn_size), jnp.float32) * 0.1
    prev_h = jax.random.normal(k4, (num_layers, B, rnn_size), jnp.float32) * 0.1

    params = init_params(kp, input_size, output_size, num_layers,
                         num_parallels, rnn_size, att_size)

    out_c, out_top_h, logsoft = lstm_double_att_forward(
        params, x, att, prev_c, prev_h, num_layers, num_parallels)
    jax.block_until_ready((out_c, out_top_h, logsoft))

    assert out_c.shape == (num_layers, B, rnn_size)
    assert out_top_h.shape == (num_layers, B, rnn_size)
    assert logsoft.shape == (B, output_size)
    assert bool(jnp.all(jnp.isfinite(out_c)))
    assert bool(jnp.all(jnp.isfinite(out_top_h)))
    assert bool(jnp.all(jnp.isfinite(logsoft)))
    print("KERNEL_OK")
</pallas_src>

<mosaic_0001>
module attributes {stable_mosaic.version = 11 : i64} {
  func.func @kernel(%arg0: memref<8x32xf32, #tpu.memory_space<vmem>>, %arg1: memref<8x32x32xf32, #tpu.memory_space<vmem>>, %arg2: memref<2x8x32xf32, #tpu.memory_space<vmem>>, %arg3: memref<2x8x32xf32, #tpu.memory_space<vmem>>, %arg4: memref<32x64xbf16, #tpu.memory_space<vmem>>, %arg5: memref<1x64xf32, #tpu.memory_space<vmem>>, %arg6: memref<32x32xbf16, #tpu.memory_space<vmem>>, %arg7: memref<1x32xf32, #tpu.memory_space<vmem>>, %arg8: memref<32x32xbf16, #tpu.memory_space<vmem>>, %arg9: memref<1x32xf32, #tpu.memory_space<vmem>>, %arg10: memref<1x32xf32, #tpu.memory_space<vmem>>, %arg11: memref<1x1xf32, #tpu.memory_space<vmem>>, %arg12: memref<1x32xf32, #tpu.memory_space<vmem>>, %arg13: memref<1x1xf32, #tpu.memory_space<vmem>>, %arg14: memref<2x96x256xbf16, #tpu.memory_space<vmem>>, %arg15: memref<2x1x256xf32, #tpu.memory_space<vmem>>, %arg16: memref<32x16xbf16, #tpu.memory_space<vmem>>, %arg17: memref<1x16xf32, #tpu.memory_space<vmem>>, %arg18: memref<2x8x32xf32, #tpu.memory_space<vmem>>, %arg19: memref<2x8x32xf32, #tpu.memory_space<vmem>>, %arg20: memref<8x16xf32, #tpu.memory_space<vmem>>) attributes {dimension_semantics = [], scalar_prefetch = 0 : i64, scratch_operands = 0 : i64, tpu.core_type = #tpu.core_type<tc>} {
    %c0 = arith.constant 0 : index
    %c0_0 = arith.constant 0 : index
    %0 = vector.load %arg0[%c0, %c0_0] : memref<8x32xf32, #tpu.memory_space<vmem>>, vector<8x32xf32>
    %c0_1 = arith.constant 0 : index
    %c0_2 = arith.constant 0 : index
    %c0_3 = arith.constant 0 : index
    %1 = vector.load %arg1[%c0_1, %c0_2, %c0_3] : memref<8x32x32xf32, #tpu.memory_space<vmem>>, vector<8x32x32xf32>
    %2 = vector.shape_cast %1 : vector<8x32x32xf32> to vector<256x32xf32>
    %3 = arith.truncf %2 : vector<256x32xf32> to vector<256x32xbf16>
    %c0_4 = arith.constant 0 : index
    %c0_5 = arith.constant 0 : index
    %4 = vector.load %arg4[%c0_4, %c0_5] : memref<32x64xbf16, #tpu.memory_space<vmem>>, vector<32x64xbf16>
    %cst = arith.constant dense<0.000000e+00> : vector<256x64xf32>
    %5 = tpu.matmul %3, %4, %cst {dimension_numbers = #tpu.dot_dimension_numbers<[1], [0], [0], [1], [0, 0, 1, 1], [], []>} : vector<256x32xbf16>, vector<32x64xbf16>, vector<256x64xf32> -> vector<256x64xf32>
    %c0_6 = arith.constant 0 : index
    %c0_7 = arith.constant 0 : index
    %6 = vector.load %arg5[%c0_6, %c0_7] : memref<1x64xf32, #tpu.memory_space<vmem>>, vector<1x64xf32>
    %7 = vector.broadcast %6 : vector<1x64xf32> to vector<256x64xf32>
    %8 = arith.addf %5, %7 : vector<256x64xf32>
    %9 = vector.extract_strided_slice %8 {offsets = [0, 0], sizes = [256, 32], strides = [1, 1]} : vector<256x64xf32> to vector<256x32xf32>
    %10 = vector.shape_cast %9 : vector<256x32xf32> to vector<8x32x32xf32>
    %11 = vector.extract_strided_slice %8 {offsets = [0, 32], sizes = [256, 32], strides = [1, 1]} : vector<256x64xf32> to vector<256x32xf32>
    %12 = vector.shape_cast %11 : vector<256x32xf32> to vector<8x32x32xf32>
    %c0_8 = arith.constant 0 : index
    %c0_9 = arith.constant 0 : index
    %c0_10 = arith.constant 0 : index
    %13 = vector.load %arg3[%c0_8, %c0_9, %c0_10] : memref<2x8x32xf32, #tpu.memory_space<vmem>>, vector<2x8x32xf32>
    %14 = vector.shape_cast %13 : vector<2x8x32xf32> to vector<16x32xf32>
    %15 = arith.truncf %14 : vector<16x32xf32> to vector<16x32xbf16>
    %c0_11 = arith.constant 0 : index
    %c0_12 = arith.constant 0 : index
    %16 = vector.load %arg6[%c0_11, %c0_12] : memref<32x32xbf16, #tpu.memory_space<vmem>>, vector<32x32xbf16>
    %cst_13 = arith.constant dense<0.000000e+00> : vector<16x32xf32>
    %17 = tpu.matmul %15, %16, %cst_13 {dimension_numbers = #tpu.dot_dimension_numbers<[1], [0], [0], [1], [0, 0, 1, 1], [], []>} : vector<16x32xbf16>, vector<32x32xbf16>, vector<16x32xf32> -> vector<16x32xf32>
    %c0_14 = arith.constant 0 : index
    %c0_15 = arith.constant 0 : index
    %18 = vector.load %arg7[%c0_14, %c0_15] : memref<1x32xf32, #tpu.memory_space<vmem>>, vector<1x32xf32>
    %19 = vector.broadcast %18 : vector<1x32xf32> to vector<16x32xf32>
    %20 = arith.addf %17, %19 : vector<16x32xf32>
    %21 = tpu.concatenate %10, %10 in 0 : vector<8x32x32xf32>, vector<8x32x32xf32> -> vector<16x32x32xf32>
    %22 = tpu.concatenate %1, %1 in 0 : vector<8x32x32xf32>, vector<8x32x32xf32> -> vector<16x32x32xf32>
    %23 = vector.shape_cast %20 : vector<16x32xf32> to vector<16x32x1xf32>
    %24 = vector.broadcast %23 : vector<16x32x1xf32> to vector<16x32x32xf32>
    %25 = arith.addf %21, %24 : vector<16x32x32xf32>
    %26 = math.tanh %25 : vector<16x32x32xf32>
    %c0_16 = arith.constant 0 : index
    %c0_17 = arith.constant 0 : index
    %27 = vector.load %arg10[%c0_16, %c0_17] : memref<1x32xf32, #tpu.memory_space<vmem>>, vector<1x32xf32>
    %28 = vector.shape_cast %27 : vector<1x32xf32> to vector<1x1x32xf32>
    %29 = vector.broadcast %28 : vector<1x1x32xf32> to vector<16x32x32xf32>
    %30 = arith.mulf %26, %29 : vector<16x32x32xf32>
    %cst_18 = arith.constant dense<0.000000e+00> : vector<16x32xf32>
    %31 = vector.multi_reduction <add>, %30, %cst_18 [2] : vector<16x32x32xf32> to vector<16x32xf32>
    %c0_19 = arith.constant 0 : index
    %c0_20 = arith.constant 0 : index
    %32 = vector.load %arg11[%c0_19, %c0_20] : memref<1x1xf32, #tpu.memory_space<vmem>>, vector<1x1xf32>
    %33 = vector.broadcast %32 : vector<1x1xf32> to vector<16x32xf32>
    %34 = arith.addf %31, %33 : vector<16x32xf32>
    %cst_21 = arith.constant dense<0xFF800000> : vector<16xf32>
    %35 = vector.multi_reduction <maximumf>, %34, %cst_21 [1] : vector<16x32xf32> to vector<16xf32>
    %36 = vector.shape_cast %35 : vector<16xf32> to vector<16x1xf32>
    %37 = vector.broadcast %36 : vector<16x1xf32> to vector<16x32xf32>
    %38 = arith.subf %34, %37 : vector<16x32xf32>
    %39 = math.exp %38 : vector<16x32xf32>
    %cst_22 = arith.constant dense<0.000000e+00> : vector<16xf32>
    %40 = vector.multi_reduction <add>, %39, %cst_22 [1] : vector<16x32xf32> to vector<16xf32>
    %41 = vector.shape_cast %40 : vector<16xf32> to vector<16x1xf32>
    %42 = vector.broadcast %41 : vector<16x1xf32> to vector<16x32xf32>
    %43 = arith.divf %39, %42 : vector<16x32xf32>
    %44 = vector.shape_cast %43 : vector<16x32xf32> to vector<16x32x1xf32>
    %45 = vector.broadcast %44 : vector<16x32x1xf32> to vector<16x32x32xf32>
    %46 = arith.mulf %22, %45 : vector<16x32x32xf32>
    %cst_23 = arith.constant dense<0.000000e+00> : vector<16x32xf32>
    %47 = vector.multi_reduction <add>, %46, %cst_23 [1] : vector<16x32x32xf32> to vector<16x32xf32>
    %c0_24 = arith.constant 0 : index
    %c0_25 = arith.constant 0 : index
    %c0_26 = arith.constant 0 : index
    %48 = vector.load %arg2[%c0_24, %c0_25, %c0_26] : memref<2x8x32xf32, #tpu.memory_space<vmem>>, vector<1x8x32xf32>
    %49 = vector.shape_cast %48 : vector<1x8x32xf32> to vector<8x32xf32>
    %c0_27 = arith.constant 0 : index
    %c0_28 = arith.constant 0 : index
    %c0_29 = arith.constant 0 : index
    %50 = vector.load %arg3[%c0_27, %c0_28, %c0_29] : memref<2x8x32xf32, #tpu.memory_space<vmem>>, vector<1x8x32xf32>
    %51 = vector.shape_cast %50 : vector<1x8x32xf32> to vector<8x32xf32>
    %52 = vector.extract_strided_slice %47 {offsets = [0, 0], sizes = [8, 32], strides = [1, 1]} : vector<16x32xf32> to vector<8x32xf32>
    %53 = tpu.concatenate %0, %51, %52 in 1 : vector<8x32xf32>, vector<8x32xf32>, vector<8x32xf32> -> vector<8x96xf32>
    %54 = arith.truncf %53 : vector<8x96xf32> to vector<8x96xbf16>
    %c0_30 = arith.constant 0 : index
    %c0_31 = arith.constant 0 : index
    %c0_32 = arith.constant 0 : index
    %55 = vector.load %arg14[%c0_30, %c0_31, %c0_32] : memref<2x96x256xbf16, #tpu.memory_space<vmem>>, vector<1x96x256xbf16>
    %56 = vector.shape_cast %55 : vector<1x96x256xbf16> to vector<96x256xbf16>
    %cst_33 = arith.constant dense<0.000000e+00> : vector<8x256xf32>
    %57 = tpu.matmul %54, %56, %cst_33 {dimension_numbers = #tpu.dot_dimension_numbers<[1], [0], [0], [1], [0, 0, 1, 1], [], []>} : vector<8x96xbf16>, vector<96x256xbf16>, vector<8x256xf32> -> vector<8x256xf32>
    %c0_34 = arith.constant 0 : index
    %c0_35 = arith.constant 0 : index
    %c0_36 = arith.constant 0 : index
    %58 = vector.load %arg15[%c0_34, %c0_35, %c0_36] : memref<2x1x256xf32, #tpu.memory_space<vmem>>, vector<1x1x256xf32>
    %59 = vector.shape_cast %58 : vector<1x1x256xf32> to vector<1x256xf32>
    %60 = vector.broadcast %59 : vector<1x256xf32> to vector<8x256xf32>
    %61 = arith.addf %57, %60 : vector<8x256xf32>
    %62 = tpu.iota {dimensions = array<i32: 1>} : vector<8x256xi32>
    %c192_i32 = arith.constant 192 : i32
    %63 = vector.broadcast %c192_i32 : i32 to vector<8x256xi32>
    %64 = arith.cmpi slt, %62, %63 : vector<8x256xi32>
    %cst_37 = arith.constant 5.000000e-01 : f32
    %65 = vector.broadcast %cst_37 : f32 to vector<8x256xf32>
    %66 = arith.mulf %65, %61 : vector<8x256xf32>
    %67 = arith.select %64, %66, %61 : vector<8x256xi1>, vector<8x256xf32>
    %68 = math.tanh %67 : vector<8x256xf32>
    %cst_38 = arith.constant 1.000000e+00 : f32
    %69 = vector.broadcast %cst_38 : f32 to vector<8x256xf32>
    %70 = arith.addf %68, %69 : vector<8x256xf32>
    %cst_39 = arith.constant 5.000000e-01 : f32
    %71 = vector.broadcast %cst_39 : f32 to vector<8x256xf32>
    %72 = arith.mulf %71, %70 : vector<8x256xf32>
    %73 = arith.select %64, %72, %68 : vector<8x256xi1>, vector<8x256xf32>
    %74 = vector.extract_strided_slice %73 {offsets = [0, 0], sizes = [8, 64], strides = [1, 1]} : vector<8x256xf32> to vector<8x64xf32>
    %75 = vector.extract_strided_slice %73 {offsets = [0, 64], sizes = [8, 64], strides = [1, 1]} : vector<8x256xf32> to vector<8x64xf32>
    %76 = vector.extract_strided_slice %73 {offsets = [0, 128], sizes = [8, 64], strides = [1, 1]} : vector<8x256xf32> to vector<8x64xf32>
    %77 = vector.extract_strided_slice %73 {offsets = [0, 192], sizes = [8, 64], strides = [1, 1]} : vector<8x256xf32> to vector<8x64xf32>
    %78 = tpu.concatenate %49, %49 in 1 : vector<8x32xf32>, vector<8x32xf32> -> vector<8x64xf32>
    %79 = arith.mulf %75, %78 : vector<8x64xf32>
    %80 = arith.mulf %74, %77 : vector<8x64xf32>
    %81 = arith.addf %79, %80 : vector<8x64xf32>
    %82 = math.tanh %81 : vector<8x64xf32>
    %83 = arith.mulf %76, %82 : vector<8x64xf32>
    %84 = vector.extract_strided_slice %81 {offsets = [0, 0], sizes = [8, 32], strides = [1, 1]} : vector<8x64xf32> to vector<8x32xf32>
    %cst_40 = arith.constant 0.000000e+00 : f32
    %85 = vector.broadcast %cst_40 : f32 to vector<8x32xf32>
    %86 = arith.addf %85, %84 : vector<8x32xf32>
    %87 = vector.extract_strided_slice %81 {offsets = [0, 32], sizes = [8, 32], strides = [1, 1]} : vector<8x64xf32> to vector<8x32xf32>
    %88 = arith.addf %86, %87 : vector<8x32xf32>
    %cst_41 = arith.constant 5.000000e-01 : f32
    %89 = vector.broadcast %cst_41 : f32 to vector<8x32xf32>
    %90 = arith.mulf %88, %89 : vector<8x32xf32>
    %91 = vector.extract_strided_slice %83 {offsets = [0, 0], sizes = [8, 32], strides = [1, 1]} : vector<8x64xf32> to vector<8x32xf32>
    %cst_42 = arith.constant 0.000000e+00 : f32
    %92 = vector.broadcast %cst_42 : f32 to vector<8x32xf32>
    %93 = arith.addf %92, %91 : vector<8x32xf32>
    %94 = vector.extract_strided_slice %83 {offsets = [0, 32], sizes = [8, 32], strides = [1, 1]} : vector<8x64xf32> to vector<8x32xf32>
    %95 = arith.addf %93, %94 : vector<8x32xf32>
    %cst_43 = arith.constant 5.000000e-01 : f32
    %96 = vector.broadcast %cst_43 : f32 to vector<8x32xf32>
    %97 = arith.mulf %95, %96 : vector<8x32xf32>
    %98 = arith.truncf %97 : vector<8x32xf32> to vector<8x32xbf16>
    %c0_44 = arith.constant 0 : index
    %c0_45 = arith.constant 0 : index
    %99 = vector.load %arg8[%c0_44, %c0_45] : memref<32x32xbf16, #tpu.memory_space<vmem>>, vector<32x32xbf16>
    %cst_46 = arith.constant dense<0.000000e+00> : vector<8x32xf32>
    %100 = tpu.matmul %98, %99, %cst_46 {dimension_numbers = #tpu.dot_dimension_numbers<[1], [0], [0], [1], [0, 0, 1, 1], [], []>} : vector<8x32xbf16>, vector<32x32xbf16>, vector<8x32xf32> -> vector<8x32xf32>
    %c0_47 = arith.constant 0 : index
    %c0_48 = arith.constant 0 : index
    %101 = vector.load %arg9[%c0_47, %c0_48] : memref<1x32xf32, #tpu.memory_space<vmem>>, vector<1x32xf32>
    %102 = vector.broadcast %101 : vector<1x32xf32> to vector<8x32xf32>
    %103 = arith.addf %100, %102 : vector<8x32xf32>
    %104 = vector.shape_cast %103 : vector<8x32xf32> to vector<8x32x1xf32>
    %105 = vector.broadcast %104 : vector<8x32x1xf32> to vector<8x32x32xf32>
    %106 = arith.addf %12, %105 : vector<8x32x32xf32>
    %107 = math.tanh %106 : vector<8x32x32xf32>
    %c0_49 = arith.constant 0 : index
    %c0_50 = arith.constant 0 : index
    %108 = vector.load %arg12[%c0_49, %c0_50] : memref<1x32xf32, #tpu.memory_space<vmem>>, vector<1x32xf32>
    %109 = vector.shape_cast %108 : vector<1x32xf32> to vector<1x1x32xf32>
    %110 = vector.broadcast %109 : vector<1x1x32xf32> to vector<8x32x32xf32>
    %111 = arith.mulf %107, %110 : vector<8x32x32xf32>
    %cst_51 = arith.constant dense<0.000000e+00> : vector<8x32xf32>
    %112 = vector.multi_reduction <add>, %111, %cst_51 [2] : vector<8x32x32xf32> to vector<8x32xf32>
    %c0_52 = arith.constant 0 : index
    %c0_53 = arith.constant 0 : index
    %113 = vector.load %arg13[%c0_52, %c0_53] : memref<1x1xf32, #tpu.memory_space<vmem>>, vector<1x1xf32>
    %114 = vector.broadcast %113 : vector<1x1xf32> to vector<8x32xf32>
    %115 = arith.addf %112, %114 : vector<8x32xf32>
    %cst_54 = arith.constant dense<0xFF800000> : vector<8xf32>
    %116 = vector.multi_reduction <maximumf>, %115, %cst_54 [1] : vector<8x32xf32> to vector<8xf32>
    %117 = vector.shape_cast %116 : vector<8xf32> to vector<8x1xf32>
    %118 = vector.broadcast %117 : vector<8x1xf32> to vector<8x32xf32>
    %119 = arith.subf %115, %118 : vector<8x32xf32>
    %120 = math.exp %119 : vector<8x32xf32>
    %cst_55 = arith.constant dense<0.000000e+00> : vector<8xf32>
    %121 = vector.multi_reduction <add>, %120, %cst_55 [1] : vector<8x32xf32> to vector<8xf32>
    %122 = vector.shape_cast %121 : vector<8xf32> to vector<8x1xf32>
    %123 = vector.broadcast %122 : vector<8x1xf32> to vector<8x32xf32>
    %124 = arith.divf %120, %123 : vector<8x32xf32>
    %125 = vector.shape_cast %124 : vector<8x32xf32> to vector<8x32x1xf32>
    %126 = vector.broadcast %125 : vector<8x32x1xf32> to vector<8x32x32xf32>
    %127 = arith.mulf %1, %126 : vector<8x32x32xf32>
    %cst_56 = arith.constant dense<0.000000e+00> : vector<8x32xf32>
    %128 = vector.multi_reduction <add>, %127, %cst_56 [1] : vector<8x32x32xf32> to vector<8x32xf32>
    %129 = arith.addf %128, %97 : vector<8x32xf32>
    %c0_57 = arith.constant 0 : index
    %c0_58 = arith.constant 0 : index
    %c0_59 = arith.constant 0 : index
    %130 = vector.load %arg18[%c0_57, %c0_58, %c0_59] : memref<2x8x32xf32, #tpu.memory_space<vmem>>, vector<1x8x32xf32>
    %131 = vector.shape_cast %130 : vector<1x8x32xf32> to vector<8x32xf32>
    %132 = vector.shape_cast %90 : vector<8x32xf32> to vector<1x8x32xf32>
    tpu.vector_store %arg18[%c0_57, %c0_58, %c0_59], %132 {strides = array<i32>} : memref<2x8x32xf32, #tpu.memory_space<vmem>>, vector<1x8x32xf32>,
    %c0_60 = arith.constant 0 : index
    %c0_61 = arith.constant 0 : index
    %c0_62 = arith.constant 0 : index
    %133 = vector.load %arg19[%c0_60, %c0_61, %c0_62] : memref<2x8x32xf32, #tpu.memory_space<vmem>>, vector<1x8x32xf32>
    %134 = vector.shape_cast %133 : vector<1x8x32xf32> to vector<8x32xf32>
    %135 = vector.shape_cast %129 : vector<8x32xf32> to vector<1x8x32xf32>
    tpu.vector_store %arg19[%c0_60, %c0_61, %c0_62], %135 {strides = array<i32>} : memref<2x8x32xf32, #tpu.memory_space<vmem>>, vector<1x8x32xf32>,
    %c1 = arith.constant 1 : index
    %c0_63 = arith.constant 0 : index
    %c0_64 = arith.constant 0 : index
    %136 = vector.load %arg2[%c1, %c0_63, %c0_64] : memref<2x8x32xf32, #tpu.memory_space<vmem>>, vector<1x8x32xf32>
    %137 = vector.shape_cast %136 : vector<1x8x32xf32> to vector<8x32xf32>
    %c1_65 = arith.constant 1 : index
    %c0_66 = arith.constant 0 : index
    %c0_67 = arith.constant 0 : index
    %138 = vector.load %arg3[%c1_65, %c0_66, %c0_67] : memref<2x8x32xf32, #tpu.memory_space<vmem>>, vector<1x8x32xf32>
    %139 = vector.shape_cast %138 : vector<1x8x32xf32> to vector<8x32xf32>
    %140 = arith.addf %0, %129 : vector<8x32xf32>
    %141 = vector.extract_strided_slice %47 {offsets = [8, 0], sizes = [8, 32], strides = [1, 1]} : vector<16x32xf32> to vector<8x32xf32>
    %142 = tpu.concatenate %140, %139, %141 in 1 : vector<8x32xf32>, vector<8x32xf32>, vector<8x32xf32> -> vector<8x96xf32>
    %143 = arith.truncf %142 : vector<8x96xf32> to vector<8x96xbf16>
    %c1_68 = arith.constant 1 : index
    %c0_69 = arith.constant 0 : index
    %c0_70 = arith.constant 0 : index
    %144 = vector.load %arg14[%c1_68, %c0_69, %c0_70] : memref<2x96x256xbf16, #tpu.memory_space<vmem>>, vector<1x96x256xbf16>
    %145 = vector.shape_cast %144 : vector<1x96x256xbf16> to vector<96x256xbf16>
    %cst_71 = arith.constant dense<0.000000e+00> : vector<8x256xf32>
    %146 = tpu.matmul %143, %145, %cst_71 {dimension_numbers = #tpu.dot_dimension_numbers<[1], [0], [0], [1], [0, 0, 1, 1], [], []>} : vector<8x96xbf16>, vector<96x256xbf16>, vector<8x256xf32> -> vector<8x256xf32>
    %c1_72 = arith.constant 1 : index
    %c0_73 = arith.constant 0 : index
    %c0_74 = arith.constant 0 : index
    %147 = vector.load %arg15[%c1_72, %c0_73, %c0_74] : memref<2x1x256xf32, #tpu.memory_space<vmem>>, vector<1x1x256xf32>
    %148 = vector.shape_cast %147 : vector<1x1x256xf32> to vector<1x256xf32>
    %149 = vector.broadcast %148 : vector<1x256xf32> to vector<8x256xf32>
    %150 = arith.addf %146, %149 : vector<8x256xf32>
    %151 = tpu.iota {dimensions = array<i32: 1>} : vector<8x256xi32>
    %c192_i32_75 = arith.constant 192 : i32
    %152 = vector.broadcast %c192_i32_75 : i32 to vector<8x256xi32>
    %153 = arith.cmpi slt, %151, %152 : vector<8x256xi32>
    %cst_76 = arith.constant 5.000000e-01 : f32
    %154 = vector.broadcast %cst_76 : f32 to vector<8x256xf32>
    %155 = arith.mulf %154, %150 : vector<8x256xf32>
    %156 = arith.select %153, %155, %150 : vector<8x256xi1>, vector<8x256xf32>
    %157 = math.tanh %156 : vector<8x256xf32>
    %cst_77 = arith.constant 1.000000e+00 : f32
    %158 = vector.broadcast %cst_77 : f32 to vector<8x256xf32>
    %159 = arith.addf %157, %158 : vector<8x256xf32>
    %cst_78 = arith.constant 5.000000e-01 : f32
    %160 = vector.broadcast %cst_78 : f32 to vector<8x256xf32>
    %161 = arith.mulf %160, %159 : vector<8x256xf32>
    %162 = arith.select %153, %161, %157 : vector<8x256xi1>, vector<8x256xf32>
    %163 = vector.extract_strided_slice %162 {offsets = [0, 0], sizes = [8, 64], strides = [1, 1]} : vector<8x256xf32> to vector<8x64xf32>
    %164 = vector.extract_strided_slice %162 {offsets = [0, 64], sizes = [8, 64], strides = [1, 1]} : vector<8x256xf32> to vector<8x64xf32>
    %165 = vector.extract_strided_slice %162 {offsets = [0, 128], sizes = [8, 64], strides = [1, 1]} : vector<8x256xf32> to vector<8x64xf32>
    %166 = vector.extract_strided_slice %162 {offsets = [0, 192], sizes = [8, 64], strides = [1, 1]} : vector<8x256xf32> to vector<8x64xf32>
    %167 = tpu.concatenate %137, %137 in 1 : vector<8x32xf32>, vector<8x32xf32> -> vector<8x64xf32>
    %168 = arith.mulf %164, %167 : vector<8x64xf32>
    %169 = arith.mulf %163, %166 : vector<8x64xf32>
    %170 = arith.addf %168, %169 : vector<8x64xf32>
    %171 = math.tanh %170 : vector<8x64xf32>
    %172 = arith.mulf %165, %171 : vector<8x64xf32>
    %173 = vector.extract_strided_slice %170 {offsets = [0, 0], sizes = [8, 32], strides = [1, 1]} : vector<8x64xf32> to vector<8x32xf32>
    %cst_79 = arith.constant 0.000000e+00 : f32
    %174 = vector.broadcast %cst_79 : f32 to vector<8x32xf32>
    %175 = arith.addf %174, %173 : vector<8x32xf32>
    %176 = vector.extract_strided_slice %170 {offsets = [0, 32], sizes = [8, 32], strides = [1, 1]} : vector<8x64xf32> to vector<8x32xf32>
    %177 = arith.addf %175, %176 : vector<8x32xf32>
    %cst_80 = arith.constant 5.000000e-01 : f32
    %178 = vector.broadcast %cst_80 : f32 to vector<8x32xf32>
    %179 = arith.mulf %177, %178 : vector<8x32xf32>
    %180 = vector.extract_strided_slice %172 {offsets = [0, 0], sizes = [8, 32], strides = [1, 1]} : vector<8x64xf32> to vector<8x32xf32>
    %cst_81 = arith.constant 0.000000e+00 : f32
    %181 = vector.broadcast %cst_81 : f32 to vector<8x32xf32>
    %182 = arith.addf %181, %180 : vector<8x32xf32>
    %183 = vector.extract_strided_slice %172 {offsets = [0, 32], sizes = [8, 32], strides = [1, 1]} : vector<8x64xf32> to vector<8x32xf32>
    %184 = arith.addf %182, %183 : vector<8x32xf32>
    %cst_82 = arith.constant 5.000000e-01 : f32
    %185 = vector.broadcast %cst_82 : f32 to vector<8x32xf32>
    %186 = arith.mulf %184, %185 : vector<8x32xf32>
    %187 = arith.truncf %186 : vector<8x32xf32> to vector<8x32xbf16>
    %c0_83 = arith.constant 0 : index
    %c0_84 = arith.constant 0 : index
    %188 = vector.load %arg8[%c0_83, %c0_84] : memref<32x32xbf16, #tpu.memory_space<vmem>>, vector<32x32xbf16>
    %cst_85 = arith.constant dense<0.000000e+00> : vector<8x32xf32>
    %189 = tpu.matmul %187, %188, %cst_85 {dimension_numbers = #tpu.dot_dimension_numbers<[1], [0], [0], [1], [0, 0, 1, 1], [], []>} : vector<8x32xbf16>, vector<32x32xbf16>, vector<8x32xf32> -> vector<8x32xf32>
    %c0_86 = arith.constant 0 : index
    %c0_87 = arith.constant 0 : index
    %190 = vector.load %arg9[%c0_86, %c0_87] : memref<1x32xf32, #tpu.memory_space<vmem>>, vector<1x32xf32>
    %191 = vector.broadcast %190 : vector<1x32xf32> to vector<8x32xf32>
    %192 = arith.addf %189, %191 : vector<8x32xf32>
    %193 = vector.shape_cast %192 : vector<8x32xf32> to vector<8x32x1xf32>
    %194 = vector.broadcast %193 : vector<8x32x1xf32> to vector<8x32x32xf32>
    %195 = arith.addf %12, %194 : vector<8x32x32xf32>
    %196 = math.tanh %195 : vector<8x32x32xf32>
    %c0_88 = arith.constant 0 : index
    %c0_89 = arith.constant 0 : index
    %197 = vector.load %arg12[%c0_88, %c0_89] : memref<1x32xf32, #tpu.memory_space<vmem>>, vector<1x32xf32>
    %198 = vector.shape_cast %197 : vector<1x32xf32> to vector<1x1x32xf32>
    %199 = vector.broadcast %198 : vector<1x1x32xf32> to vector<8x32x32xf32>
    %200 = arith.mulf %196, %199 : vector<8x32x32xf32>
    %cst_90 = arith.constant dense<0.000000e+00> : vector<8x32xf32>
    %201 = vector.multi_reduction <add>, %200, %cst_90 [2] : vector<8x32x32xf32> to vector<8x32xf32>
    %c0_91 = arith.constant 0 : index
    %c0_92 = arith.constant 0 : index
    %202 = vector.load %arg13[%c0_91, %c0_92] : memref<1x1xf32, #tpu.memory_space<vmem>>, vector<1x1xf32>
    %203 = vector.broadcast %202 : vector<1x1xf32> to vector<8x32xf32>
    %204 = arith.addf %201, %203 : vector<8x32xf32>
    %cst_93 = arith.constant dense<0xFF800000> : vector<8xf32>
    %205 = vector.multi_reduction <maximumf>, %204, %cst_93 [1] : vector<8x32xf32> to vector<8xf32>
    %206 = vector.shape_cast %205 : vector<8xf32> to vector<8x1xf32>
    %207 = vector.broadcast %206 : vector<8x1xf32> to vector<8x32xf32>
    %208 = arith.subf %204, %207 : vector<8x32xf32>
    %209 = math.exp %208 : vector<8x32xf32>
    %cst_94 = arith.constant dense<0.000000e+00> : vector<8xf32>
    %210 = vector.multi_reduction <add>, %209, %cst_94 [1] : vector<8x32xf32> to vector<8xf32>
    %211 = vector.shape_cast %210 : vector<8xf32> to vector<8x1xf32>
    %212 = vector.broadcast %211 : vector<8x1xf32> to vector<8x32xf32>
    %213 = arith.divf %209, %212 : vector<8x32xf32>
    %214 = vector.shape_cast %213 : vector<8x32xf32> to vector<8x32x1xf32>
    %215 = vector.broadcast %214 : vector<8x32x1xf32> to vector<8x32x32xf32>
    %216 = arith.mulf %1, %215 : vector<8x32x32xf32>
    %cst_95 = arith.constant dense<0.000000e+00> : vector<8x32xf32>
    %217 = vector.multi_reduction <add>, %216, %cst_95 [1] : vector<8x32x32xf32> to vector<8x32xf32>
    %218 = arith.addf %217, %186 : vector<8x32xf32>
    %c1_96 = arith.constant 1 : index
    %c0_97 = arith.constant 0 : index
    %c0_98 = arith.constant 0 : index
    %219 = vector.load %arg18[%c1_96, %c0_97, %c0_98] : memref<2x8x32xf32, #tpu.memory_space<vmem>>, vector<1x8x32xf32>
    %220 = vector.shape_cast %219 : vector<1x8x32xf32> to vector<8x32xf32>
    %221 = vector.shape_cast %179 : vector<8x32xf32> to vector<1x8x32xf32>
    tpu.vector_store %arg18[%c1_96, %c0_97, %c0_98], %221 {strides = array<i32>} : memref<2x8x32xf32, #tpu.memory_space<vmem>>, vector<1x8x32xf32>,
    %c1_99 = arith.constant 1 : index
    %c0_100 = arith.constant 0 : index
    %c0_101 = arith.constant 0 : index
    %222 = vector.load %arg19[%c1_99, %c0_100, %c0_101] : memref<2x8x32xf32, #tpu.memory_space<vmem>>, vector<1x8x32xf32>
    %223 = vector.shape_cast %222 : vector<1x8x32xf32> to vector<8x32xf32>
    %224 = vector.shape_cast %218 : vector<8x32xf32> to vector<1x8x32xf32>
    tpu.vector_store %arg19[%c1_99, %c0_100, %c0_101], %224 {strides = array<i32>} : memref<2x8x32xf32, #tpu.memory_space<vmem>>, vector<1x8x32xf32>,
    %225 = arith.truncf %218 : vector<8x32xf32> to vector<8x32xbf16>
    %c0_102 = arith.constant 0 : index
    %c0_103 = arith.constant 0 : index
    %226 = vector.load %arg16[%c0_102, %c0_103] : memref<32x16xbf16, #tpu.memory_space<vmem>>, vector<32x16xbf16>
    %cst_104 = arith.constant dense<0.000000e+00> : vector<8x16xf32>
    %227 = tpu.matmul %225, %226, %cst_104 {dimension_numbers = #tpu.dot_dimension_numbers<[1], [0], [0], [1], [0, 0, 1, 1], [], []>} : vector<8x32xbf16>, vector<32x16xbf16>, vector<8x16xf32> -> vector<8x16xf32>
    %c0_105 = arith.constant 0 : index
    %c0_106 = arith.constant 0 : index
    %228 = vector.load %arg17[%c0_105, %c0_106] : memref<1x16xf32, #tpu.memory_space<vmem>>, vector<1x16xf32>
    %229 = vector.broadcast %228 : vector<1x16xf32> to vector<8x16xf32>
    %230 = arith.addf %227, %229 : vector<8x16xf32>
    %cst_107 = arith.constant dense<0xFF800000> : vector<8xf32>
    %231 = vector.multi_reduction <maximumf>, %230, %cst_107 [1] : vector<8x16xf32> to vector<8xf32>
    %232 = vector.shape_cast %231 : vector<8xf32> to vector<8x1xf32>
    %233 = vector.broadcast %232 : vector<8x1xf32> to vector<8x16xf32>
    %234 = arith.subf %230, %233 : vector<8x16xf32>
    %235 = math.exp %234 : vector<8x16xf32>
    %cst_108 = arith.constant dense<0.000000e+00> : vector<8xf32>
    %236 = vector.multi_reduction <add>, %235, %cst_108 [1] : vector<8x16xf32> to vector<8xf32>
    %237 = vector.shape_cast %236 : vector<8xf32> to vector<8x1xf32>
    %238 = math.log %237 : vector<8x1xf32>
    %239 = vector.broadcast %238 : vector<8x1xf32> to vector<8x16xf32>
    %240 = arith.subf %234, %239 : vector<8x16xf32>
    %c0_109 = arith.constant 0 : index
    %c0_110 = arith.constant 0 : index
    %241 = vector.load %arg20[%c0_109, %c0_110] : memref<8x16xf32, #tpu.memory_space<vmem>>, vector<8x16xf32>
    tpu.vector_store %arg20[%c0_109, %c0_110], %240 {strides = array<i32>} : memref<8x16xf32, #tpu.memory_space<vmem>>, vector<8x16xf32>,
    return
  }
}

</mosaic_0001>

<llo_original>
// kernel: tpu_custom_call.1
$region0: #{tpu_custom_call.1}
  #allocation0 [shape = 'u32[]', space=smem, size = 0x4, offset = 0x4, fixed_abs, tag = 'smem constant byte address 0x4 - core index']
  #allocation1 [shape = 'u32[144,128]{1,0:T(1,128)}', space=vmem, size = 0x12000, scoped, tag = 'internal scratch']
  #allocation2 [shape = 'f32[1,1]{1,0:T(1,128)S(1)}', space=vmem, size = 0x200, scoped, tag = 'scoped memory for tpu_custom_call.1']
  #allocation3 [shape = 'f32[1,1]{1,0:T(1,128)S(1)}', space=vmem, size = 0x200, scoped, tag = 'scoped memory for tpu_custom_call.1']
  %s0 = inlined_call_operand.hbm [shape: f32[8,32], index: 0, kind: input, shape index: {}]
  %s1 = inlined_call_operand.hbm [shape: f32[8,32,32], index: 1, kind: input, shape index: {}]
  %s2 = inlined_call_operand.vmem [shape: f32[2,8,32], index: 2, kind: input, shape index: {}]
  %s3 = inlined_call_operand.vmem [shape: f32[2,8,32], index: 3, kind: input, shape index: {}]
  %s4 = inlined_call_operand.hbm [shape: bf16[32,64], index: 4, kind: input, shape index: {}]
  %s5 = inlined_call_operand.hbm [shape: f32[1,64], index: 5, kind: input, shape index: {}]
  %s6 = inlined_call_operand.hbm [shape: bf16[32,32], index: 6, kind: input, shape index: {}]
  %s7 = inlined_call_operand.hbm [shape: f32[1,32], index: 7, kind: input, shape index: {}]
  %s8 = inlined_call_operand.hbm [shape: bf16[32,32], index: 8, kind: input, shape index: {}]
  %s9 = inlined_call_operand.hbm [shape: f32[1,32], index: 9, kind: input, shape index: {}]
  %s10 = inlined_call_operand.vmem [shape: f32[1,32], index: 10, kind: input, shape index: {}]
  %s11 = inlined_call_operand.<no memory space> [shape: f32[1,1], index: 11, kind: input, shape index: {}]
  %s12 = inlined_call_operand.vmem [shape: f32[1,32], index: 12, kind: input, shape index: {}]
  %s13 = inlined_call_operand.<no memory space> [shape: f32[1,1], index: 13, kind: input, shape index: {}]
  %s14 = inlined_call_operand.hbm [shape: bf16[2,96,256], index: 14, kind: input, shape index: {}]
  %s15 = inlined_call_operand.vmem [shape: f32[2,1,256], index: 15, kind: input, shape index: {}]
  %s16 = inlined_call_operand.vmem [shape: bf16[32,16], index: 16, kind: input, shape index: {}]
  %s17 = inlined_call_operand.vmem [shape: f32[1,16], index: 17, kind: input, shape index: {}]
  %s18 = inlined_call_operand.hbm [shape: f32[2,8,32], index: 18, kind: output, shape index: {0}]
  %s19 = inlined_call_operand.hbm [shape: f32[2,8,32], index: 19, kind: output, shape index: {1}]
  %s20 = inlined_call_operand.hbm [shape: f32[8,16], index: 20, kind: output, shape index: {2}]
  %21 = xla_tuple %s18, %s19, %s20
  %s22 = sld [smem:[#allocation0]]
  $region134: #{tpu_custom_call.1} parent=0
    _
  %s24 = ssub.s32 1, %s22
  %s25 = scalar_select 0, %s24, %s22
  %v26 = vstv %s11
  %27 = vst [vmem:[#allocation2] sm:$0x1] %v26
  %v28 = vstv %s13
  %29 = vst [vmem:[#allocation3] sm:$0x1] %v28
  $region1: #{tpu_custom_call.1} parent=0
    #allocation4 [shape = 'u8[4096]{0}', space=vmem, size = 0x1000, scoped, tag = 'input window, operand 0, single buffered']
    #allocation5 [shape = 's32[1]{0}', space=sflag, size = 0x4, scoped, tag = 'scoped memory for tpu_custom_call.1']
    #allocation6 [shape = 's32[1]{0}', space=sflag, size = 0x4, scoped, tag = 'scoped memory for tpu_custom_call.1']
    #allocation7 [shape = 'u8[131072]{0}', space=vmem, size = 0x20000, scoped, tag = 'input window, operand 1, single buffered']
    #allocation8 [shape = 's32[1]{0}', space=sflag, size = 0x4, scoped, tag = 'scoped memory for tpu_custom_call.1']
    #allocation9 [shape = 'u8[8192]{0}', space=vmem, size = 0x2000, scoped, tag = 'input window, operand 4, single buffered']
    #allocation10 [shape = 'u8[512]{0}', space=vmem, size = 0x400, scoped, tag = 'input window, operand 5, single buffered']
    #allocation11 [shape = 's32[1]{0}', space=sflag, size = 0x4, scoped, tag = 'scoped memory for tpu_custom_call.1']
    #allocation12 [shape = 'u8[8192]{0}', space=vmem, size = 0x2000, scoped, tag = 'input window, operand 6, single buffered']
    #allocation13 [shape = 'u8[512]{0}', space=vmem, size = 0x400, scoped, tag = 'input window, operand 7, single buffered']
    #allocation14 [shape = 's32[1]{0}', space=sflag, size = 0x4, scoped, tag = 'scoped memory for tpu_custom_call.1']
    #allocation15 [shape = 'u8[8192]{0}', space=vmem, size = 0x2000, scoped, tag = 'input window, operand 8, single buffered']
    #allocation16 [shape = 'u8[512]{0}', space=vmem, size = 0x400, scoped, tag = 'input window, operand 9, single buffered']
    #allocation17 [shape = 's32[1]{0}', space=sflag, size = 0x4, scoped, tag = 'scoped memory for tpu_custom_call.1']
    #allocation18 [shape = 'u8[98304]{0}', space=vmem, size = 0x18000, scoped, tag = 'input window, operand 14, single buffered']
    #allocation19 [shape = 'u8[8192]{0}', space=vmem, size = 0x2000, scoped, tag = 'output window, operand 0, single buffered']
    #allocation20 [shape = 'u8[8192]{0}', space=vmem, size = 0x2000, scoped, tag = 'output window, operand 1, single buffered']
    #allocation21 [shape = 's32[1]{0}', space=sflag, size = 0x4, scoped, tag = 'scoped memory for tpu_custom_call.1']
    #allocation22 [shape = 'u8[4096]{0}', space=vmem, size = 0x1000, scoped, tag = 'output window, operand 2, single buffered']
    %30 = vsyncpa [#allocation5], 0
    %31 = vsyncpa [#allocation8], 0
    %32 = vsyncpa [#allocation11], 0
    %33 = vsyncpa [#allocation14], 0
    %34 = vsyncpa [#allocation17], 0
    %35 = vsyncpa [#allocation6], 0
    %36 = vsyncpa [#allocation21], 0
    // Predicated region
    $region2: #{tpu_custom_call.1} parent=1 // pred_check
      _
    $region3: #{tpu_custom_call.1} parent=1 // pred_check_branch
      %38 = sbr.rel (0) target = $region5
    $region4: #{tpu_custom_call.1} parent=1 // pred_region
      %s40 = ssub.s32 128, 128
      %41 = vsyncadd [#allocation5], %s40
      %s43 = sshll.u32 [#allocation4], 4
      %s44 = int_to_ptr.vmem [resolvable:$true] %s43
      %46 = dma.hbm_to_vmem [thread:$0]  %s0, 128, %s44, [#allocation5]
    $region5: #{tpu_custom_call.1} parent=1 // pred_fallthru
      _
    // Predicated region
    $region6: #{tpu_custom_call.1} parent=1 // pred_check
      _
    $region7: #{tpu_custom_call.1} parent=1 // pred_check_branch
      %48 = sbr.rel (0) target = $region9
    $region8: #{tpu_custom_call.1} parent=1 // pred_region
      %s50 = ssub.s32 4096, 4096
      %51 = vsyncadd [#allocation8], %s50
      %s52 = sshll.u32 [#allocation7], 4
      %s53 = int_to_ptr.vmem [resolvable:$true] %s52
      %58 = dma.hbm_to_vmem [thread:$0]  %s1, 4096, %s53, [#allocation8], 128, 128, 8
    $region9: #{tpu_custom_call.1} parent=1 // pred_fallthru
      _
    // Predicated region
    $region10: #{tpu_custom_call.1} parent=1 // pred_check
      _
    $region11: #{tpu_custom_call.1} parent=1 // pred_check_branch
      %60 = sbr.rel (0) target = $region13
    $region12: #{tpu_custom_call.1} parent=1 // pred_region
      _
    $region13: #{tpu_custom_call.1} parent=1 // pred_fallthru
      _
    // Predicated region
    $region14: #{tpu_custom_call.1} parent=1 // pred_check
      _
    $region15: #{tpu_custom_call.1} parent=1 // pred_check_branch
      %62 = sbr.rel (0) target = $region17
    $region16: #{tpu_custom_call.1} parent=1 // pred_region
      _
    $region17: #{tpu_custom_call.1} parent=1 // pred_fallthru
      _
    // Predicated region
    $region18: #{tpu_custom_call.1} parent=1 // pred_check
      _
    $region19: #{tpu_custom_call.1} parent=1 // pred_check_branch
      %64 = sbr.rel (0) target = $region21
    $region20: #{tpu_custom_call.1} parent=1 // pred_region
      %s66 = ssub.s32 256, 256
      %67 = vsyncadd [#allocation8], %s66
      %s68 = sshll.u32 [#allocation9], 4
      %s69 = int_to_ptr.vmem [resolvable:$true] %s68
      %74 = dma.hbm_to_vmem [thread:$0]  %s4, 256, %s69, [#allocation8], 64, 64, 4
    $region21: #{tpu_custom_call.1} parent=1 // pred_fallthru
      _
    // Predicated region
    $region22: #{tpu_custom_call.1} parent=1 // pred_check
      _
    $region23: #{tpu_custom_call.1} parent=1 // pred_check_branch
      %76 = sbr.rel (0) target = $region25
    $region24: #{tpu_custom_call.1} parent=1 // pred_region
      %s78 = ssub.s32 16, 16
      %79 = vsyncadd [#allocation11], %s78
      %s81 = sshll.u32 [#allocation10], 4
      %s82 = int_to_ptr.vmem [resolvable:$true] %s81
      %84 = dma.hbm_to_vmem [thread:$0]  %s5, 16, %s82, [#allocation11]
    $region25: #{tpu_custom_call.1} parent=1 // pred_fallthru
      _
    // Predicated region
    $region26: #{tpu_custom_call.1} parent=1 // pred_check
      _
    $region27: #{tpu_custom_call.1} parent=1 // pred_check_branch
      %86 = sbr.rel (0) target = $region29
    $region28: #{tpu_custom_call.1} parent=1 // pred_region
      %s88 = ssub.s32 256, 256
      %89 = vsyncadd [#allocation11], %s88
      %s90 = sshll.u32 [#allocation12], 4
      %s91 = int_to_ptr.vmem [resolvable:$true] %s90
      %96 = dma.hbm_to_vmem [thread:$0]  %s6, 256, %s91, [#allocation11], 64, 64, 4
    $region29: #{tpu_custom_call.1} parent=1 // pred_fallthru
      _
    // Predicated region
    $region30: #{tpu_custom_call.1} parent=1 // pred_check
      _
    $region31: #{tpu_custom_call.1} parent=1 // pred_check_branch
      %98 = sbr.rel (0) target = $region33
    $region32: #{tpu_custom_call.1} parent=1 // pred_region
      %s100 = ssub.s32 16, 16
      %101 = vsyncadd [#allocation14], %s100
      %s103 = sshll.u32 [#allocation13], 4
      %s104 = int_to_ptr.vmem [resolvable:$true] %s103
      %106 = dma.hbm_to_vmem [thread:$0]  %s7, 16, %s104, [#allocation14]
    $region33: #{tpu_custom_call.1} parent=1 // pred_fallthru
      _
    // Predicated region
    $region34: #{tpu_custom_call.1} parent=1 // pred_check
      _
    $region35: #{tpu_custom_call.1} parent=1 // pred_check_branch
      %108 = sbr.rel (0) target = $region37
    $region36: #{tpu_custom_call.1} parent=1 // pred_region
      %s110 = ssub.s32 256, 256
      %111 = vsyncadd [#allocation14], %s110
      %s112 = sshll.u32 [#allocation15], 4
      %s113 = int_to_ptr.vmem [resolvable:$true] %s112
      %118 = dma.hbm_to_vmem [thread:$0]  %s8, 256, %s113, [#allocation14], 64, 64, 4
    $region37: #{tpu_custom_call.1} parent=1 // pred_fallthru
      _
    // Predicated region
    $region38: #{tpu_custom_call.1} parent=1 // pred_check
      _
    $region39: #{tpu_custom_call.1} parent=1 // pred_check_branch
      %120 = sbr.rel (0) target = $region41
    $region40: #{tpu_custom_call.1} parent=1 // pred_region
      %s122 = ssub.s32 16, 16
      %123 = vsyncadd [#allocation17], %s122
      %s125 = sshll.u32 [#allocation16], 4
      %s126 = int_to_ptr.vmem [resolvable:$true] %s125
      %128 = dma.hbm_to_vmem [thread:$0]  %s9, 16, %s126, [#allocation17]
    $region41: #{tpu_custom_call.1} parent=1 // pred_fallthru
      _
    // Predicated region
    $region42: #{tpu_custom_call.1} parent=1 // pred_check
      _
    $region43: #{tpu_custom_call.1} parent=1 // pred_check_branch
      %130 = sbr.rel (0) target = $region45
    $region44: #{tpu_custom_call.1} parent=1 // pred_region
      _
    $region45: #{tpu_custom_call.1} parent=1 // pred_fallthru
      _
    // Predicated region
    $region46: #{tpu_custom_call.1} parent=1 // pred_check
      _
    $region47: #{tpu_custom_call.1} parent=1 // pred_check_branch
      %132 = sbr.rel (0) target = $region49
    $region48: #{tpu_custom_call.1} parent=1 // pred_region
      _
    $region49: #{tpu_custom_call.1} parent=1 // pred_fallthru
      _
    // Predicated region
    $region50: #{tpu_custom_call.1} parent=1 // pred_check
      _
    $region51: #{tpu_custom_call.1} parent=1 // pred_check_branch
      %134 = sbr.rel (0) target = $region53
    $region52: #{tpu_custom_call.1} parent=1 // pred_region
      _
    $region53: #{tpu_custom_call.1} parent=1 // pred_fallthru
      _
    // Predicated region
    $region54: #{tpu_custom_call.1} parent=1 // pred_check
      _
    $region55: #{tpu_custom_call.1} parent=1 // pred_check_branch
      %136 = sbr.rel (0) target = $region57
    $region56: #{tpu_custom_call.1} parent=1 // pred_region
      _
    $region57: #{tpu_custom_call.1} parent=1 // pred_fallthru
      _
    // Predicated region
    $region58: #{tpu_custom_call.1} parent=1 // pred_check
      _
    $region59: #{tpu_custom_call.1} parent=1 // pred_check_branch
      %138 = sbr.rel (0) target = $region61
    $region60: #{tpu_custom_call.1} parent=1 // pred_region
      %s140 = ssub.s32 3072, 3072
      %141 = vsyncadd [#allocation17], %s140
      %s142 = sshll.u32 [#allocation18], 4
      %s143 = int_to_ptr.vmem [resolvable:$true] %s142
      %148 = dma.hbm_to_vmem [thread:$0]  %s14, 3072, %s143, [#allocation17], 128, 128, 8
    $region61: #{tpu_custom_call.1} parent=1 // pred_fallthru
      _
    // Predicated region
    $region62: #{tpu_custom_call.1} parent=1 // pred_check
      _
    $region63: #{tpu_custom_call.1} parent=1 // pred_check_branch
      %150 = sbr.rel (0) target = $region65
    $region64: #{tpu_custom_call.1} parent=1 // pred_region
      _
    $region65: #{tpu_custom_call.1} parent=1 // pred_fallthru
      _
    // Predicated region
    $region66: #{tpu_custom_call.1} parent=1 // pred_check
      _
    $region67: #{tpu_custom_call.1} parent=1 // pred_check_branch
      %152 = sbr.rel (0) target = $region69
    $region68: #{tpu_custom_call.1} parent=1 // pred_region
      _
    $region69: #{tpu_custom_call.1} parent=1 // pred_fallthru
      _
    // Predicated region
    $region70: #{tpu_custom_call.1} parent=1 // pred_check
      _
    $region71: #{tpu_custom_call.1} parent=1 // pred_check_branch
      %154 = sbr.rel (0) target = $region73
    $region72: #{tpu_custom_call.1} parent=1 // pred_region
      _
    $region73: #{tpu_custom_call.1} parent=1 // pred_fallthru
      _
    // Predicated region
    $region74: #{tpu_custom_call.1} parent=1 // pred_check
      _
    $region75: #{tpu_custom_call.1} parent=1 // pred_check_branch
      %156 = sbr.rel (0) target = $region77
    $region76: #{tpu_custom_call.1} parent=1 // pred_region
      %157 = dma.done [#allocation5], 128
    $region77: #{tpu_custom_call.1} parent=1 // pred_fallthru
      _
    // Predicated region
    $region78: #{tpu_custom_call.1} parent=1 // pred_check
      _
    $region79: #{tpu_custom_call.1} parent=1 // pred_check_branch
      %159 = sbr.rel (0) target = $region81
    $region80: #{tpu_custom_call.1} parent=1 // pred_region
      %160 = dma.done [#allocation8], 4096
    $region81: #{tpu_custom_call.1} parent=1 // pred_fallthru
      _
    // Predicated region
    $region82: #{tpu_custom_call.1} parent=1 // pred_check
      _
    $region83: #{tpu_custom_call.1} parent=1 // pred_check_branch
      %162 = sbr.rel (0) target = $region85
    $region84: #{tpu_custom_call.1} parent=1 // pred_region
      %163 = dma.done [#allocation8], 256
    $region85: #{tpu_custom_call.1} parent=1 // pred_fallthru
      _
    // Predicated region
    $region86: #{tpu_custom_call.1} parent=1 // pred_check
      _
    $region87: #{tpu_custom_call.1} parent=1 // pred_check_branch
      %165 = sbr.rel (0) target = $region89
    $region88: #{tpu_custom_call.1} parent=1 // pred_region
      %166 = dma.done [#allocation11], 16
    $region89: #{tpu_custom_call.1} parent=1 // pred_fallthru
      _
    // Predicated region
    $region90: #{tpu_custom_call.1} parent=1 // pred_check
      _
    $region91: #{tpu_custom_call.1} parent=1 // pred_check_branch
      %168 = sbr.rel (0) target = $region93
    $region92: #{tpu_custom_call.1} parent=1 // pred_region
      %169 = dma.done [#allocation11], 256
    $region93: #{tpu_custom_call.1} parent=1 // pred_fallthru
      _
    // Predicated region
    $region94: #{tpu_custom_call.1} parent=1 // pred_check
      _
    $region95: #{tpu_custom_call.1} parent=1 // pred_check_branch
      %171 = sbr.rel (0) target = $region97
    $region96: #{tpu_custom_call.1} parent=1 // pred_region
      %172 = dma.done [#allocation14], 16
    $region97: #{tpu_custom_call.1} parent=1 // pred_fallthru
      _
    // Predicated region
    $region98: #{tpu_custom_call.1} parent=1 // pred_check
      _
    $region99: #{tpu_custom_call.1} parent=1 // pred_check_branch
      %174 = sbr.rel (0) target = $region101
    $region100: #{tpu_custom_call.1} parent=1 // pred_region
      %175 = dma.done [#allocation14], 256
    $region101: #{tpu_custom_call.1} parent=1 // pred_fallthru
      _
    // Predicated region
    $region102: #{tpu_custom_call.1} parent=1 // pred_check
      _
    $region103: #{tpu_custom_call.1} parent=1 // pred_check_branch
      %177 = sbr.rel (0) target = $region105
    $region104: #{tpu_custom_call.1} parent=1 // pred_region
      %178 = dma.done [#allocation17], 16
    $region105: #{tpu_custom_call.1} parent=1 // pred_fallthru
      _
    // Predicated region
    $region106: #{tpu_custom_call.1} parent=1 // pred_check
      _
    $region107: #{tpu_custom_call.1} parent=1 // pred_check_branch
      %180 = sbr.rel (0) target = $region109
    $region108: #{tpu_custom_call.1} parent=1 // pred_region
      %181 = dma.done [#allocation17], 3072
    $region109: #{tpu_custom_call.1} parent=1 // pred_fallthru
      _
    %v183 = vld [vmem:[#allocation4] sm:$0xff]
    %v184 = vld [vmem:[#allocation7] sm:$0xff]
    %v185 = vld [vmem:[#allocation7 + $0x8] sm:$0xff]
    %v186 = vld [vmem:[#allocation7 + $0x10] sm:$0xff]
    %v187 = vld [vmem:[#allocation7 + $0x18] sm:$0xff]
    %v188 = vld [vmem:[#allocation7 + $0x20] sm:$0xff]
    %v189 = vld [vmem:[#allocation7 + $0x28] sm:$0xff]
    %v190 = vld [vmem:[#allocation7 + $0x30] sm:$0xff]
    %v191 = vld [vmem:[#allocation7 + $0x38] sm:$0xff]
    %v192 = vld [vmem:[#allocation7 + $0x40] sm:$0xff]
    %v193 = vld [vmem:[#allocation7 + $0x48] sm:$0xff]
    %v194 = vld [vmem:[#allocation7 + $0x50] sm:$0xff]
    %v195 = vld [vmem:[#allocation7 + $0x58] sm:$0xff]
    %v196 = vld [vmem:[#allocation7 + $0x60] sm:$0xff]
    %v197 = vld [vmem:[#allocation7 + $0x68] sm:$0xff]
    %v198 = vld [vmem:[#allocation7 + $0x70] sm:$0xff]
    %v199 = vld [vmem:[#allocation7 + $0x78] sm:$0xff]
    %v200 = vld [vmem:[#allocation7 + $0x80] sm:$0xff]
    %v201 = vld [vmem:[#allocation7 + $0x88] sm:$0xff]
    %v202 = vld [vmem:[#allocation7 + $0x90] sm:$0xff]
    %v203 = vld [vmem:[#allocation7 + $0x98] sm:$0xff]
    %v204 = vld [vmem:[#allocation7 + $0xa0] sm:$0xff]
    %v205 = vld [vmem:[#allocation7 + $0xa8] sm:$0xff]
    %v206 = vld [vmem:[#allocation7 + $0xb0] sm:$0xff]
    %v207 = vld [vmem:[#allocation7 + $0xb8] sm:$0xff]
    %v208 = vld [vmem:[#allocation7 + $0xc0] sm:$0xff]
    %v209 = vld [vmem:[#allocation7 + $0xc8] sm:$0xff]
    %v210 = vld [vmem:[#allocation7 + $0xd0] sm:$0xff]
    %v211 = vld [vmem:[#allocation7 + $0xd8] sm:$0xff]
    %v212 = vld [vmem:[#allocation7 + $0xe0] sm:$0xff]
    %v213 = vld [vmem:[#allocation7 + $0xe8] sm:$0xff]
    %v214 = vld [vmem:[#allocation7 + $0xf0] sm:$0xff]
    %v215 = vld [vmem:[#allocation7 + $0xf8] sm:$0xff]
    %v216 = vpack.c.bf16 %v185, %v184
    %v217 = vpack.c.bf16 %v187, %v186
    %v218 = vpack.c.bf16 %v189, %v188
    %v219 = vpack.c.bf16 %v191, %v190
    %v220 = vpack.c.bf16 %v193, %v192
    %v221 = vpack.c.bf16 %v195, %v194
    %v222 = vpack.c.bf16 %v197, %v196
    %v223 = vpack.c.bf16 %v199, %v198
    %v224 = vpack.c.bf16 %v201, %v200
    %v225 = vpack.c.bf16 %v203, %v202
    %v226 = vpack.c.bf16 %v205, %v204
    %v227 = vpack.c.bf16 %v207, %v206
    %v228 = vpack.c.bf16 %v209, %v208
    %v229 = vpack.c.bf16 %v211, %v210
    %v230 = vpack.c.bf16 %v213, %v212
    %v231 = vpack.c.bf16 %v215, %v214
    %v232 = vld [vmem:[#allocation9] sm:$0xf]
    %v233 = vld [vmem:[#allocation9 + $0x4] sm:$0xf]
    %v234 = vld [vmem:[#allocation9 + $0x8] sm:$0xf]
    %v235 = vld [vmem:[#allocation9 + $0xc] sm:$0xf]
    %v236 = vld [vmem:[#allocation10] sm:$0x1]
    %v238 = vlaneseq
    %v239 = vshrl.u32 %v238, 7
    %v240 = vsub.s32 0, %v239
    %v241 = vrot.slane %v236, %v240
    %v247 = vunpack.c.l.b16 %v232
    %v248 = vunpack.c.l.b16 %v233
    %v249 = vunpack.c.l.b16 %v234
    %v250 = vunpack.c.l.b16 %v235
    %v251 = vpack.c.b16 %v248, %v247
    %v252 = vpack.c.b16 %v250, %v249
    %vm255 = vcmask 261120
    %v257 = vsel %vm255, %v216, 0
    %v260 = vsel %vm255, %v217, 0
    %v263 = vsel %vm255, %v218, 0
    %v266 = vsel %vm255, %v219, 0
    %v269 = vsel %vm255, %v220, 0
    %v272 = vsel %vm255, %v221, 0
    %v275 = vsel %vm255, %v222, 0
    %v278 = vsel %vm255, %v223, 0
    %v281 = vsel %vm255, %v224, 0
    %v284 = vsel %vm255, %v225, 0
    %v287 = vsel %vm255, %v226, 0
    %v290 = vsel %vm255, %v227, 0
    %v293 = vsel %vm255, %v228, 0
    %v296 = vsel %vm255, %v229, 0
    %v299 = vsel %vm255, %v230, 0
    %v302 = vsel %vm255, %v231, 0
    %304 = vmatprep.subr.bf16.mxu0 0
    %305 = vmatpush1.bf16.msra.mxu0 0
    %306 = vmatprep.subr.bf16.mxu0 0
    %307 = vmatpush1.bf16.msra.mxu0 0
    %308 = vmatprep.subr.bf16.mxu0 0
    %309 = vmatpush1.bf16.msra.mxu0 0
    %310 = vmatprep.subr.bf16.mxu0 0
    %311 = vmatpush1.bf16.msra.mxu0 0
    %312 = vmatprep.subr.bf16.mxu0 0
    %313 = vmatpush1.bf16.msra.mxu0 0
    %314 = vmatprep.subr.bf16.mxu0 0
    %315 = vmatpush1.bf16.msra.mxu0 0
    %316 = vmatprep.subr.bf16.mxu0 0
    %317 = vmatpush1.bf16.msra.mxu0 %v252
    %318 = vmatprep.subr.bf16.mxu0 0
    %319 = vmatpush1.bf16.msra.mxu0 %v251
    %320 = vmatprep.subr.bf16.mxu0 0
    %321 = vmatpush2.bf16.msra.mxu0 0
    %322 = vmatprep.subr.bf16.mxu0 0
    %323 = vmatpush2.bf16.msra.mxu0 0
    %324 = vmatprep.subr.bf16.mxu0 0
    %325 = vmatpush2.bf16.msra.mxu0 0
    %326 = vmatprep.subr.bf16.mxu0 0
    %327 = vmatpush2.bf16.msra.mxu0 0
    %328 = vmatprep.subr.bf16.mxu0 0
    %329 = vmatpush2.bf16.msra.mxu0 0
    %330 = vmatprep.subr.bf16.mxu0 0
    %331 = vmatpush2.bf16.msra.mxu0 0
    %332 = vmatprep.subr.bf16.mxu0 0
    %333 = vmatpush2.bf16.msra.mxu0 0
    %334 = vmatprep.subr.bf16.mxu0 0
    %335 = vmatpush2.bf16.msra.mxu0 0
    %336 = vmatprep.mubr.bf16.mxu0 0
    %337 = vmatmul.mubr.bf16.gmra.mxu0 %v257
    %v338 = vpop.f32.mrf.mxu0
    %v339 = vadd.f32 %v241, %v338
    %v340 = vpop.f32.mrf.mxu0
    %v341 = vpop.f32.mrf.mxu0
    %v342 = vadd.f32 %v241, %v341
    %v343 = vpop.f32.mrf.mxu0
    %344 = vmatprep.mubr.bf16.mxu0 0
    %345 = vmatmul.mubr.bf16.gmra.mxu0 %v260
    %v346 = vpop.f32.mrf.mxu0
    %v347 = vadd.f32 %v241, %v346
    %v348 = vpop.f32.mrf.mxu0
    %v349 = vpop.f32.mrf.mxu0
    %v350 = vadd.f32 %v241, %v349
    %v351 = vpop.f32.mrf.mxu0
    %352 = vmatprep.mubr.bf16.mxu0 0
    %353 = vmatmul.mubr.bf16.gmra.mxu0 %v263
    %v354 = vpop.f32.mrf.mxu0
    %v355 = vadd.f32 %v241, %v354
    %v356 = vpop.f32.mrf.mxu0
    %v357 = vpop.f32.mrf.mxu0
    %v358 = vadd.f32 %v241, %v357
    %v359 = vpop.f32.mrf.mxu0
    %360 = vmatprep.mubr.bf16.mxu0 0
    %361 = vmatmul.mubr.bf16.gmra.mxu0 %v266
    %v362 = vpop.f32.mrf.mxu0
    %v363 = vadd.f32 %v241, %v362
    %v364 = vpop.f32.mrf.mxu0
    %v365 = vpop.f32.mrf.mxu0
    %v366 = vadd.f32 %v241, %v365
    %v367 = vpop.f32.mrf.mxu0
    %368 = vmatprep.mubr.bf16.mxu0 0
    %369 = vmatmul.mubr.bf16.gmra.mxu0 %v269
    %v370 = vpop.f32.mrf.mxu0
    %v371 = vadd.f32 %v241, %v370
    %v372 = vpop.f32.mrf.mxu0
    %v373 = vpop.f32.mrf.mxu0
    %v374 = vadd.f32 %v241, %v373
    %v375 = vpop.f32.mrf.mxu0
    %376 = vmatprep.mubr.bf16.mxu0 0
    %377 = vmatmul.mubr.bf16.gmra.mxu0 %v272
    %v378 = vpop.f32.mrf.mxu0
    %v379 = vadd.f32 %v241, %v378
    %v380 = vpop.f32.mrf.mxu0
    %v381 = vpop.f32.mrf.mxu0
    %v382 = vadd.f32 %v241, %v381
    %v383 = vpop.f32.mrf.mxu0
    %384 = vmatprep.mubr.bf16.mxu0 0
    %385 = vmatmul.mubr.bf16.gmra.mxu0 %v275
    %v386 = vpop.f32.mrf.mxu0
    %v387 = vadd.f32 %v241, %v386
    %v388 = vpop.f32.mrf.mxu0
    %v389 = vpop.f32.mrf.mxu0
    %v390 = vadd.f32 %v241, %v389
    %v391 = vpop.f32.mrf.mxu0
    %392 = vmatprep.mubr.bf16.mxu0 0
    %393 = vmatmul.mubr.bf16.gmra.mxu0 %v278
    %v394 = vpop.f32.mrf.mxu0
    %v395 = vadd.f32 %v241, %v394
    %v396 = vpop.f32.mrf.mxu0
    %v397 = vpop.f32.mrf.mxu0
    %v398 = vadd.f32 %v241, %v397
    %v399 = vpop.f32.mrf.mxu0
    %400 = vmatprep.mubr.bf16.mxu0 0
    %401 = vmatmul.mubr.bf16.gmra.mxu0 %v281
    %v402 = vpop.f32.mrf.mxu0
    %v403 = vadd.f32 %v241, %v402
    %v404 = vpop.f32.mrf.mxu0
    %v405 = vpop.f32.mrf.mxu0
    %v406 = vadd.f32 %v241, %v405
    %v407 = vpop.f32.mrf.mxu0
    %408 = vmatprep.mubr.bf16.mxu0 0
    %409 = vmatmul.mubr.bf16.gmra.mxu0 %v284
    %v410 = vpop.f32.mrf.mxu0
    %v411 = vadd.f32 %v241, %v410
    %v412 = vpop.f32.mrf.mxu0
    %v413 = vpop.f32.mrf.mxu0
    %v414 = vadd.f32 %v241, %v413
    %v415 = vpop.f32.mrf.mxu0
    %416 = vmatprep.mubr.bf16.mxu0 0
    %417 = vmatmul.mubr.bf16.gmra.mxu0 %v287
    %v418 = vpop.f32.mrf.mxu0
    %v419 = vadd.f32 %v241, %v418
    %v420 = vpop.f32.mrf.mxu0
    %v421 = vpop.f32.mrf.mxu0
    %v422 = vadd.f32 %v241, %v421
    %v423 = vpop.f32.mrf.mxu0
    %424 = vmatprep.mubr.bf16.mxu0 0
    %425 = vmatmul.mubr.bf16.gmra.mxu0 %v290
    %v426 = vpop.f32.mrf.mxu0
    %v427 = vadd.f32 %v241, %v426
    %v428 = vpop.f32.mrf.mxu0
    %v429 = vpop.f32.mrf.mxu0
    %v430 = vadd.f32 %v241, %v429
    %v431 = vpop.f32.mrf.mxu0
    %432 = vmatprep.mubr.bf16.mxu0 0
    %433 = vmatmul.mubr.bf16.gmra.mxu0 %v293
    %v434 = vpop.f32.mrf.mxu0
    %v435 = vadd.f32 %v241, %v434
    %v436 = vpop.f32.mrf.mxu0
    %v437 = vpop.f32.mrf.mxu0
    %v438 = vadd.f32 %v241, %v437
    %v439 = vpop.f32.mrf.mxu0
    %440 = vmatprep.mubr.bf16.mxu0 0
    %441 = vmatmul.mubr.bf16.gmra.mxu0 %v296
    %v442 = vpop.f32.mrf.mxu0
    %v443 = vadd.f32 %v241, %v442
    %v444 = vpop.f32.mrf.mxu0
    %v445 = vpop.f32.mrf.mxu0
    %v446 = vadd.f32 %v241, %v445
    %v447 = vpop.f32.mrf.mxu0
    %448 = vmatprep.mubr.bf16.mxu0 0
    %449 = vmatmul.mubr.bf16.gmra.mxu0 %v299
    %v450 = vpop.f32.mrf.mxu0
    %v451 = vadd.f32 %v241, %v450
    %v452 = vpop.f32.mrf.mxu0
    %v453 = vpop.f32.mrf.mxu0
    %v454 = vadd.f32 %v241, %v453
    %v455 = vpop.f32.mrf.mxu0
    %456 = vmatprep.mubr.bf16.mxu0 0
    %457 = vmatmul.mubr.bf16.gmra.mxu0 %v302
    %v458 = vpop.f32.mrf.mxu0
    %v459 = vadd.f32 %v241, %v458
    %v460 = vpop.f32.mrf.mxu0
    %v461 = vpop.f32.mrf.mxu0
    %v462 = vadd.f32 %v241, %v461
    %v463 = vpop.f32.mrf.mxu0
    %464 = vdwg.mxu0
    %v465 = vld [vmem:[%s3] sm:$0xff]
    %v466 = vld [vmem:[%s3 + $0x8] sm:$0xff]
    %v467 = vpack.c.bf16 %v466, %v465
    %v468 = vld [vmem:[#allocation12] sm:$0xf]
    %v469 = vld [vmem:[#allocation12 + $0x4] sm:$0xf]
    %v470 = vld [vmem:[#allocation12 + $0x8] sm:$0xf]
    %v471 = vld [vmem:[#allocation12 + $0xc] sm:$0xf]
    %v472 = vld [vmem:[#allocation13] sm:$0x1]
    %v474 = vlaneseq
    %v475 = vshrl.u32 %v474, 7
    %v476 = vsub.s32 0, %v475
    %v477 = vrot.slane %v472, %v476
    %v483 = vunpack.c.l.b16 %v468
    %v484 = vunpack.c.l.b16 %v469
    %v485 = vunpack.c.l.b16 %v470
    %v486 = vunpack.c.l.b16 %v471
    %v487 = vpack.c.b16 %v484, %v483
    %v488 = vpack.c.b16 %v486, %v485
    %v492 = vsel %vm255, %v467, 0
    %494 = vmatprep.subr.bf16.mxu0 0
    %495 = vmatpush1.bf16.msra.mxu0 0
    %496 = vmatprep.subr.bf16.mxu0 0
    %497 = vmatpush1.bf16.msra.mxu0 0
    %498 = vmatprep.subr.bf16.mxu0 0
    %499 = vmatpush1.bf16.msra.mxu0 0
    %500 = vmatprep.subr.bf16.mxu0 0
    %501 = vmatpush1.bf16.msra.mxu0 0
    %502 = vmatprep.subr.bf16.mxu0 0
    %503 = vmatpush1.bf16.msra.mxu0 0
    %504 = vmatprep.subr.bf16.mxu0 0
    %505 = vmatpush1.bf16.msra.mxu0 0
    %506 = vmatprep.subr.bf16.mxu0 0
    %507 = vmatpush1.bf16.msra.mxu0 %v488
    %508 = vmatprep.subr.bf16.mxu0 0
    %509 = vmatpush1.bf16.msra.mxu0 %v487
    %510 = vmatprep.subr.bf16.mxu0 0
    %511 = vmatpush2.bf16.msra.mxu0 0
    %512 = vmatprep.subr.bf16.mxu0 0
    %513 = vmatpush2.bf16.msra.mxu0 0
    %514 = vmatprep.subr.bf16.mxu0 0
    %515 = vmatpush2.bf16.msra.mxu0 0
    %516 = vmatprep.subr.bf16.mxu0 0
    %517 = vmatpush2.bf16.msra.mxu0 0
    %518 = vmatprep.subr.bf16.mxu0 0
    %519 = vmatpush2.bf16.msra.mxu0 0
    %520 = vmatprep.subr.bf16.mxu0 0
    %521 = vmatpush2.bf16.msra.mxu0 0
    %522 = vmatprep.subr.bf16.mxu0 0
    %523 = vmatpush2.bf16.msra.mxu0 0
    %524 = vmatprep.subr.bf16.mxu0 0
    %525 = vmatpush2.bf16.msra.mxu0 0
    %526 = vmatprep.mubr.bf16.mxu0 0
    %527 = vmatmul.mubr.bf16.gmra.mxu0 %v492
    %v528 = vpop.f32.mrf.mxu0
    %v529 = vadd.f32 %v477, %v528
    %v530 = vpop.f32.mrf.mxu0
    %v531 = vpop.f32.mrf.mxu0
    %v532 = vadd.f32 %v477, %v531
    %v533 = vpop.f32.mrf.mxu0
    %534 = vdwg.mxu0
    %v535 = vlaneseq
    %v536 = vshrl.u32 %v535, 7
    %v537 = vsub.s32 0, %v536
    %v538 = vrot.slane %v529, %v537
    %540 = vbcast.lane.b32.xlu0 %v538, 256
    %v541 = vpop.permute.xlu0 %540
    %s543 = sor.u32 256, 8
    %544 = vbcast.lane.b32.xlu0 %v538, %s543
    %v545 = vpop.permute.xlu0 %544
    %s547 = sor.u32 256, 16
    %548 = vbcast.lane.b32.xlu0 %v538, %s547
    %v549 = vpop.permute.xlu0 %548
    %s551 = sor.u32 256, 24
    %552 = vbcast.lane.b32.xlu0 %v538, %s551
    %v553 = vpop.permute.xlu0 %552
    %v554 = vlaneseq
    %v555 = vshrl.u32 %v554, 7
    %v556 = vsub.s32 1, %v555
    %v557 = vrot.slane %v529, %v556
    %559 = vbcast.lane.b32.xlu0 %v557, 256
    %v560 = vpop.permute.xlu0 %559
    %s562 = sor.u32 256, 8
    %563 = vbcast.lane.b32.xlu0 %v557, %s562
    %v564 = vpop.permute.xlu0 %563
    %s566 = sor.u32 256, 16
    %567 = vbcast.lane.b32.xlu0 %v557, %s566
    %v568 = vpop.permute.xlu0 %567
    %s570 = sor.u32 256, 24
    %571 = vbcast.lane.b32.xlu0 %v557, %s570
    %v572 = vpop.permute.xlu0 %571
    %v573 = vlaneseq
    %v574 = vshrl.u32 %v573, 7
    %v575 = vsub.s32 2, %v574
    %v576 = vrot.slane %v529, %v575
    %578 = vbcast.lane.b32.xlu0 %v576, 256
    %v579 = vpop.permute.xlu0 %578
    %s581 = sor.u32 256, 8
    %582 = vbcast.lane.b32.xlu0 %v576, %s581
    %v583 = vpop.permute.xlu0 %582
    %s585 = sor.u32 256, 16
    %586 = vbcast.lane.b32.xlu0 %v576, %s585
    %v587 = vpop.permute.xlu0 %586
    %s589 = sor.u32 256, 24
    %590 = vbcast.lane.b32.xlu0 %v576, %s589
    %v591 = vpop.permute.xlu0 %590
    %v592 = vlaneseq
    %v593 = vshrl.u32 %v592, 7
    %v594 = vsub.s32 3, %v593
    %v595 = vrot.slane %v529, %v594
    %597 = vbcast.lane.b32.xlu0 %v595, 256
    %v598 = vpop.permute.xlu0 %597
    %s600 = sor.u32 256, 8
    %601 = vbcast.lane.b32.xlu0 %v595, %s600
    %v602 = vpop.permute.xlu0 %601
    %s604 = sor.u32 256, 16
    %605 = vbcast.lane.b32.xlu0 %v595, %s604
    %v606 = vpop.permute.xlu0 %605
    %s608 = sor.u32 256, 24
    %609 = vbcast.lane.b32.xlu0 %v595, %s608
    %v610 = vpop.permute.xlu0 %609
    %v611 = vlaneseq
    %v612 = vshrl.u32 %v611, 7
    %v613 = vsub.s32 4, %v612
    %v614 = vrot.slane %v529, %v613
    %616 = vbcast.lane.b32.xlu0 %v614, 256
    %v617 = vpop.permute.xlu0 %616
    %s619 = sor.u32 256, 8
    %620 = vbcast.lane.b32.xlu0 %v614, %s619
    %v621 = vpop.permute.xlu0 %620
    %s623 = sor.u32 256, 16
    %624 = vbcast.lane.b32.xlu0 %v614, %s623
    %v625 = vpop.permute.xlu0 %624
    %s627 = sor.u32 256, 24
    %628 = vbcast.lane.b32.xlu0 %v614, %s627
    %v629 = vpop.permute.xlu0 %628
    %v630 = vlaneseq
    %v631 = vshrl.u32 %v630, 7
    %v632 = vsub.s32 5, %v631
    %v633 = vrot.slane %v529, %v632
    %635 = vbcast.lane.b32.xlu0 %v633, 256
    %v636 = vpop.permute.xlu0 %635
    %s638 = sor.u32 256, 8
    %639 = vbcast.lane.b32.xlu0 %v633, %s638
    %v640 = vpop.permute.xlu0 %639
    %s642 = sor.u32 256, 16
    %643 = vbcast.lane.b32.xlu0 %v633, %s642
    %v644 = vpop.permute.xlu0 %643
    %s646 = sor.u32 256, 24
    %647 = vbcast.lane.b32.xlu0 %v633, %s646
    %v648 = vpop.permute.xlu0 %647
    %v649 = vlaneseq
    %v650 = vshrl.u32 %v649, 7
    %v651 = vsub.s32 6, %v650
    %v652 = vrot.slane %v529, %v651
    %654 = vbcast.lane.b32.xlu0 %v652, 256
    %v655 = vpop.permute.xlu0 %654
    %s657 = sor.u32 256, 8
    %658 = vbcast.lane.b32.xlu0 %v652, %s657
    %v659 = vpop.permute.xlu0 %658
    %s661 = sor.u32 256, 16
    %662 = vbcast.lane.b32.xlu0 %v652, %s661
    %v663 = vpop.permute.xlu0 %662
    %s665 = sor.u32 256, 24
    %666 = vbcast.lane.b32.xlu0 %v652, %s665
    %v667 = vpop.permute.xlu0 %666
    %v668 = vlaneseq
    %v669 = vshrl.u32 %v668, 7
    %v670 = vsub.s32 7, %v669
    %v671 = vrot.slane %v529, %v670
    %673 = vbcast.lane.b32.xlu0 %v671, 256
    %v674 = vpop.permute.xlu0 %673
    %s676 = sor.u32 256, 8
    %677 = vbcast.lane.b32.xlu0 %v671, %s676
    %v678 = vpop.permute.xlu0 %677
    %s680 = sor.u32 256, 16
    %681 = vbcast.lane.b32.xlu0 %v671, %s680
    %v682 = vpop.permute.xlu0 %681
    %s684 = sor.u32 256, 24
    %685 = vbcast.lane.b32.xlu0 %v671, %s684
    %v686 = vpop.permute.xlu0 %685
    %v687 = vlaneseq
    %v688 = vshrl.u32 %v687, 7
    %v689 = vsub.s32 0, %v688
    %v690 = vrot.slane %v532, %v689
    %692 = vbcast.lane.b32.xlu0 %v690, 256
    %v693 = vpop.permute.xlu0 %692
    %s695 = sor.u32 256, 8
    %696 = vbcast.lane.b32.xlu0 %v690, %s695
    %v697 = vpop.permute.xlu0 %696
    %s699 = sor.u32 256, 16
    %700 = vbcast.lane.b32.xlu0 %v690, %s699
    %v701 = vpop.permute.xlu0 %700
    %s703 = sor.u32 256, 24
    %704 = vbcast.lane.b32.xlu0 %v690, %s703
    %v705 = vpop.permute.xlu0 %704
    %v706 = vlaneseq
    %v707 = vshrl.u32 %v706, 7
    %v708 = vsub.s32 1, %v707
    %v709 = vrot.slane %v532, %v708
    %711 = vbcast.lane.b32.xlu0 %v709, 256
    %v712 = vpop.permute.xlu0 %711
    %s714 = sor.u32 256, 8
    %715 = vbcast.lane.b32.xlu0 %v709, %s714
    %v716 = vpop.permute.xlu0 %715
    %s718 = sor.u32 256, 16
    %719 = vbcast.lane.b32.xlu0 %v709, %s718
    %v720 = vpop.permute.xlu0 %719
    %s722 = sor.u32 256, 24
    %723 = vbcast.lane.b32.xlu0 %v709, %s722
    %v724 = vpop.permute.xlu0 %723
    %v725 = vlaneseq
    %v726 = vshrl.u32 %v725, 7
    %v727 = vsub.s32 2, %v726
    %v728 = vrot.slane %v532, %v727
    %730 = vbcast.lane.b32.xlu0 %v728, 256
    %v731 = vpop.permute.xlu0 %730
    %s733 = sor.u32 256, 8
    %734 = vbcast.lane.b32.xlu0 %v728, %s733
    %v735 = vpop.permute.xlu0 %734
    %s737 = sor.u32 256, 16
    %738 = vbcast.lane.b32.xlu0 %v728, %s737
    %v739 = vpop.permute.xlu0 %738
    %s741 = sor.u32 256, 24
    %742 = vbcast.lane.b32.xlu0 %v728, %s741
    %v743 = vpop.permute.xlu0 %742
    %v744 = vlaneseq
    %v745 = vshrl.u32 %v744, 7
    %v746 = vsub.s32 3, %v745
    %v747 = vrot.slane %v532, %v746
    %749 = vbcast.lane.b32.xlu0 %v747, 256
    %v750 = vpop.permute.xlu0 %749
    %s752 = sor.u32 256, 8
    %753 = vbcast.lane.b32.xlu0 %v747, %s752
    %v754 = vpop.permute.xlu0 %753
    %s756 = sor.u32 256, 16
    %757 = vbcast.lane.b32.xlu0 %v747, %s756
    %v758 = vpop.permute.xlu0 %757
    %s760 = sor.u32 256, 24
    %761 = vbcast.lane.b32.xlu0 %v747, %s760
    %v762 = vpop.permute.xlu0 %761
    %v763 = vlaneseq
    %v764 = vshrl.u32 %v763, 7
    %v765 = vsub.s32 4, %v764
    %v766 = vrot.slane %v532, %v765
    %768 = vbcast.lane.b32.xlu0 %v766, 256
    %v769 = vpop.permute.xlu0 %768
    %s771 = sor.u32 256, 8
    %772 = vbcast.lane.b32.xlu0 %v766, %s771
    %v773 = vpop.permute.xlu0 %772
    %s775 = sor.u32 256, 16
    %776 = vbcast.lane.b32.xlu0 %v766, %s775
    %v777 = vpop.permute.xlu0 %776
    %s779 = sor.u32 256, 24
    %780 = vbcast.lane.b32.xlu0 %v766, %s779
    %v781 = vpop.permute.xlu0 %780
    %v782 = vlaneseq
    %v783 = vshrl.u32 %v782, 7
    %v784 = vsub.s32 5, %v783
    %v785 = vrot.slane %v532, %v784
    %787 = vbcast.lane.b32.xlu0 %v785, 256
    %v788 = vpop.permute.xlu0 %787
    %s790 = sor.u32 256, 8
    %791 = vbcast.lane.b32.xlu0 %v785, %s790
    %v792 = vpop.permute.xlu0 %791
    %s794 = sor.u32 256, 16
    %795 = vbcast.lane.b32.xlu0 %v785, %s794
    %v796 = vpop.permute.xlu0 %795
    %s798 = sor.u32 256, 24
    %799 = vbcast.lane.b32.xlu0 %v785, %s798
    %v800 = vpop.permute.xlu0 %799
    %v801 = vlaneseq
    %v802 = vshrl.u32 %v801, 7
    %v803 = vsub.s32 6, %v802
    %v804 = vrot.slane %v532, %v803
    %806 = vbcast.lane.b32.xlu0 %v804, 256
    %v807 = vpop.permute.xlu0 %806
    %s809 = sor.u32 256, 8
    %810 = vbcast.lane.b32.xlu0 %v804, %s809
    %v811 = vpop.permute.xlu0 %810
    %s813 = sor.u32 256, 16
    %814 = vbcast.lane.b32.xlu0 %v804, %s813
    %v815 = vpop.permute.xlu0 %814
    %s817 = sor.u32 256, 24
    %818 = vbcast.lane.b32.xlu0 %v804, %s817
    %v819 = vpop.permute.xlu0 %818
    %v820 = vlaneseq
    %v821 = vshrl.u32 %v820, 7
    %v822 = vsub.s32 7, %v821
    %v823 = vrot.slane %v532, %v822
    %825 = vbcast.lane.b32.xlu0 %v823, 256
    %v826 = vpop.permute.xlu0 %825
    %s828 = sor.u32 256, 8
    %829 = vbcast.lane.b32.xlu0 %v823, %s828
    %v830 = vpop.permute.xlu0 %829
    %s832 = sor.u32 256, 16
    %833 = vbcast.lane.b32.xlu0 %v823, %s832
    %v834 = vpop.permute.xlu0 %833
    %s836 = sor.u32 256, 24
    %837 = vbcast.lane.b32.xlu0 %v823, %s836
    %v838 = vpop.permute.xlu0 %837
    %v839 = vadd.f32 %v339, %v541
    %v840 = vadd.f32 %v342, %v545
    %v841 = vadd.f32 %v347, %v549
    %v842 = vadd.f32 %v350, %v553
    %v843 = vadd.f32 %v355, %v560
    %v844 = vadd.f32 %v358, %v564
    %v845 = vadd.f32 %v363, %v568
    %v846 = vadd.f32 %v366, %v572
    %v847 = vadd.f32 %v371, %v579
    %v848 = vadd.f32 %v374, %v583
    %v849 = vadd.f32 %v379, %v587
    %v850 = vadd.f32 %v382, %v591
    %v851 = vadd.f32 %v387, %v598
    %v852 = vadd.f32 %v390, %v602
    %v853 = vadd.f32 %v395, %v606
    %v854 = vadd.f32 %v398, %v610
    %v855 = vadd.f32 %v403, %v617
    %v856 = vadd.f32 %v406, %v621
    %v857 = vadd.f32 %v411, %v625
    %v858 = vadd.f32 %v414, %v629
    %v859 = vadd.f32 %v419, %v636
    %v860 = vadd.f32 %v422, %v640
    %v861 = vadd.f32 %v427, %v644
    %v862 = vadd.f32 %v430, %v648
    %v863 = vadd.f32 %v435, %v655
    %v864 = vadd.f32 %v438, %v659
    %v865 = vadd.f32 %v443, %v663
    %v866 = vadd.f32 %v446, %v667
    %v867 = vadd.f32 %v451, %v674
    %v868 = vadd.f32 %v454, %v678
    %v869 = vadd.f32 %v459, %v682
    %v870 = vadd.f32 %v462, %v686
    %v871 = vadd.f32 %v339, %v693
    %v872 = vadd.f32 %v342, %v697
    %v873 = vadd.f32 %v347, %v701
    %v874 = vadd.f32 %v350, %v705
    %v875 = vadd.f32 %v355, %v712
    %v876 = vadd.f32 %v358, %v716
    %v877 = vadd.f32 %v363, %v720
    %v878 = vadd.f32 %v366, %v724
    %v879 = vadd.f32 %v371, %v731
    %v880 = vadd.f32 %v374, %v735
    %v881 = vadd.f32 %v379, %v739
    %v882 = vadd.f32 %v382, %v743
    %v883 = vadd.f32 %v387, %v750
    %v884 = vadd.f32 %v390, %v754
    %v885 = vadd.f32 %v395, %v758
    %v886 = vadd.f32 %v398, %v762
    %v887 = vadd.f32 %v403, %v769
    %v888 = vadd.f32 %v406, %v773
    %v889 = vadd.f32 %v411, %v777
    %v890 = vadd.f32 %v414, %v781
    %v891 = vadd.f32 %v419, %v788
    %v892 = vadd.f32 %v422, %v792
    %v893 = vadd.f32 %v427, %v796
    %v894 = vadd.f32 %v430, %v800
    %v895 = vadd.f32 %v435, %v807
    %v896 = vadd.f32 %v438, %v811
    %v897 = vadd.f32 %v443, %v815
    %v898 = vadd.f32 %v446, %v819
    %v899 = vadd.f32 %v451, %v826
    %v900 = vadd.f32 %v454, %v830
    %v901 = vadd.f32 %v459, %v834
    %v902 = vadd.f32 %v462, %v838
    %v903 = vtanh.pop %v839
    %v904 = vtanh.pop %v840
    %v905 = vtanh.pop %v841
    %v906 = vtanh.pop %v842
    %v907 = vtanh.pop %v843
    %v908 = vtanh.pop %v844
    %v909 = vtanh.pop %v845
    %v910 = vtanh.pop %v846
    %v911 = vtanh.pop %v847
    %v912 = vtanh.pop %v848
    %v913 = vtanh.pop %v849
    %v914 = vtanh.pop %v850
    %v915 = vtanh.pop %v851
    %v916 = vtanh.pop %v852
    %v917 = vtanh.pop %v853
    %v918 = vtanh.pop %v854
    %v919 = vtanh.pop %v855
    %v920 = vtanh.pop %v856
    %v921 = vtanh.pop %v857
    %v922 = vtanh.pop %v858
    %v923 = vtanh.pop %v859
    %v924 = vtanh.pop %v860
    %v925 = vtanh.pop %v861
    %v926 = vtanh.pop %v862
    %v927 = vtanh.pop %v863
    %v928 = vtanh.pop %v864
    %v929 = vtanh.pop %v865
    %v930 = vtanh.pop %v866
    %v931 = vtanh.pop %v867
    %v932 = vtanh.pop %v868
    %v933 = vtanh.pop %v869
    %v934 = vtanh.pop %v870
    %v935 = vtanh.pop %v871
    %v936 = vtanh.pop %v872
    %v937 = vtanh.pop %v873
    %v938 = vtanh.pop %v874
    %v939 = vtanh.pop %v875
    %v940 = vtanh.pop %v876
    %v941 = vtanh.pop %v877
    %v942 = vtanh.pop %v878
    %v943 = vtanh.pop %v879
    %v944 = vtanh.pop %v880
    %v945 = vtanh.pop %v881
    %v946 = vtanh.pop %v882
    %v947 = vtanh.pop %v883
    %v948 = vtanh.pop %v884
    %v949 = vtanh.pop %v885
    %v950 = vtanh.pop %v886
    %v951 = vtanh.pop %v887
    %v952 = vtanh.pop %v888
    %v953 = vtanh.pop %v889
    %v954 = vtanh.pop %v890
    %v955 = vtanh.pop %v891
    %v956 = vtanh.pop %v892
    %v957 = vtanh.pop %v893
    %v958 = vtanh.pop %v894
    %v959 = vtanh.pop %v895
    %v960 = vtanh.pop %v896
    %v961 = vtanh.pop %v897
    %v962 = vtanh.pop %v898
    %v963 = vtanh.pop %v899
    %v964 = vtanh.pop %v900
    %v965 = vtanh.pop %v901
    %v966 = vtanh.pop %v902
    %v967 = vld [vmem:[%s10] sm:$0x1]
    %v969 = vlaneseq
    %v970 = vshrl.u32 %v969, 7
    %v971 = vsub.s32 0, %v970
    %v972 = vrot.slane %v967, %v971
    %v974 = vmul.f32 %v903, %v972
    %v975 = vmul.f32 %v904, %v972
    %v976 = vmul.f32 %v905, %v972
    %v977 = vmul.f32 %v906, %v972
    %v978 = vmul.f32 %v907, %v972
    %v979 = vmul.f32 %v908, %v972
    %v980 = vmul.f32 %v909, %v972
    %v981 = vmul.f32 %v910, %v972
    %v982 = vmul.f32 %v911, %v972
    %v983 = vmul.f32 %v912, %v972
    %v984 = vmul.f32 %v913, %v972
    %v985 = vmul.f32 %v914, %v972
    %v986 = vmul.f32 %v915, %v972
    %v987 = vmul.f32 %v916, %v972
    %v988 = vmul.f32 %v917, %v972
    %v989 = vmul.f32 %v918, %v972
    %v990 = vmul.f32 %v919, %v972
    %v991 = vmul.f32 %v920, %v972
    %v992 = vmul.f32 %v921, %v972
    %v993 = vmul.f32 %v922, %v972
    %v994 = vmul.f32 %v923, %v972
    %v995 = vmul.f32 %v924, %v972
    %v996 = vmul.f32 %v925, %v972
    %v997 = vmul.f32 %v926, %v972
    %v998 = vmul.f32 %v927, %v972
    %v999 = vmul.f32 %v928, %v972
    %v1000 = vmul.f32 %v929, %v972
    %v1001 = vmul.f32 %v930, %v972
    %v1002 = vmul.f32 %v931, %v972
    %v1003 = vmul.f32 %v932, %v972
    %v1004 = vmul.f32 %v933, %v972
    %v1005 = vmul.f32 %v934, %v972
    %v1006 = vmul.f32 %v935, %v972
    %v1007 = vmul.f32 %v936, %v972
    %v1008 = vmul.f32 %v937, %v972
    %v1009 = vmul.f32 %v938, %v972
    %v1010 = vmul.f32 %v939, %v972
    %v1011 = vmul.f32 %v940, %v972
    %v1012 = vmul.f32 %v941, %v972
    %v1013 = vmul.f32 %v942, %v972
    %v1014 = vmul.f32 %v943, %v972
    %v1015 = vmul.f32 %v944, %v972
    %v1016 = vmul.f32 %v945, %v972
    %v1017 = vmul.f32 %v946, %v972
    %v1018 = vmul.f32 %v947, %v972
    %v1019 = vmul.f32 %v948, %v972
    %v1020 = vmul.f32 %v949, %v972
    %v1021 = vmul.f32 %v950, %v972
    %v1022 = vmul.f32 %v951, %v972
    %v1023 = vmul.f32 %v952, %v972
    %v1024 = vmul.f32 %v953, %v972
    %v1025 = vmul.f32 %v954, %v972
    %v1026 = vmul.f32 %v955, %v972
    %v1027 = vmul.f32 %v956, %v972
    %v1028 = vmul.f32 %v957, %v972
    %v1029 = vmul.f32 %v958, %v972
    %v1030 = vmul.f32 %v959, %v972
    %v1031 = vmul.f32 %v960, %v972
    %v1032 = vmul.f32 %v961, %v972
    %v1033 = vmul.f32 %v962, %v972
    %v1034 = vmul.f32 %v963, %v972
    %v1035 = vmul.f32 %v964, %v972
    %v1036 = vmul.f32 %v965, %v972
    %v1037 = vmul.f32 %v966, %v972
    %v1038 = vsel %vm255, %v974, 0.0
    %1039 = vadd.xlane.f32.xlu0 %v1038
    %v1040 = vpop.xlane.xlu0 %1039
    %v1041 = vsel %vm255, %v975, 0.0
    %1042 = vadd.xlane.f32.xlu0 %v1041
    %v1043 = vpop.xlane.xlu0 %1042
    %v1044 = vsel %vm255, %v976, 0.0
    %1045 = vadd.xlane.f32.xlu0 %v1044
    %v1046 = vpop.xlane.xlu0 %1045
    %v1047 = vsel %vm255, %v977, 0.0
    %1048 = vadd.xlane.f32.xlu0 %v1047
    %v1049 = vpop.xlane.xlu0 %1048
    %v1050 = vsel %vm255, %v978, 0.0
    %1051 = vadd.xlane.f32.xlu0 %v1050
    %v1052 = vpop.xlane.xlu0 %1051
    %v1053 = vsel %vm255, %v979, 0.0
    %1054 = vadd.xlane.f32.xlu0 %v1053
    %v1055 = vpop.xlane.xlu0 %1054
    %v1056 = vsel %vm255, %v980, 0.0
    %1057 = vadd.xlane.f32.xlu0 %v1056
    %v1058 = vpop.xlane.xlu0 %1057
    %v1059 = vsel %vm255, %v981, 0.0
    %1060 = vadd.xlane.f32.xlu0 %v1059
    %v1061 = vpop.xlane.xlu0 %1060
    %v1062 = vsel %vm255, %v982, 0.0
    %1063 = vadd.xlane.f32.xlu0 %v1062
    %v1064 = vpop.xlane.xlu0 %1063
    %v1065 = vsel %vm255, %v983, 0.0
    %1066 = vadd.xlane.f32.xlu0 %v1065
    %v1067 = vpop.xlane.xlu0 %1066
    %v1068 = vsel %vm255, %v984, 0.0
    %1069 = vadd.xlane.f32.xlu0 %v1068
    %v1070 = vpop.xlane.xlu0 %1069
    %v1071 = vsel %vm255, %v985, 0.0
    %1072 = vadd.xlane.f32.xlu0 %v1071
    %v1073 = vpop.xlane.xlu0 %1072
    %v1074 = vsel %vm255, %v986, 0.0
    %1075 = vadd.xlane.f32.xlu0 %v1074
    %v1076 = vpop.xlane.xlu0 %1075
    %v1077 = vsel %vm255, %v987, 0.0
    %1078 = vadd.xlane.f32.xlu0 %v1077
    %v1079 = vpop.xlane.xlu0 %1078
    %v1080 = vsel %vm255, %v988, 0.0
    %1081 = vadd.xlane.f32.xlu0 %v1080
    %v1082 = vpop.xlane.xlu0 %1081
    %v1083 = vsel %vm255, %v989, 0.0
    %1084 = vadd.xlane.f32.xlu0 %v1083
    %v1085 = vpop.xlane.xlu0 %1084
    %v1086 = vsel %vm255, %v990, 0.0
    %1087 = vadd.xlane.f32.xlu0 %v1086
    %v1088 = vpop.xlane.xlu0 %1087
    %v1089 = vsel %vm255, %v991, 0.0
    %1090 = vadd.xlane.f32.xlu0 %v1089
    %v1091 = vpop.xlane.xlu0 %1090
    %v1092 = vsel %vm255, %v992, 0.0
    %1093 = vadd.xlane.f32.xlu0 %v1092
    %v1094 = vpop.xlane.xlu0 %1093
    %v1095 = vsel %vm255, %v993, 0.0
    %1096 = vadd.xlane.f32.xlu0 %v1095
    %v1097 = vpop.xlane.xlu0 %1096
    %v1098 = vsel %vm255, %v994, 0.0
    %1099 = vadd.xlane.f32.xlu0 %v1098
    %v1100 = vpop.xlane.xlu0 %1099
    %v1101 = vsel %vm255, %v995, 0.0
    %1102 = vadd.xlane.f32.xlu0 %v1101
    %v1103 = vpop.xlane.xlu0 %1102
    %v1104 = vsel %vm255, %v996, 0.0
    %1105 = vadd.xlane.f32.xlu0 %v1104
    %v1106 = vpop.xlane.xlu0 %1105
    %v1107 = vsel %vm255, %v997, 0.0
    %1108 = vadd.xlane.f32.xlu0 %v1107
    %v1109 = vpop.xlane.xlu0 %1108
    %v1110 = vsel %vm255, %v998, 0.0
    %1111 = vadd.xlane.f32.xlu0 %v1110
    %v1112 = vpop.xlane.xlu0 %1111
    %v1113 = vsel %vm255, %v999, 0.0
    %1114 = vadd.xlane.f32.xlu0 %v1113
    %v1115 = vpop.xlane.xlu0 %1114
    %v1116 = vsel %vm255, %v1000, 0.0
    %1117 = vadd.xlane.f32.xlu0 %v1116
    %v1118 = vpop.xlane.xlu0 %1117
    %v1119 = vsel %vm255, %v1001, 0.0
    %1120 = vadd.xlane.f32.xlu0 %v1119
    %v1121 = vpop.xlane.xlu0 %1120
    %v1122 = vsel %vm255, %v1002, 0.0
    %1123 = vadd.xlane.f32.xlu0 %v1122
    %v1124 = vpop.xlane.xlu0 %1123
    %v1125 = vsel %vm255, %v1003, 0.0
    %1126 = vadd.xlane.f32.xlu0 %v1125
    %v1127 = vpop.xlane.xlu0 %1126
    %v1128 = vsel %vm255, %v1004, 0.0
    %1129 = vadd.xlane.f32.xlu0 %v1128
    %v1130 = vpop.xlane.xlu0 %1129
    %v1131 = vsel %vm255, %v1005, 0.0
    %1132 = vadd.xlane.f32.xlu0 %v1131
    %v1133 = vpop.xlane.xlu0 %1132
    %v1134 = vsel %vm255, %v1006, 0.0
    %1135 = vadd.xlane.f32.xlu0 %v1134
    %v1136 = vpop.xlane.xlu0 %1135
    %v1137 = vsel %vm255, %v1007, 0.0
    %1138 = vadd.xlane.f32.xlu0 %v1137
    %v1139 = vpop.xlane.xlu0 %1138
    %v1140 = vsel %vm255, %v1008, 0.0
    %1141 = vadd.xlane.f32.xlu0 %v1140
    %v1142 = vpop.xlane.xlu0 %1141
    %v1143 = vsel %vm255, %v1009, 0.0
    %1144 = vadd.xlane.f32.xlu0 %v1143
    %v1145 = vpop.xlane.xlu0 %1144
    %v1146 = vsel %vm255, %v1010, 0.0
    %1147 = vadd.xlane.f32.xlu0 %v1146
    %v1148 = vpop.xlane.xlu0 %1147
    %v1149 = vsel %vm255, %v1011, 0.0
    %1150 = vadd.xlane.f32.xlu0 %v1149
    %v1151 = vpop.xlane.xlu0 %1150
    %v1152 = vsel %vm255, %v1012, 0.0
    %1153 = vadd.xlane.f32.xlu0 %v1152
    %v1154 = vpop.xlane.xlu0 %1153
    %v1155 = vsel %vm255, %v1013, 0.0
    %1156 = vadd.xlane.f32.xlu0 %v1155
    %v1157 = vpop.xlane.xlu0 %1156
    %v1158 = vsel %vm255, %v1014, 0.0
    %1159 = vadd.xlane.f32.xlu0 %v1158
    %v1160 = vpop.xlane.xlu0 %1159
    %v1161 = vsel %vm255, %v1015, 0.0
    %1162 = vadd.xlane.f32.xlu0 %v1161
    %v1163 = vpop.xlane.xlu0 %1162
    %v1164 = vsel %vm255, %v1016, 0.0
    %1165 = vadd.xlane.f32.xlu0 %v1164
    %v1166 = vpop.xlane.xlu0 %1165
    %v1167 = vsel %vm255, %v1017, 0.0
    %1168 = vadd.xlane.f32.xlu0 %v1167
    %v1169 = vpop.xlane.xlu0 %1168
    %v1170 = vsel %vm255, %v1018, 0.0
    %1171 = vadd.xlane.f32.xlu0 %v1170
    %v1172 = vpop.xlane.xlu0 %1171
    %v1173 = vsel %vm255, %v1019, 0.0
    %1174 = vadd.xlane.f32.xlu0 %v1173
    %v1175 = vpop.xlane.xlu0 %1174
    %v1176 = vsel %vm255, %v1020, 0.0
    %1177 = vadd.xlane.f32.xlu0 %v1176
    %v1178 = vpop.xlane.xlu0 %1177
    %v1179 = vsel %vm255, %v1021, 0.0
    %1180 = vadd.xlane.f32.xlu0 %v1179
    %v1181 = vpop.xlane.xlu0 %1180
    %v1182 = vsel %vm255, %v1022, 0.0
    %1183 = vadd.xlane.f32.xlu0 %v1182
    %v1184 = vpop.xlane.xlu0 %1183
    %v1185 = vsel %vm255, %v1023, 0.0
    %1186 = vadd.xlane.f32.xlu0 %v1185
    %v1187 = vpop.xlane.xlu0 %1186
    %v1188 = vsel %vm255, %v1024, 0.0
    %1189 = vadd.xlane.f32.xlu0 %v1188
    %v1190 = vpop.xlane.xlu0 %1189
    %v1191 = vsel %vm255, %v1025, 0.0
    %1192 = vadd.xlane.f32.xlu0 %v1191
    %v1193 = vpop.xlane.xlu0 %1192
    %v1194 = vsel %vm255, %v1026, 0.0
    %1195 = vadd.xlane.f32.xlu0 %v1194
    %v1196 = vpop.xlane.xlu0 %1195
    %v1197 = vsel %vm255, %v1027, 0.0
    %1198 = vadd.xlane.f32.xlu0 %v1197
    %v1199 = vpop.xlane.xlu0 %1198
    %v1200 = vsel %vm255, %v1028, 0.0
    %1201 = vadd.xlane.f32.xlu0 %v1200
    %v1202 = vpop.xlane.xlu0 %1201
    %v1203 = vsel %vm255, %v1029, 0.0
    %1204 = vadd.xlane.f32.xlu0 %v1203
    %v1205 = vpop.xlane.xlu0 %1204
    %v1206 = vsel %vm255, %v1030, 0.0
    %1207 = vadd.xlane.f32.xlu0 %v1206
    %v1208 = vpop.xlane.xlu0 %1207
    %v1209 = vsel %vm255, %v1031, 0.0
    %1210 = vadd.xlane.f32.xlu0 %v1209
    %v1211 = vpop.xlane.xlu0 %1210
    %v1212 = vsel %vm255, %v1032, 0.0
    %1213 = vadd.xlane.f32.xlu0 %v1212
    %v1214 = vpop.xlane.xlu0 %1213
    %v1215 = vsel %vm255, %v1033, 0.0
    %1216 = vadd.xlane.f32.xlu0 %v1215
    %v1217 = vpop.xlane.xlu0 %1216
    %v1218 = vsel %vm255, %v1034, 0.0
    %1219 = vadd.xlane.f32.xlu0 %v1218
    %v1220 = vpop.xlane.xlu0 %1219
    %v1221 = vsel %vm255, %v1035, 0.0
    %1222 = vadd.xlane.f32.xlu0 %v1221
    %v1223 = vpop.xlane.xlu0 %1222
    %v1224 = vsel %vm255, %v1036, 0.0
    %1225 = vadd.xlane.f32.xlu0 %v1224
    %v1226 = vpop.xlane.xlu0 %1225
    %v1227 = vsel %vm255, %v1037, 0.0
    %1228 = vadd.xlane.f32.xlu0 %v1227
    %v1229 = vpop.xlane.xlu0 %1228
    %v1230 = vld [vmem:[#allocation2] sm:$0x1]
    %v1232 = vlaneseq
    %v1233 = vshrl.u32 %v1232, 7
    %v1234 = vsub.s32 0, %v1233
    %v1235 = vrot.slane %v1230, %v1234
    %1236 = vset.pattern.permute.xlu0 0
    %1237 = vperm.xlu0 %1236, %v1235
    %v1238 = vpop.permute.xlu0 %1237
    %v1240 = vadd.f32 %v1040, %v1238
    %v1241 = vadd.f32 %v1043, %v1238
    %v1242 = vadd.f32 %v1046, %v1238
    %v1243 = vadd.f32 %v1049, %v1238
    %v1244 = vadd.f32 %v1052, %v1238
    %v1245 = vadd.f32 %v1055, %v1238
    %v1246 = vadd.f32 %v1058, %v1238
    %v1247 = vadd.f32 %v1061, %v1238
    %v1248 = vadd.f32 %v1064, %v1238
    %v1249 = vadd.f32 %v1067, %v1238
    %v1250 = vadd.f32 %v1070, %v1238
    %v1251 = vadd.f32 %v1073, %v1238
    %v1252 = vadd.f32 %v1076, %v1238
    %v1253 = vadd.f32 %v1079, %v1238
    %v1254 = vadd.f32 %v1082, %v1238
    %v1255 = vadd.f32 %v1085, %v1238
    %v1256 = vadd.f32 %v1088, %v1238
    %v1257 = vadd.f32 %v1091, %v1238
    %v1258 = vadd.f32 %v1094, %v1238
    %v1259 = vadd.f32 %v1097, %v1238
    %v1260 = vadd.f32 %v1100, %v1238
    %v1261 = vadd.f32 %v1103, %v1238
    %v1262 = vadd.f32 %v1106, %v1238
    %v1263 = vadd.f32 %v1109, %v1238
    %v1264 = vadd.f32 %v1112, %v1238
    %v1265 = vadd.f32 %v1115, %v1238
    %v1266 = vadd.f32 %v1118, %v1238
    %v1267 = vadd.f32 %v1121, %v1238
    %v1268 = vadd.f32 %v1124, %v1238
    %v1269 = vadd.f32 %v1127, %v1238
    %v1270 = vadd.f32 %v1130, %v1238
    %v1271 = vadd.f32 %v1133, %v1238
    %v1272 = vadd.f32 %v1136, %v1238
    %v1273 = vadd.f32 %v1139, %v1238
    %v1274 = vadd.f32 %v1142, %v1238
    %v1275 = vadd.f32 %v1145, %v1238
    %v1276 = vadd.f32 %v1148, %v1238
    %v1277 = vadd.f32 %v1151, %v1238
    %v1278 = vadd.f32 %v1154, %v1238
    %v1279 = vadd.f32 %v1157, %v1238
    %v1280 = vadd.f32 %v1160, %v1238
    %v1281 = vadd.f32 %v1163, %v1238
    %v1282 = vadd.f32 %v1166, %v1238
    %v1283 = vadd.f32 %v1169, %v1238
    %v1284 = vadd.f32 %v1172, %v1238
    %v1285 = vadd.f32 %v1175, %v1238
    %v1286 = vadd.f32 %v1178, %v1238
    %v1287 = vadd.f32 %v1181, %v1238
    %v1288 = vadd.f32 %v1184, %v1238
    %v1289 = vadd.f32 %v1187, %v1238
    %v1290 = vadd.f32 %v1190, %v1238
    %v1291 = vadd.f32 %v1193, %v1238
    %v1292 = vadd.f32 %v1196, %v1238
    %v1293 = vadd.f32 %v1199, %v1238
    %v1294 = vadd.f32 %v1202, %v1238
    %v1295 = vadd.f32 %v1205, %v1238
    %v1296 = vadd.f32 %v1208, %v1238
    %v1297 = vadd.f32 %v1211, %v1238
    %v1298 = vadd.f32 %v1214, %v1238
    %v1299 = vadd.f32 %v1217, %v1238
    %v1300 = vadd.f32 %v1220, %v1238
    %v1301 = vadd.f32 %v1223, %v1238
    %v1302 = vadd.f32 %v1226, %v1238
    %v1303 = vadd.f32 %v1229, %v1238
    %v1368 = vlaneseq
    %v1369 = vand.u32 %v1368, 127
    %v1370 = vlaneseq
    %v1371 = vshrl.u32 %v1370, 7
    %v1372 = vsub.s32 %v1369, %v1371
    %v1373 = vrot.slane %v1240, %v1372
    %v1374 = vadd.s32 %v1369, 4294967288
    %v1375 = vlaneseq
    %v1376 = vshrl.u32 %v1375, 7
    %v1377 = vsub.s32 %v1374, %v1376
    %v1378 = vrot.slane %v1241, %v1377
    %vm1379 = vcmask 130112
    %v1380 = vsel %vm1379, %v1378, %v1373
    %v1381 = vadd.s32 %v1369, 4294967280
    %v1382 = vlaneseq
    %v1383 = vshrl.u32 %v1382, 7
    %v1384 = vsub.s32 %v1381, %v1383
    %v1385 = vrot.slane %v1242, %v1384
    %vm1386 = vcmask 195712
    %v1387 = vsel %vm1386, %v1385, %v1380
    %v1388 = vadd.s32 %v1369, 4294967272
    %v1389 = vlaneseq
    %v1390 = vshrl.u32 %v1389, 7
    %v1391 = vsub.s32 %v1388, %v1390
    %v1392 = vrot.slane %v1243, %v1391
    %vm1393 = vcmask 261312
    %v1394 = vsel %vm1393, %v1392, %v1387
    %v1395 = vlaneseq
    %v1396 = vshrl.u32 %v1395, 7
    %v1397 = vsub.s32 %v1369, %v1396
    %v1398 = vrot.slane %v1244, %v1397
    %v1399 = vlaneseq
    %v1400 = vshrl.u32 %v1399, 7
    %v1401 = vsub.s32 %v1374, %v1400
    %v1402 = vrot.slane %v1245, %v1401
    %v1403 = vsel %vm1379, %v1402, %v1398
    %v1404 = vlaneseq
    %v1405 = vshrl.u32 %v1404, 7
    %v1406 = vsub.s32 %v1381, %v1405
    %v1407 = vrot.slane %v1246, %v1406
    %v1408 = vsel %vm1386, %v1407, %v1403
    %v1409 = vlaneseq
    %v1410 = vshrl.u32 %v1409, 7
    %v1411 = vsub.s32 %v1388, %v1410
    %v1412 = vrot.slane %v1247, %v1411
    %v1413 = vsel %vm1393, %v1412, %v1408
    %v1414 = vlaneseq
    %v1415 = vshrl.u32 %v1414, 7
    %v1416 = vsub.s32 %v1369, %v1415
    %v1417 = vrot.slane %v1248, %v1416
    %v1418 = vlaneseq
    %v1419 = vshrl.u32 %v1418, 7
    %v1420 = vsub.s32 %v1374, %v1419
    %v1421 = vrot.slane %v1249, %v1420
    %v1422 = vsel %vm1379, %v1421, %v1417
    %v1423 = vlaneseq
    %v1424 = vshrl.u32 %v1423, 7
    %v1425 = vsub.s32 %v1381, %v1424
    %v1426 = vrot.slane %v1250, %v1425
    %v1427 = vsel %vm1386, %v1426, %v1422
    %v1428 = vlaneseq
    %v1429 = vshrl.u32 %v1428, 7
    %v1430 = vsub.s32 %v1388, %v1429
    %v1431 = vrot.slane %v1251, %v1430
    %v1432 = vsel %vm1393, %v1431, %v1427
    %v1433 = vlaneseq
    %v1434 = vshrl.u32 %v1433, 7
    %v1435 = vsub.s32 %v1369, %v1434
    %v1436 = vrot.slane %v1252, %v1435
    %v1437 = vlaneseq
    %v1438 = vshrl.u32 %v1437, 7
    %v1439 = vsub.s32 %v1374, %v1438
    %v1440 = vrot.slane %v1253, %v1439
    %v1441 = vsel %vm1379, %v1440, %v1436
    %v1442 = vlaneseq
    %v1443 = vshrl.u32 %v1442, 7
    %v1444 = vsub.s32 %v1381, %v1443
    %v1445 = vrot.slane %v1254, %v1444
    %v1446 = vsel %vm1386, %v1445, %v1441
    %v1447 = vlaneseq
    %v1448 = vshrl.u32 %v1447, 7
    %v1449 = vsub.s32 %v1388, %v1448
    %v1450 = vrot.slane %v1255, %v1449
    %v1451 = vsel %vm1393, %v1450, %v1446
    %v1452 = vlaneseq
    %v1453 = vshrl.u32 %v1452, 7
    %v1454 = vsub.s32 %v1369, %v1453
    %v1455 = vrot.slane %v1256, %v1454
    %v1456 = vlaneseq
    %v1457 = vshrl.u32 %v1456, 7
    %v1458 = vsub.s32 %v1374, %v1457
    %v1459 = vrot.slane %v1257, %v1458
    %v1460 = vsel %vm1379, %v1459, %v1455
    %v1461 = vlaneseq
    %v1462 = vshrl.u32 %v1461, 7
    %v1463 = vsub.s32 %v1381, %v1462
    %v1464 = vrot.slane %v1258, %v1463
    %v1465 = vsel %vm1386, %v1464, %v1460
    %v1466 = vlaneseq
    %v1467 = vshrl.u32 %v1466, 7
    %v1468 = vsub.s32 %v1388, %v1467
    %v1469 = vrot.slane %v1259, %v1468
    %v1470 = vsel %vm1393, %v1469, %v1465
    %v1471 = vlaneseq
    %v1472 = vshrl.u32 %v1471, 7
    %v1473 = vsub.s32 %v1369, %v1472
    %v1474 = vrot.slane %v1260, %v1473
    %v1475 = vlaneseq
    %v1476 = vshrl.u32 %v1475, 7
    %v1477 = vsub.s32 %v1374, %v1476
    %v1478 = vrot.slane %v1261, %v1477
    %v1479 = vsel %vm1379, %v1478, %v1474
    %v1480 = vlaneseq
    %v1481 = vshrl.u32 %v1480, 7
    %v1482 = vsub.s32 %v1381, %v1481
    %v1483 = vrot.slane %v1262, %v1482
    %v1484 = vsel %vm1386, %v1483, %v1479
    %v1485 = vlaneseq
    %v1486 = vshrl.u32 %v1485, 7
    %v1487 = vsub.s32 %v1388, %v1486
    %v1488 = vrot.slane %v1263, %v1487
    %v1489 = vsel %vm1393, %v1488, %v1484
    %v1490 = vlaneseq
    %v1491 = vshrl.u32 %v1490, 7
    %v1492 = vsub.s32 %v1369, %v1491
    %v1493 = vrot.slane %v1264, %v1492
    %v1494 = vlaneseq
    %v1495 = vshrl.u32 %v1494, 7
    %v1496 = vsub.s32 %v1374, %v1495
    %v1497 = vrot.slane %v1265, %v1496
    %v1498 = vsel %vm1379, %v1497, %v1493
    %v1499 = vlaneseq
    %v1500 = vshrl.u32 %v1499, 7
    %v1501 = vsub.s32 %v1381, %v1500
    %v1502 = vrot.slane %v1266, %v1501
    %v1503 = vsel %vm1386, %v1502, %v1498
    %v1504 = vlaneseq
    %v1505 = vshrl.u32 %v1504, 7
    %v1506 = vsub.s32 %v1388, %v1505
    %v1507 = vrot.slane %v1267, %v1506
    %v1508 = vsel %vm1393, %v1507, %v1503
    %v1509 = vlaneseq
    %v1510 = vshrl.u32 %v1509, 7
    %v1511 = vsub.s32 %v1369, %v1510
    %v1512 = vrot.slane %v1268, %v1511
    %v1513 = vlaneseq
    %v1514 = vshrl.u32 %v1513, 7
    %v1515 = vsub.s32 %v1374, %v1514
    %v1516 = vrot.slane %v1269, %v1515
    %v1517 = vsel %vm1379, %v1516, %v1512
    %v1518 = vlaneseq
    %v1519 = vshrl.u32 %v1518, 7
    %v1520 = vsub.s32 %v1381, %v1519
    %v1521 = vrot.slane %v1270, %v1520
    %v1522 = vsel %vm1386, %v1521, %v1517
    %v1523 = vlaneseq
    %v1524 = vshrl.u32 %v1523, 7
    %v1525 = vsub.s32 %v1388, %v1524
    %v1526 = vrot.slane %v1271, %v1525
    %v1527 = vsel %vm1393, %v1526, %v1522
    %v1528 = vlaneseq
    %v1529 = vshrl.u32 %v1528, 7
    %v1530 = vsub.s32 %v1369, %v1529
    %v1531 = vrot.slane %v1272, %v1530
    %v1532 = vlaneseq
    %v1533 = vshrl.u32 %v1532, 7
    %v1534 = vsub.s32 %v1374, %v1533
    %v1535 = vrot.slane %v1273, %v1534
    %v1536 = vsel %vm1379, %v1535, %v1531
    %v1537 = vlaneseq
    %v1538 = vshrl.u32 %v1537, 7
    %v1539 = vsub.s32 %v1381, %v1538
    %v1540 = vrot.slane %v1274, %v1539
    %v1541 = vsel %vm1386, %v1540, %v1536
    %v1542 = vlaneseq
    %v1543 = vshrl.u32 %v1542, 7
    %v1544 = vsub.s32 %v1388, %v1543
    %v1545 = vrot.slane %v1275, %v1544
    %v1546 = vsel %vm1393, %v1545, %v1541
    %v1547 = vlaneseq
    %v1548 = vshrl.u32 %v1547, 7
    %v1549 = vsub.s32 %v1369, %v1548
    %v1550 = vrot.slane %v1276, %v1549
    %v1551 = vlaneseq
    %v1552 = vshrl.u32 %v1551, 7
    %v1553 = vsub.s32 %v1374, %v1552
    %v1554 = vrot.slane %v1277, %v1553
    %v1555 = vsel %vm1379, %v1554, %v1550
    %v1556 = vlaneseq
    %v1557 = vshrl.u32 %v1556, 7
    %v1558 = vsub.s32 %v1381, %v1557
    %v1559 = vrot.slane %v1278, %v1558
    %v1560 = vsel %vm1386, %v1559, %v1555
    %v1561 = vlaneseq
    %v1562 = vshrl.u32 %v1561, 7
    %v1563 = vsub.s32 %v1388, %v1562
    %v1564 = vrot.slane %v1279, %v1563
    %v1565 = vsel %vm1393, %v1564, %v1560
    %v1566 = vlaneseq
    %v1567 = vshrl.u32 %v1566, 7
    %v1568 = vsub.s32 %v1369, %v1567
    %v1569 = vrot.slane %v1280, %v1568
    %v1570 = vlaneseq
    %v1571 = vshrl.u32 %v1570, 7
    %v1572 = vsub.s32 %v1374, %v1571
    %v1573 = vrot.slane %v1281, %v1572
    %v1574 = vsel %vm1379, %v1573, %v1569
    %v1575 = vlaneseq
    %v1576 = vshrl.u32 %v1575, 7
    %v1577 = vsub.s32 %v1381, %v1576
    %v1578 = vrot.slane %v1282, %v1577
    %v1579 = vsel %vm1386, %v1578, %v1574
    %v1580 = vlaneseq
    %v1581 = vshrl.u32 %v1580, 7
    %v1582 = vsub.s32 %v1388, %v1581
    %v1583 = vrot.slane %v1283, %v1582
    %v1584 = vsel %vm1393, %v1583, %v1579
    %v1585 = vlaneseq
    %v1586 = vshrl.u32 %v1585, 7
    %v1587 = vsub.s32 %v1369, %v1586
    %v1588 = vrot.slane %v1284, %v1587
    %v1589 = vlaneseq
    %v1590 = vshrl.u32 %v1589, 7
    %v1591 = vsub.s32 %v1374, %v1590
    %v1592 = vrot.slane %v1285, %v1591
    %v1593 = vsel %vm1379, %v1592, %v1588
    %v1594 = vlaneseq
    %v1595 = vshrl.u32 %v1594, 7
    %v1596 = vsub.s32 %v1381, %v1595
    %v1597 = vrot.slane %v1286, %v1596
    %v1598 = vsel %vm1386, %v1597, %v1593
    %v1599 = vlaneseq
    %v1600 = vshrl.u32 %v1599, 7
    %v1601 = vsub.s32 %v1388, %v1600
    %v1602 = vrot.slane %v1287, %v1601
    %v1603 = vsel %vm1393, %v1602, %v1598
    %v1604 = vlaneseq
    %v1605 = vshrl.u32 %v1604, 7
    %v1606 = vsub.s32 %v1369, %v1605
    %v1607 = vrot.slane %v1288, %v1606
    %v1608 = vlaneseq
    %v1609 = vshrl.u32 %v1608, 7
    %v1610 = vsub.s32 %v1374, %v1609
    %v1611 = vrot.slane %v1289, %v1610
    %v1612 = vsel %vm1379, %v1611, %v1607
    %v1613 = vlaneseq
    %v1614 = vshrl.u32 %v1613, 7
    %v1615 = vsub.s32 %v1381, %v1614
    %v1616 = vrot.slane %v1290, %v1615
    %v1617 = vsel %vm1386, %v1616, %v1612
    %v1618 = vlaneseq
    %v1619 = vshrl.u32 %v1618, 7
    %v1620 = vsub.s32 %v1388, %v1619
    %v1621 = vrot.slane %v1291, %v1620
    %v1622 = vsel %vm1393, %v1621, %v1617
    %v1623 = vlaneseq
    %v1624 = vshrl.u32 %v1623, 7
    %v1625 = vsub.s32 %v1369, %v1624
    %v1626 = vrot.slane %v1292, %v1625
    %v1627 = vlaneseq
    %v1628 = vshrl.u32 %v1627, 7
    %v1629 = vsub.s32 %v1374, %v1628
    %v1630 = vrot.slane %v1293, %v1629
    %v1631 = vsel %vm1379, %v1630, %v1626
    %v1632 = vlaneseq
    %v1633 = vshrl.u32 %v1632, 7
    %v1634 = vsub.s32 %v1381, %v1633
    %v1635 = vrot.slane %v1294, %v1634
    %v1636 = vsel %vm1386, %v1635, %v1631
    %v1637 = vlaneseq
    %v1638 = vshrl.u32 %v1637, 7
    %v1639 = vsub.s32 %v1388, %v1638
    %v1640 = vrot.slane %v1295, %v1639
    %v1641 = vsel %vm1393, %v1640, %v1636
    %v1642 = vlaneseq
    %v1643 = vshrl.u32 %v1642, 7
    %v1644 = vsub.s32 %v1369, %v1643
    %v1645 = vrot.slane %v1296, %v1644
    %v1646 = vlaneseq
    %v1647 = vshrl.u32 %v1646, 7
    %v1648 = vsub.s32 %v1374, %v1647
    %v1649 = vrot.slane %v1297, %v1648
    %v1650 = vsel %vm1379, %v1649, %v1645
    %v1651 = vlaneseq
    %v1652 = vshrl.u32 %v1651, 7
    %v1653 = vsub.s32 %v1381, %v1652
    %v1654 = vrot.slane %v1298, %v1653
    %v1655 = vsel %vm1386, %v1654, %v1650
    %v1656 = vlaneseq
    %v1657 = vshrl.u32 %v1656, 7
    %v1658 = vsub.s32 %v1388, %v1657
    %v1659 = vrot.slane %v1299, %v1658
    %v1660 = vsel %vm1393, %v1659, %v1655
    %v1661 = vlaneseq
    %v1662 = vshrl.u32 %v1661, 7
    %v1663 = vsub.s32 %v1369, %v1662
    %v1664 = vrot.slane %v1300, %v1663
    %v1665 = vlaneseq
    %v1666 = vshrl.u32 %v1665, 7
    %v1667 = vsub.s32 %v1374, %v1666
    %v1668 = vrot.slane %v1301, %v1667
    %v1669 = vsel %vm1379, %v1668, %v1664
    %v1670 = vlaneseq
    %v1671 = vshrl.u32 %v1670, 7
    %v1672 = vsub.s32 %v1381, %v1671
    %v1673 = vrot.slane %v1302, %v1672
    %v1674 = vsel %vm1386, %v1673, %v1669
    %v1675 = vlaneseq
    %v1676 = vshrl.u32 %v1675, 7
    %v1677 = vsub.s32 %v1388, %v1676
    %v1678 = vrot.slane %v1303, %v1677
    %v1679 = vsel %vm1393, %v1678, %v1674
    %vm1680 = vcmask 1041409
    %v1681 = vsel %vm1680, %v1413, %v1394
    %vm1682 = vcmask 1042434
    %v1683 = vsel %vm1682, %v1432, %v1681
    %vm1684 = vcmask 1043459
    %v1685 = vsel %vm1684, %v1451, %v1683
    %vm1686 = vcmask 1044484
    %v1687 = vsel %vm1686, %v1470, %v1685
    %vm1688 = vcmask 1045509
    %v1689 = vsel %vm1688, %v1489, %v1687
    %vm1690 = vcmask 1046534
    %v1691 = vsel %vm1690, %v1508, %v1689
    %vm1692 = vcmask 1047559
    %v1693 = vsel %vm1692, %v1527, %v1691
    %v1694 = vsel %vm1680, %v1565, %v1546
    %v1695 = vsel %vm1682, %v1584, %v1694
    %v1696 = vsel %vm1684, %v1603, %v1695
    %v1697 = vsel %vm1686, %v1622, %v1696
    %v1698 = vsel %vm1688, %v1641, %v1697
    %v1699 = vsel %vm1690, %v1660, %v1698
    %v1700 = vsel %vm1692, %v1679, %v1699
    %v1703 = vsel %vm255, %v1693, -inf
    %1704 = vmax.xlane.f32.xlu0 %v1703
    %v1705 = vpop.xlane.xlu0 %1704
    %v1706 = vsel %vm255, %v1700, -inf
    %1707 = vmax.xlane.f32.xlu0 %v1706
    %v1708 = vpop.xlane.xlu0 %1707
    %v1711 = vlaneseq
    %v1712 = vshrl.u32 %v1711, 7
    %v1713 = vsub.s32 0, %v1712
    %v1714 = vrot.slane %v1705, %v1713
    %v1715 = vlaneseq
    %v1716 = vshrl.u32 %v1715, 7
    %v1717 = vsub.s32 1, %v1716
    %v1718 = vrot.slane %v1705, %v1717
    %v1719 = vlaneseq
    %v1720 = vshrl.u32 %v1719, 7
    %v1721 = vsub.s32 2, %v1720
    %v1722 = vrot.slane %v1705, %v1721
    %v1723 = vlaneseq
    %v1724 = vshrl.u32 %v1723, 7
    %v1725 = vsub.s32 3, %v1724
    %v1726 = vrot.slane %v1705, %v1725
    %v1727 = vlaneseq
    %v1728 = vshrl.u32 %v1727, 7
    %v1729 = vsub.s32 4, %v1728
    %v1730 = vrot.slane %v1705, %v1729
    %v1731 = vlaneseq
    %v1732 = vshrl.u32 %v1731, 7
    %v1733 = vsub.s32 5, %v1732
    %v1734 = vrot.slane %v1705, %v1733
    %v1735 = vlaneseq
    %v1736 = vshrl.u32 %v1735, 7
    %v1737 = vsub.s32 6, %v1736
    %v1738 = vrot.slane %v1705, %v1737
    %v1739 = vlaneseq
    %v1740 = vshrl.u32 %v1739, 7
    %v1741 = vsub.s32 7, %v1740
    %v1742 = vrot.slane %v1705, %v1741
    %v1743 = vlaneseq
    %v1744 = vshrl.u32 %v1743, 7
    %v1745 = vsub.s32 0, %v1744
    %v1746 = vrot.slane %v1708, %v1745
    %v1747 = vlaneseq
    %v1748 = vshrl.u32 %v1747, 7
    %v1749 = vsub.s32 1, %v1748
    %v1750 = vrot.slane %v1708, %v1749
    %v1751 = vlaneseq
    %v1752 = vshrl.u32 %v1751, 7
    %v1753 = vsub.s32 2, %v1752
    %v1754 = vrot.slane %v1708, %v1753
    %v1755 = vlaneseq
    %v1756 = vshrl.u32 %v1755, 7
    %v1757 = vsub.s32 3, %v1756
    %v1758 = vrot.slane %v1708, %v1757
    %v1759 = vlaneseq
    %v1760 = vshrl.u32 %v1759, 7
    %v1761 = vsub.s32 4, %v1760
    %v1762 = vrot.slane %v1708, %v1761
    %v1763 = vlaneseq
    %v1764 = vshrl.u32 %v1763, 7
    %v1765 = vsub.s32 5, %v1764
    %v1766 = vrot.slane %v1708, %v1765
    %v1767 = vlaneseq
    %v1768 = vshrl.u32 %v1767, 7
    %v1769 = vsub.s32 6, %v1768
    %v1770 = vrot.slane %v1708, %v1769
    %v1771 = vlaneseq
    %v1772 = vshrl.u32 %v1771, 7
    %v1773 = vsub.s32 7, %v1772
    %v1774 = vrot.slane %v1708, %v1773
    %v1791 = vsub.f32 %v1240, %v1714
    %v1792 = vsub.f32 %v1241, %v1714
    %v1793 = vsub.f32 %v1242, %v1714
    %v1794 = vsub.f32 %v1243, %v1714
    %v1795 = vsub.f32 %v1244, %v1718
    %v1796 = vsub.f32 %v1245, %v1718
    %v1797 = vsub.f32 %v1246, %v1718
    %v1798 = vsub.f32 %v1247, %v1718
    %v1799 = vsub.f32 %v1248, %v1722
    %v1800 = vsub.f32 %v1249, %v1722
    %v1801 = vsub.f32 %v1250, %v1722
    %v1802 = vsub.f32 %v1251, %v1722
    %v1803 = vsub.f32 %v1252, %v1726
    %v1804 = vsub.f32 %v1253, %v1726
    %v1805 = vsub.f32 %v1254, %v1726
    %v1806 = vsub.f32 %v1255, %v1726
    %v1807 = vsub.f32 %v1256, %v1730
    %v1808 = vsub.f32 %v1257, %v1730
    %v1809 = vsub.f32 %v1258, %v1730
    %v1810 = vsub.f32 %v1259, %v1730
    %v1811 = vsub.f32 %v1260, %v1734
    %v1812 = vsub.f32 %v1261, %v1734
    %v1813 = vsub.f32 %v1262, %v1734
    %v1814 = vsub.f32 %v1263, %v1734
    %v1815 = vsub.f32 %v1264, %v1738
    %v1816 = vsub.f32 %v1265, %v1738
    %v1817 = vsub.f32 %v1266, %v1738
    %v1818 = vsub.f32 %v1267, %v1738
    %v1819 = vsub.f32 %v1268, %v1742
    %v1820 = vsub.f32 %v1269, %v1742
    %v1821 = vsub.f32 %v1270, %v1742
    %v1822 = vsub.f32 %v1271, %v1742
    %v1823 = vsub.f32 %v1272, %v1746
    %v1824 = vsub.f32 %v1273, %v1746
    %v1825 = vsub.f32 %v1274, %v1746
    %v1826 = vsub.f32 %v1275, %v1746
    %v1827 = vsub.f32 %v1276, %v1750
    %v1828 = vsub.f32 %v1277, %v1750
    %v1829 = vsub.f32 %v1278, %v1750
    %v1830 = vsub.f32 %v1279, %v1750
    %v1831 = vsub.f32 %v1280, %v1754
    %v1832 = vsub.f32 %v1281, %v1754
    %v1833 = vsub.f32 %v1282, %v1754
    %v1834 = vsub.f32 %v1283, %v1754
    %v1835 = vsub.f32 %v1284, %v1758
    %v1836 = vsub.f32 %v1285, %v1758
    %v1837 = vsub.f32 %v1286, %v1758
    %v1838 = vsub.f32 %v1287, %v1758
    %v1839 = vsub.f32 %v1288, %v1762
    %v1840 = vsub.f32 %v1289, %v1762
    %v1841 = vsub.f32 %v1290, %v1762
    %v1842 = vsub.f32 %v1291, %v1762
    %v1843 = vsub.f32 %v1292, %v1766
    %v1844 = vsub.f32 %v1293, %v1766
    %v1845 = vsub.f32 %v1294, %v1766
    %v1846 = vsub.f32 %v1295, %v1766
    %v1847 = vsub.f32 %v1296, %v1770
    %v1848 = vsub.f32 %v1297, %v1770
    %v1849 = vsub.f32 %v1298, %v1770
    %v1850 = vsub.f32 %v1299, %v1770
    %v1851 = vsub.f32 %v1300, %v1774
    %v1852 = vsub.f32 %v1301, %v1774
    %v1853 = vsub.f32 %v1302, %v1774
    %v1854 = vsub.f32 %v1303, %v1774
    %v1855 = vmul.f32 %v1791, 1.442695
    %v1856 = vpow.pop %v1855
    %v1857 = vmul.f32 %v1792, 1.442695
    %v1858 = vpow.pop %v1857
    %v1859 = vmul.f32 %v1793, 1.442695
    %v1860 = vpow.pop %v1859
    %v1861 = vmul.f32 %v1794, 1.442695
    %v1862 = vpow.pop %v1861
    %v1863 = vmul.f32 %v1795, 1.442695
    %v1864 = vpow.pop %v1863
    %v1865 = vmul.f32 %v1796, 1.442695
    %v1866 = vpow.pop %v1865
    %v1867 = vmul.f32 %v1797, 1.442695
    %v1868 = vpow.pop %v1867
    %v1869 = vmul.f32 %v1798, 1.442695
    %v1870 = vpow.pop %v1869
    %v1871 = vmul.f32 %v1799, 1.442695
    %v1872 = vpow.pop %v1871
    %v1873 = vmul.f32 %v1800, 1.442695
    %v1874 = vpow.pop %v1873
    %v1875 = vmul.f32 %v1801, 1.442695
    %v1876 = vpow.pop %v1875
    %v1877 = vmul.f32 %v1802, 1.442695
    %v1878 = vpow.pop %v1877
    %v1879 = vmul.f32 %v1803, 1.442695
    %v1880 = vpow.pop %v1879
    %v1881 = vmul.f32 %v1804, 1.442695
    %v1882 = vpow.pop %v1881
    %v1883 = vmul.f32 %v1805, 1.442695
    %v1884 = vpow.pop %v1883
    %v1885 = vmul.f32 %v1806, 1.442695
    %v1886 = vpow.pop %v1885
    %v1887 = vmul.f32 %v1807, 1.442695
    %v1888 = vpow.pop %v1887
    %v1889 = vmul.f32 %v1808, 1.442695
    %v1890 = vpow.pop %v1889
    %v1891 = vmul.f32 %v1809, 1.442695
    %v1892 = vpow.pop %v1891
    %v1893 = vmul.f32 %v1810, 1.442695
    %v1894 = vpow.pop %v1893
    %v1895 = vmul.f32 %v1811, 1.442695
    %v1896 = vpow.pop %v1895
    %v1897 = vmul.f32 %v1812, 1.442695
    %v1898 = vpow.pop %v1897
    %v1899 = vmul.f32 %v1813, 1.442695
    %v1900 = vpow.pop %v1899
    %v1901 = vmul.f32 %v1814, 1.442695
    %v1902 = vpow.pop %v1901
    %v1903 = vmul.f32 %v1815, 1.442695
    %v1904 = vpow.pop %v1903
    %v1905 = vmul.f32 %v1816, 1.442695
    %v1906 = vpow.pop %v1905
    %v1907 = vmul.f32 %v1817, 1.442695
    %v1908 = vpow.pop %v1907
    %v1909 = vmul.f32 %v1818, 1.442695
    %v1910 = vpow.pop %v1909
    %v1911 = vmul.f32 %v1819, 1.442695
    %v1912 = vpow.pop %v1911
    %v1913 = vmul.f32 %v1820, 1.442695
    %v1914 = vpow.pop %v1913
    %v1915 = vmul.f32 %v1821, 1.442695
    %v1916 = vpow.pop %v1915
    %v1917 = vmul.f32 %v1822, 1.442695
    %v1918 = vpow.pop %v1917
    %v1919 = vmul.f32 %v1823, 1.442695
    %v1920 = vpow.pop %v1919
    %v1921 = vmul.f32 %v1824, 1.442695
    %v1922 = vpow.pop %v1921
    %v1923 = vmul.f32 %v1825, 1.442695
    %v1924 = vpow.pop %v1923
    %v1925 = vmul.f32 %v1826, 1.442695
    %v1926 = vpow.pop %v1925
    %v1927 = vmul.f32 %v1827, 1.442695
    %v1928 = vpow.pop %v1927
    %v1929 = vmul.f32 %v1828, 1.442695
    %v1930 = vpow.pop %v1929
    %v1931 = vmul.f32 %v1829, 1.442695
    %v1932 = vpow.pop %v1931
    %v1933 = vmul.f32 %v1830, 1.442695
    %v1934 = vpow.pop %v1933
    %v1935 = vmul.f32 %v1831, 1.442695
    %v1936 = vpow.pop %v1935
    %v1937 = vmul.f32 %v1832, 1.442695
    %v1938 = vpow.pop %v1937
    %v1939 = vmul.f32 %v1833, 1.442695
    %v1940 = vpow.pop %v1939
    %v1941 = vmul.f32 %v1834, 1.442695
    %v1942 = vpow.pop %v1941
    %v1943 = vmul.f32 %v1835, 1.442695
    %v1944 = vpow.pop %v1943
    %v1945 = vmul.f32 %v1836, 1.442695
    %v1946 = vpow.pop %v1945
    %v1947 = vmul.f32 %v1837, 1.442695
    %v1948 = vpow.pop %v1947
    %v1949 = vmul.f32 %v1838, 1.442695
    %v1950 = vpow.pop %v1949
    %v1951 = vmul.f32 %v1839, 1.442695
    %v1952 = vpow.pop %v1951
    %v1953 = vmul.f32 %v1840, 1.442695
    %v1954 = vpow.pop %v1953
    %v1955 = vmul.f32 %v1841, 1.442695
    %v1956 = vpow.pop %v1955
    %v1957 = vmul.f32 %v1842, 1.442695
    %v1958 = vpow.pop %v1957
    %v1959 = vmul.f32 %v1843, 1.442695
    %v1960 = vpow.pop %v1959
    %v1961 = vmul.f32 %v1844, 1.442695
    %v1962 = vpow.pop %v1961
    %v1963 = vmul.f32 %v1845, 1.442695
    %v1964 = vpow.pop %v1963
    %v1965 = vmul.f32 %v1846, 1.442695
    %v1966 = vpow.pop %v1965
    %v1967 = vmul.f32 %v1847, 1.442695
    %v1968 = vpow.pop %v1967
    %v1969 = vmul.f32 %v1848, 1.442695
    %v1970 = vpow.pop %v1969
    %v1971 = vmul.f32 %v1849, 1.442695
    %v1972 = vpow.pop %v1971
    %v1973 = vmul.f32 %v1850, 1.442695
    %v1974 = vpow.pop %v1973
    %v1975 = vmul.f32 %v1851, 1.442695
    %v1976 = vpow.pop %v1975
    %v1977 = vmul.f32 %v1852, 1.442695
    %v1978 = vpow.pop %v1977
    %v1979 = vmul.f32 %v1853, 1.442695
    %v1980 = vpow.pop %v1979
    %v1981 = vmul.f32 %v1854, 1.442695
    %v1982 = vpow.pop %v1981
    %2047 = vset.pattern.permute.xlu0 0
    %2048 = vperm.xlu0 %2047, %v1856
    %v2049 = vpop.permute.xlu0 %2048
    %2050 = vset.pattern.permute.xlu0 0
    %2051 = vperm.xlu0 %2050, %v1858
    %v2052 = vpop.permute.xlu0 %2051
    %2053 = vset.pattern.permute.xlu0 0
    %2054 = vperm.xlu0 %2053, %v1860
    %v2055 = vpop.permute.xlu0 %2054
    %2056 = vset.pattern.permute.xlu0 0
    %2057 = vperm.xlu0 %2056, %v1862
    %v2058 = vpop.permute.xlu0 %2057
    %2059 = vset.pattern.permute.xlu0 0
    %2060 = vperm.xlu0 %2059, %v1864
    %v2061 = vpop.permute.xlu0 %2060
    %2062 = vset.pattern.permute.xlu0 0
    %2063 = vperm.xlu0 %2062, %v1866
    %v2064 = vpop.permute.xlu0 %2063
    %2065 = vset.pattern.permute.xlu0 0
    %2066 = vperm.xlu0 %2065, %v1868
    %v2067 = vpop.permute.xlu0 %2066
    %2068 = vset.pattern.permute.xlu0 0
    %2069 = vperm.xlu0 %2068, %v1870
    %v2070 = vpop.permute.xlu0 %2069
    %2071 = vset.pattern.permute.xlu0 0
    %2072 = vperm.xlu0 %2071, %v1872
    %v2073 = vpop.permute.xlu0 %2072
    %2074 = vset.pattern.permute.xlu0 0
    %2075 = vperm.xlu0 %2074, %v1874
    %v2076 = vpop.permute.xlu0 %2075
    %2077 = vset.pattern.permute.xlu0 0
    %2078 = vperm.xlu0 %2077, %v1876
    %v2079 = vpop.permute.xlu0 %2078
    %2080 = vset.pattern.permute.xlu0 0
    %2081 = vperm.xlu0 %2080, %v1878
    %v2082 = vpop.permute.xlu0 %2081
    %2083 = vset.pattern.permute.xlu0 0
    %2084 = vperm.xlu0 %2083, %v1880
    %v2085 = vpop.permute.xlu0 %2084
    %2086 = vset.pattern.permute.xlu0 0
    %2087 = vperm.xlu0 %2086, %v1882
    %v2088 = vpop.permute.xlu0 %2087
    %2089 = vset.pattern.permute.xlu0 0
    %2090 = vperm.xlu0 %2089, %v1884
    %v2091 = vpop.permute.xlu0 %2090
    %2092 = vset.pattern.permute.xlu0 0
    %2093 = vperm.xlu0 %2092, %v1886
    %v2094 = vpop.permute.xlu0 %2093
    %2095 = vset.pattern.permute.xlu0 0
    %2096 = vperm.xlu0 %2095, %v1888
    %v2097 = vpop.permute.xlu0 %2096
    %2098 = vset.pattern.permute.xlu0 0
    %2099 = vperm.xlu0 %2098, %v1890
    %v2100 = vpop.permute.xlu0 %2099
    %2101 = vset.pattern.permute.xlu0 0
    %2102 = vperm.xlu0 %2101, %v1892
    %v2103 = vpop.permute.xlu0 %2102
    %2104 = vset.pattern.permute.xlu0 0
    %2105 = vperm.xlu0 %2104, %v1894
    %v2106 = vpop.permute.xlu0 %2105
    %2107 = vset.pattern.permute.xlu0 0
    %2108 = vperm.xlu0 %2107, %v1896
    %v2109 = vpop.permute.xlu0 %2108
    %2110 = vset.pattern.permute.xlu0 0
    %2111 = vperm.xlu0 %2110, %v1898
    %v2112 = vpop.permute.xlu0 %2111
    %2113 = vset.pattern.permute.xlu0 0
    %2114 = vperm.xlu0 %2113, %v1900
    %v2115 = vpop.permute.xlu0 %2114
    %2116 = vset.pattern.permute.xlu0 0
    %2117 = vperm.xlu0 %2116, %v1902
    %v2118 = vpop.permute.xlu0 %2117
    %2119 = vset.pattern.permute.xlu0 0
    %2120 = vperm.xlu0 %2119, %v1904
    %v2121 = vpop.permute.xlu0 %2120
    %2122 = vset.pattern.permute.xlu0 0
    %2123 = vperm.xlu0 %2122, %v1906
    %v2124 = vpop.permute.xlu0 %2123
    %2125 = vset.pattern.permute.xlu0 0
    %2126 = vperm.xlu0 %2125, %v1908
    %v2127 = vpop.permute.xlu0 %2126
    %2128 = vset.pattern.permute.xlu0 0
    %2129 = vperm.xlu0 %2128, %v1910
    %v2130 = vpop.permute.xlu0 %2129
    %2131 = vset.pattern.permute.xlu0 0
    %2132 = vperm.xlu0 %2131, %v1912
    %v2133 = vpop.permute.xlu0 %2132
    %2134 = vset.pattern.permute.xlu0 0
    %2135 = vperm.xlu0 %2134, %v1914
    %v2136 = vpop.permute.xlu0 %2135
    %2137 = vset.pattern.permute.xlu0 0
    %2138 = vperm.xlu0 %2137, %v1916
    %v2139 = vpop.permute.xlu0 %2138
    %2140 = vset.pattern.permute.xlu0 0
    %2141 = vperm.xlu0 %2140, %v1918
    %v2142 = vpop.permute.xlu0 %2141
    %2143 = vset.pattern.permute.xlu0 0
    %2144 = vperm.xlu0 %2143, %v1920
    %v2145 = vpop.permute.xlu0 %2144
    %2146 = vset.pattern.permute.xlu0 0
    %2147 = vperm.xlu0 %2146, %v1922
    %v2148 = vpop.permute.xlu0 %2147
    %2149 = vset.pattern.permute.xlu0 0
    %2150 = vperm.xlu0 %2149, %v1924
    %v2151 = vpop.permute.xlu0 %2150
    %2152 = vset.pattern.permute.xlu0 0
    %2153 = vperm.xlu0 %2152, %v1926
    %v2154 = vpop.permute.xlu0 %2153
    %2155 = vset.pattern.permute.xlu0 0
    %2156 = vperm.xlu0 %2155, %v1928
    %v2157 = vpop.permute.xlu0 %2156
    %2158 = vset.pattern.permute.xlu0 0
    %2159 = vperm.xlu0 %2158, %v1930
    %v2160 = vpop.permute.xlu0 %2159
    %2161 = vset.pattern.permute.xlu0 0
    %2162 = vperm.xlu0 %2161, %v1932
    %v2163 = vpop.permute.xlu0 %2162
    %2164 = vset.pattern.permute.xlu0 0
    %2165 = vperm.xlu0 %2164, %v1934
    %v2166 = vpop.permute.xlu0 %2165
    %2167 = vset.pattern.permute.xlu0 0
    %2168 = vperm.xlu0 %2167, %v1936
    %v2169 = vpop.permute.xlu0 %2168
    %2170 = vset.pattern.permute.xlu0 0
    %2171 = vperm.xlu0 %2170, %v1938
    %v2172 = vpop.permute.xlu0 %2171
    %2173 = vset.pattern.permute.xlu0 0
    %2174 = vperm.xlu0 %2173, %v1940
    %v2175 = vpop.permute.xlu0 %2174
    %2176 = vset.pattern.permute.xlu0 0
    %2177 = vperm.xlu0 %2176, %v1942
    %v2178 = vpop.permute.xlu0 %2177
    %2179 = vset.pattern.permute.xlu0 0
    %2180 = vperm.xlu0 %2179, %v1944
    %v2181 = vpop.permute.xlu0 %2180
    %2182 = vset.pattern.permute.xlu0 0
    %2183 = vperm.xlu0 %2182, %v1946
    %v2184 = vpop.permute.xlu0 %2183
    %2185 = vset.pattern.permute.xlu0 0
    %2186 = vperm.xlu0 %2185, %v1948
    %v2187 = vpop.permute.xlu0 %2186
    %2188 = vset.pattern.permute.xlu0 0
    %2189 = vperm.xlu0 %2188, %v1950
    %v2190 = vpop.permute.xlu0 %2189
    %2191 = vset.pattern.permute.xlu0 0
    %2192 = vperm.xlu0 %2191, %v1952
    %v2193 = vpop.permute.xlu0 %2192
    %2194 = vset.pattern.permute.xlu0 0
    %2195 = vperm.xlu0 %2194, %v1954
    %v2196 = vpop.permute.xlu0 %2195
    %2197 = vset.pattern.permute.xlu0 0
    %2198 = vperm.xlu0 %2197, %v1956
    %v2199 = vpop.permute.xlu0 %2198
    %2200 = vset.pattern.permute.xlu0 0
    %2201 = vperm.xlu0 %2200, %v1958
    %v2202 = vpop.permute.xlu0 %2201
    %2203 = vset.pattern.permute.xlu0 0
    %2204 = vperm.xlu0 %2203, %v1960
    %v2205 = vpop.permute.xlu0 %2204
    %2206 = vset.pattern.permute.xlu0 0
    %2207 = vperm.xlu0 %2206, %v1962
    %v2208 = vpop.permute.xlu0 %2207
    %2209 = vset.pattern.permute.xlu0 0
    %2210 = vperm.xlu0 %2209, %v1964
    %v2211 = vpop.permute.xlu0 %2210
    %2212 = vset.pattern.permute.xlu0 0
    %2213 = vperm.xlu0 %2212, %v1966
    %v2214 = vpop.permute.xlu0 %2213
    %2215 = vset.pattern.permute.xlu0 0
    %2216 = vperm.xlu0 %2215, %v1968
    %v2217 = vpop.permute.xlu0 %2216
    %2218 = vset.pattern.permute.xlu0 0
    %2219 = vperm.xlu0 %2218, %v1970
    %v2220 = vpop.permute.xlu0 %2219
    %2221 = vset.pattern.permute.xlu0 0
    %2222 = vperm.xlu0 %2221, %v1972
    %v2223 = vpop.permute.xlu0 %2222
    %2224 = vset.pattern.permute.xlu0 0
    %2225 = vperm.xlu0 %2224, %v1974
    %v2226 = vpop.permute.xlu0 %2225
    %2227 = vset.pattern.permute.xlu0 0
    %2228 = vperm.xlu0 %2227, %v1976
    %v2229 = vpop.permute.xlu0 %2228
    %2230 = vset.pattern.permute.xlu0 0
    %2231 = vperm.xlu0 %2230, %v1978
    %v2232 = vpop.permute.xlu0 %2231
    %2233 = vset.pattern.permute.xlu0 0
    %2234 = vperm.xlu0 %2233, %v1980
    %v2235 = vpop.permute.xlu0 %2234
    %2236 = vset.pattern.permute.xlu0 0
    %2237 = vperm.xlu0 %2236, %v1982
    %v2238 = vpop.permute.xlu0 %2237
    %v2239 = vlaneseq
    %v2240 = vshrl.u32 %v2239, 7
    %v2241 = vsub.s32 %v1369, %v2240
    %v2242 = vrot.slane %v2049, %v2241
    %v2243 = vlaneseq
    %v2244 = vshrl.u32 %v2243, 7
    %v2245 = vsub.s32 %v1374, %v2244
    %v2246 = vrot.slane %v2052, %v2245
    %v2247 = vsel %vm1379, %v2246, %v2242
    %v2248 = vlaneseq
    %v2249 = vshrl.u32 %v2248, 7
    %v2250 = vsub.s32 %v1381, %v2249
    %v2251 = vrot.slane %v2055, %v2250
    %v2252 = vsel %vm1386, %v2251, %v2247
    %v2253 = vlaneseq
    %v2254 = vshrl.u32 %v2253, 7
    %v2255 = vsub.s32 %v1388, %v2254
    %v2256 = vrot.slane %v2058, %v2255
    %v2257 = vsel %vm1393, %v2256, %v2252
    %v2258 = vlaneseq
    %v2259 = vshrl.u32 %v2258, 7
    %v2260 = vsub.s32 %v1369, %v2259
    %v2261 = vrot.slane %v2061, %v2260
    %v2262 = vlaneseq
    %v2263 = vshrl.u32 %v2262, 7
    %v2264 = vsub.s32 %v1374, %v2263
    %v2265 = vrot.slane %v2064, %v2264
    %v2266 = vsel %vm1379, %v2265, %v2261
    %v2267 = vlaneseq
    %v2268 = vshrl.u32 %v2267, 7
    %v2269 = vsub.s32 %v1381, %v2268
    %v2270 = vrot.slane %v2067, %v2269
    %v2271 = vsel %vm1386, %v2270, %v2266
    %v2272 = vlaneseq
    %v2273 = vshrl.u32 %v2272, 7
    %v2274 = vsub.s32 %v1388, %v2273
    %v2275 = vrot.slane %v2070, %v2274
    %v2276 = vsel %vm1393, %v2275, %v2271
    %v2277 = vlaneseq
    %v2278 = vshrl.u32 %v2277, 7
    %v2279 = vsub.s32 %v1369, %v2278
    %v2280 = vrot.slane %v2073, %v2279
    %v2281 = vlaneseq
    %v2282 = vshrl.u32 %v2281, 7
    %v2283 = vsub.s32 %v1374, %v2282
    %v2284 = vrot.slane %v2076, %v2283
    %v2285 = vsel %vm1379, %v2284, %v2280
    %v2286 = vlaneseq
    %v2287 = vshrl.u32 %v2286, 7
    %v2288 = vsub.s32 %v1381, %v2287
    %v2289 = vrot.slane %v2079, %v2288
    %v2290 = vsel %vm1386, %v2289, %v2285
    %v2291 = vlaneseq
    %v2292 = vshrl.u32 %v2291, 7
    %v2293 = vsub.s32 %v1388, %v2292
    %v2294 = vrot.slane %v2082, %v2293
    %v2295 = vsel %vm1393, %v2294, %v2290
    %v2296 = vlaneseq
    %v2297 = vshrl.u32 %v2296, 7
    %v2298 = vsub.s32 %v1369, %v2297
    %v2299 = vrot.slane %v2085, %v2298
    %v2300 = vlaneseq
    %v2301 = vshrl.u32 %v2300, 7
    %v2302 = vsub.s32 %v1374, %v2301
    %v2303 = vrot.slane %v2088, %v2302
    %v2304 = vsel %vm1379, %v2303, %v2299
    %v2305 = vlaneseq
    %v2306 = vshrl.u32 %v2305, 7
    %v2307 = vsub.s32 %v1381, %v2306
    %v2308 = vrot.slane %v2091, %v2307
    %v2309 = vsel %vm1386, %v2308, %v2304
    %v2310 = vlaneseq
    %v2311 = vshrl.u32 %v2310, 7
    %v2312 = vsub.s32 %v1388, %v2311
    %v2313 = vrot.slane %v2094, %v2312
    %v2314 = vsel %vm1393, %v2313, %v2309
    %v2315 = vlaneseq
    %v2316 = vshrl.u32 %v2315, 7
    %v2317 = vsub.s32 %v1369, %v2316
    %v2318 = vrot.slane %v2097, %v2317
    %v2319 = vlaneseq
    %v2320 = vshrl.u32 %v2319, 7
    %v2321 = vsub.s32 %v1374, %v2320
    %v2322 = vrot.slane %v2100, %v2321
    %v2323 = vsel %vm1379, %v2322, %v2318
    %v2324 = vlaneseq
    %v2325 = vshrl.u32 %v2324, 7
    %v2326 = vsub.s32 %v1381, %v2325
    %v2327 = vrot.slane %v2103, %v2326
    %v2328 = vsel %vm1386, %v2327, %v2323
    %v2329 = vlaneseq
    %v2330 = vshrl.u32 %v2329, 7
    %v2331 = vsub.s32 %v1388, %v2330
    %v2332 = vrot.slane %v2106, %v2331
    %v2333 = vsel %vm1393, %v2332, %v2328
    %v2334 = vlaneseq
    %v2335 = vshrl.u32 %v2334, 7
    %v2336 = vsub.s32 %v1369, %v2335
    %v2337 = vrot.slane %v2109, %v2336
    %v2338 = vlaneseq
    %v2339 = vshrl.u32 %v2338, 7
    %v2340 = vsub.s32 %v1374, %v2339
    %v2341 = vrot.slane %v2112, %v2340
    %v2342 = vsel %vm1379, %v2341, %v2337
    %v2343 = vlaneseq
    %v2344 = vshrl.u32 %v2343, 7
    %v2345 = vsub.s32 %v1381, %v2344
    %v2346 = vrot.slane %v2115, %v2345
    %v2347 = vsel %vm1386, %v2346, %v2342
    %v2348 = vlaneseq
    %v2349 = vshrl.u32 %v2348, 7
    %v2350 = vsub.s32 %v1388, %v2349
    %v2351 = vrot.slane %v2118, %v2350
    %v2352 = vsel %vm1393, %v2351, %v2347
    %v2353 = vlaneseq
    %v2354 = vshrl.u32 %v2353, 7
    %v2355 = vsub.s32 %v1369, %v2354
    %v2356 = vrot.slane %v2121, %v2355
    %v2357 = vlaneseq
    %v2358 = vshrl.u32 %v2357, 7
    %v2359 = vsub.s32 %v1374, %v2358
    %v2360 = vrot.slane %v2124, %v2359
    %v2361 = vsel %vm1379, %v2360, %v2356
    %v2362 = vlaneseq
    %v2363 = vshrl.u32 %v2362, 7
    %v2364 = vsub.s32 %v1381, %v2363
    %v2365 = vrot.slane %v2127, %v2364
    %v2366 = vsel %vm1386, %v2365, %v2361
    %v2367 = vlaneseq
    %v2368 = vshrl.u32 %v2367, 7
    %v2369 = vsub.s32 %v1388, %v2368
    %v2370 = vrot.slane %v2130, %v2369
    %v2371 = vsel %vm1393, %v2370, %v2366
    %v2372 = vlaneseq
    %v2373 = vshrl.u32 %v2372, 7
    %v2374 = vsub.s32 %v1369, %v2373
    %v2375 = vrot.slane %v2133, %v2374
    %v2376 = vlaneseq
    %v2377 = vshrl.u32 %v2376, 7
    %v2378 = vsub.s32 %v1374, %v2377
    %v2379 = vrot.slane %v2136, %v2378
    %v2380 = vsel %vm1379, %v2379, %v2375
    %v2381 = vlaneseq
    %v2382 = vshrl.u32 %v2381, 7
    %v2383 = vsub.s32 %v1381, %v2382
    %v2384 = vrot.slane %v2139, %v2383
    %v2385 = vsel %vm1386, %v2384, %v2380
    %v2386 = vlaneseq
    %v2387 = vshrl.u32 %v2386, 7
    %v2388 = vsub.s32 %v1388, %v2387
    %v2389 = vrot.slane %v2142, %v2388
    %v2390 = vsel %vm1393, %v2389, %v2385
    %v2391 = vlaneseq
    %v2392 = vshrl.u32 %v2391, 7
    %v2393 = vsub.s32 %v1369, %v2392
    %v2394 = vrot.slane %v2145, %v2393
    %v2395 = vlaneseq
    %v2396 = vshrl.u32 %v2395, 7
    %v2397 = vsub.s32 %v1374, %v2396
    %v2398 = vrot.slane %v2148, %v2397
    %v2399 = vsel %vm1379, %v2398, %v2394
    %v2400 = vlaneseq
    %v2401 = vshrl.u32 %v2400, 7
    %v2402 = vsub.s32 %v1381, %v2401
    %v2403 = vrot.slane %v2151, %v2402
    %v2404 = vsel %vm1386, %v2403, %v2399
    %v2405 = vlaneseq
    %v2406 = vshrl.u32 %v2405, 7
    %v2407 = vsub.s32 %v1388, %v2406
    %v2408 = vrot.slane %v2154, %v2407
    %v2409 = vsel %vm1393, %v2408, %v2404
    %v2410 = vlaneseq
    %v2411 = vshrl.u32 %v2410, 7
    %v2412 = vsub.s32 %v1369, %v2411
    %v2413 = vrot.slane %v2157, %v2412
    %v2414 = vlaneseq
    %v2415 = vshrl.u32 %v2414, 7
    %v2416 = vsub.s32 %v1374, %v2415
    %v2417 = vrot.slane %v2160, %v2416
    %v2418 = vsel %vm1379, %v2417, %v2413
    %v2419 = vlaneseq
    %v2420 = vshrl.u32 %v2419, 7
    %v2421 = vsub.s32 %v1381, %v2420
    %v2422 = vrot.slane %v2163, %v2421
    %v2423 = vsel %vm1386, %v2422, %v2418
    %v2424 = vlaneseq
    %v2425 = vshrl.u32 %v2424, 7
    %v2426 = vsub.s32 %v1388, %v2425
    %v2427 = vrot.slane %v2166, %v2426
    %v2428 = vsel %vm1393, %v2427, %v2423
    %v2429 = vlaneseq
    %v2430 = vshrl.u32 %v2429, 7
    %v2431 = vsub.s32 %v1369, %v2430
    %v2432 = vrot.slane %v2169, %v2431
    %v2433 = vlaneseq
    %v2434 = vshrl.u32 %v2433, 7
    %v2435 = vsub.s32 %v1374, %v2434
    %v2436 = vrot.slane %v2172, %v2435
    %v2437 = vsel %vm1379, %v2436, %v2432
    %v2438 = vlaneseq
    %v2439 = vshrl.u32 %v2438, 7
    %v2440 = vsub.s32 %v1381, %v2439
    %v2441 = vrot.slane %v2175, %v2440
    %v2442 = vsel %vm1386, %v2441, %v2437
    %v2443 = vlaneseq
    %v2444 = vshrl.u32 %v2443, 7
    %v2445 = vsub.s32 %v1388, %v2444
    %v2446 = vrot.slane %v2178, %v2445
    %v2447 = vsel %vm1393, %v2446, %v2442
    %v2448 = vlaneseq
    %v2449 = vshrl.u32 %v2448, 7
    %v2450 = vsub.s32 %v1369, %v2449
    %v2451 = vrot.slane %v2181, %v2450
    %v2452 = vlaneseq
    %v2453 = vshrl.u32 %v2452, 7
    %v2454 = vsub.s32 %v1374, %v2453
    %v2455 = vrot.slane %v2184, %v2454
    %v2456 = vsel %vm1379, %v2455, %v2451
    %v2457 = vlaneseq
    %v2458 = vshrl.u32 %v2457, 7
    %v2459 = vsub.s32 %v1381, %v2458
    %v2460 = vrot.slane %v2187, %v2459
    %v2461 = vsel %vm1386, %v2460, %v2456
    %v2462 = vlaneseq
    %v2463 = vshrl.u32 %v2462, 7
    %v2464 = vsub.s32 %v1388, %v2463
    %v2465 = vrot.slane %v2190, %v2464
    %v2466 = vsel %vm1393, %v2465, %v2461
    %v2467 = vlaneseq
    %v2468 = vshrl.u32 %v2467, 7
    %v2469 = vsub.s32 %v1369, %v2468
    %v2470 = vrot.slane %v2193, %v2469
    %v2471 = vlaneseq
    %v2472 = vshrl.u32 %v2471, 7
    %v2473 = vsub.s32 %v1374, %v2472
    %v2474 = vrot.slane %v2196, %v2473
    %v2475 = vsel %vm1379, %v2474, %v2470
    %v2476 = vlaneseq
    %v2477 = vshrl.u32 %v2476, 7
    %v2478 = vsub.s32 %v1381, %v2477
    %v2479 = vrot.slane %v2199, %v2478
    %v2480 = vsel %vm1386, %v2479, %v2475
    %v2481 = vlaneseq
    %v2482 = vshrl.u32 %v2481, 7
    %v2483 = vsub.s32 %v1388, %v2482
    %v2484 = vrot.slane %v2202, %v2483
    %v2485 = vsel %vm1393, %v2484, %v2480
    %v2486 = vlaneseq
    %v2487 = vshrl.u32 %v2486, 7
    %v2488 = vsub.s32 %v1369, %v2487
    %v2489 = vrot.slane %v2205, %v2488
    %v2490 = vlaneseq
    %v2491 = vshrl.u32 %v2490, 7
    %v2492 = vsub.s32 %v1374, %v2491
    %v2493 = vrot.slane %v2208, %v2492
    %v2494 = vsel %vm1379, %v2493, %v2489
    %v2495 = vlaneseq
    %v2496 = vshrl.u32 %v2495, 7
    %v2497 = vsub.s32 %v1381, %v2496
    %v2498 = vrot.slane %v2211, %v2497
    %v2499 = vsel %vm1386, %v2498, %v2494
    %v2500 = vlaneseq
    %v2501 = vshrl.u32 %v2500, 7
    %v2502 = vsub.s32 %v1388, %v2501
    %v2503 = vrot.slane %v2214, %v2502
    %v2504 = vsel %vm1393, %v2503, %v2499
    %v2505 = vlaneseq
    %v2506 = vshrl.u32 %v2505, 7
    %v2507 = vsub.s32 %v1369, %v2506
    %v2508 = vrot.slane %v2217, %v2507
    %v2509 = vlaneseq
    %v2510 = vshrl.u32 %v2509, 7
    %v2511 = vsub.s32 %v1374, %v2510
    %v2512 = vrot.slane %v2220, %v2511
    %v2513 = vsel %vm1379, %v2512, %v2508
    %v2514 = vlaneseq
    %v2515 = vshrl.u32 %v2514, 7
    %v2516 = vsub.s32 %v1381, %v2515
    %v2517 = vrot.slane %v2223, %v2516
    %v2518 = vsel %vm1386, %v2517, %v2513
    %v2519 = vlaneseq
    %v2520 = vshrl.u32 %v2519, 7
    %v2521 = vsub.s32 %v1388, %v2520
    %v2522 = vrot.slane %v2226, %v2521
    %v2523 = vsel %vm1393, %v2522, %v2518
    %v2524 = vlaneseq
    %v2525 = vshrl.u32 %v2524, 7
    %v2526 = vsub.s32 %v1369, %v2525
    %v2527 = vrot.slane %v2229, %v2526
    %v2528 = vlaneseq
    %v2529 = vshrl.u32 %v2528, 7
    %v2530 = vsub.s32 %v1374, %v2529
    %v2531 = vrot.slane %v2232, %v2530
    %v2532 = vsel %vm1379, %v2531, %v2527
    %v2533 = vlaneseq
    %v2534 = vshrl.u32 %v2533, 7
    %v2535 = vsub.s32 %v1381, %v2534
    %v2536 = vrot.slane %v2235, %v2535
    %v2537 = vsel %vm1386, %v2536, %v2532
    %v2538 = vlaneseq
    %v2539 = vshrl.u32 %v2538, 7
    %v2540 = vsub.s32 %v1388, %v2539
    %v2541 = vrot.slane %v2238, %v2540
    %v2542 = vsel %vm1393, %v2541, %v2537
    %v2543 = vsel %vm1680, %v2276, %v2257
    %v2544 = vsel %vm1682, %v2295, %v2543
    %v2545 = vsel %vm1684, %v2314, %v2544
    %v2546 = vsel %vm1686, %v2333, %v2545
    %v2547 = vsel %vm1688, %v2352, %v2546
    %v2548 = vsel %vm1690, %v2371, %v2547
    %v2549 = vsel %vm1692, %v2390, %v2548
    %v2550 = vsel %vm1680, %v2428, %v2409
    %v2551 = vsel %vm1682, %v2447, %v2550
    %v2552 = vsel %vm1684, %v2466, %v2551
    %v2553 = vsel %vm1686, %v2485, %v2552
    %v2554 = vsel %vm1688, %v2504, %v2553
    %v2555 = vsel %vm1690, %v2523, %v2554
    %v2556 = vsel %vm1692, %v2542, %v2555
    %v2559 = vsel %vm255, %v2549, 0.0
    %2560 = vadd.xlane.f32.xlu0 %v2559
    %v2561 = vpop.xlane.xlu0 %2560
    %v2562 = vsel %vm255, %v2556, 0.0
    %2563 = vadd.xlane.f32.xlu0 %v2562
    %v2564 = vpop.xlane.xlu0 %2563
    %v2567 = vlaneseq
    %v2568 = vshrl.u32 %v2567, 7
    %v2569 = vsub.s32 0, %v2568
    %v2570 = vrot.slane %v2561, %v2569
    %v2571 = vlaneseq
    %v2572 = vshrl.u32 %v2571, 7
    %v2573 = vsub.s32 1, %v2572
    %v2574 = vrot.slane %v2561, %v2573
    %v2575 = vlaneseq
    %v2576 = vshrl.u32 %v2575, 7
    %v2577 = vsub.s32 2, %v2576
    %v2578 = vrot.slane %v2561, %v2577
    %v2579 = vlaneseq
    %v2580 = vshrl.u32 %v2579, 7
    %v2581 = vsub.s32 3, %v2580
    %v2582 = vrot.slane %v2561, %v2581
    %v2583 = vlaneseq
    %v2584 = vshrl.u32 %v2583, 7
    %v2585 = vsub.s32 4, %v2584
    %v2586 = vrot.slane %v2561, %v2585
    %v2587 = vlaneseq
    %v2588 = vshrl.u32 %v2587, 7
    %v2589 = vsub.s32 5, %v2588
    %v2590 = vrot.slane %v2561, %v2589
    %v2591 = vlaneseq
    %v2592 = vshrl.u32 %v2591, 7
    %v2593 = vsub.s32 6, %v2592
    %v2594 = vrot.slane %v2561, %v2593
    %v2595 = vlaneseq
    %v2596 = vshrl.u32 %v2595, 7
    %v2597 = vsub.s32 7, %v2596
    %v2598 = vrot.slane %v2561, %v2597
    %v2599 = vlaneseq
    %v2600 = vshrl.u32 %v2599, 7
    %v2601 = vsub.s32 0, %v2600
    %v2602 = vrot.slane %v2564, %v2601
    %v2603 = vlaneseq
    %v2604 = vshrl.u32 %v2603, 7
    %v2605 = vsub.s32 1, %v2604
    %v2606 = vrot.slane %v2564, %v2605
    %v2607 = vlaneseq
    %v2608 = vshrl.u32 %v2607, 7
    %v2609 = vsub.s32 2, %v2608
    %v2610 = vrot.slane %v2564, %v2609
    %v2611 = vlaneseq
    %v2612 = vshrl.u32 %v2611, 7
    %v2613 = vsub.s32 3, %v2612
    %v2614 = vrot.slane %v2564, %v2613
    %v2615 = vlaneseq
    %v2616 = vshrl.u32 %v2615, 7
    %v2617 = vsub.s32 4, %v2616
    %v2618 = vrot.slane %v2564, %v2617
    %v2619 = vlaneseq
    %v2620 = vshrl.u32 %v2619, 7
    %v2621 = vsub.s32 5, %v2620
    %v2622 = vrot.slane %v2564, %v2621
    %v2623 = vlaneseq
    %v2624 = vshrl.u32 %v2623, 7
    %v2625 = vsub.s32 6, %v2624
    %v2626 = vrot.slane %v2564, %v2625
    %v2627 = vlaneseq
    %v2628 = vshrl.u32 %v2627, 7
    %v2629 = vsub.s32 7, %v2628
    %v2630 = vrot.slane %v2564, %v2629
    %v2647 = vrcp.pop %v2570
    %v2648 = vmul.f32 %v1856, %v2647
    %v2649 = vmul.f32 %v1858, %v2647
    %v2650 = vmul.f32 %v1860, %v2647
    %v2651 = vmul.f32 %v1862, %v2647
    %v2652 = vrcp.pop %v2574
    %v2653 = vmul.f32 %v1864, %v2652
    %v2654 = vmul.f32 %v1866, %v2652
    %v2655 = vmul.f32 %v1868, %v2652
    %v2656 = vmul.f32 %v1870, %v2652
    %v2657 = vrcp.pop %v2578
    %v2658 = vmul.f32 %v1872, %v2657
    %v2659 = vmul.f32 %v1874, %v2657
    %v2660 = vmul.f32 %v1876, %v2657
    %v2661 = vmul.f32 %v1878, %v2657
    %v2662 = vrcp.pop %v2582
    %v2663 = vmul.f32 %v1880, %v2662
    %v2664 = vmul.f32 %v1882, %v2662
    %v2665 = vmul.f32 %v1884, %v2662
    %v2666 = vmul.f32 %v1886, %v2662
    %v2667 = vrcp.pop %v2586
    %v2668 = vmul.f32 %v1888, %v2667
    %v2669 = vmul.f32 %v1890, %v2667
    %v2670 = vmul.f32 %v1892, %v2667
    %v2671 = vmul.f32 %v1894, %v2667
    %v2672 = vrcp.pop %v2590
    %v2673 = vmul.f32 %v1896, %v2672
    %v2674 = vmul.f32 %v1898, %v2672
    %v2675 = vmul.f32 %v1900, %v2672
    %v2676 = vmul.f32 %v1902, %v2672
    %v2677 = vrcp.pop %v2594
    %v2678 = vmul.f32 %v1904, %v2677
    %v2679 = vmul.f32 %v1906, %v2677
    %v2680 = vmul.f32 %v1908, %v2677
    %v2681 = vmul.f32 %v1910, %v2677
    %v2682 = vrcp.pop %v2598
    %v2683 = vmul.f32 %v1912, %v2682
    %v2684 = vmul.f32 %v1914, %v2682
    %v2685 = vmul.f32 %v1916, %v2682
    %v2686 = vmul.f32 %v1918, %v2682
    %v2687 = vrcp.pop %v2602
    %v2688 = vmul.f32 %v1920, %v2687
    %v2689 = vmul.f32 %v1922, %v2687
    %v2690 = vmul.f32 %v1924, %v2687
    %v2691 = vmul.f32 %v1926, %v2687
    %v2692 = vrcp.pop %v2606
    %v2693 = vmul.f32 %v1928, %v2692
    %v2694 = vmul.f32 %v1930, %v2692
    %v2695 = vmul.f32 %v1932, %v2692
    %v2696 = vmul.f32 %v1934, %v2692
    %v2697 = vrcp.pop %v2610
    %v2698 = vmul.f32 %v1936, %v2697
    %v2699 = vmul.f32 %v1938, %v2697
    %v2700 = vmul.f32 %v1940, %v2697
    %v2701 = vmul.f32 %v1942, %v2697
    %v2702 = vrcp.pop %v2614
    %v2703 = vmul.f32 %v1944, %v2702
    %v2704 = vmul.f32 %v1946, %v2702
    %v2705 = vmul.f32 %v1948, %v2702
    %v2706 = vmul.f32 %v1950, %v2702
    %v2707 = vrcp.pop %v2618
    %v2708 = vmul.f32 %v1952, %v2707
    %v2709 = vmul.f32 %v1954, %v2707
    %v2710 = vmul.f32 %v1956, %v2707
    %v2711 = vmul.f32 %v1958, %v2707
    %v2712 = vrcp.pop %v2622
    %v2713 = vmul.f32 %v1960, %v2712
    %v2714 = vmul.f32 %v1962, %v2712
    %v2715 = vmul.f32 %v1964, %v2712
    %v2716 = vmul.f32 %v1966, %v2712
    %v2717 = vrcp.pop %v2626
    %v2718 = vmul.f32 %v1968, %v2717
    %v2719 = vmul.f32 %v1970, %v2717
    %v2720 = vmul.f32 %v1972, %v2717
    %v2721 = vmul.f32 %v1974, %v2717
    %v2722 = vrcp.pop %v2630
    %v2723 = vmul.f32 %v1976, %v2722
    %v2724 = vmul.f32 %v1978, %v2722
    %v2725 = vmul.f32 %v1980, %v2722
    %v2726 = vmul.f32 %v1982, %v2722
    %2728 = vset.pattern.permute.xlu0 0
    %2729 = vperm.xlu0 %2728, %v2648
    %v2730 = vpop.permute.xlu0 %2729
    %2733 = vset.pattern.permute.xlu0 0
    %2734 = vperm.xlu0 %2733, %v2649
    %v2735 = vpop.permute.xlu0 %2734
    %2738 = vset.pattern.permute.xlu0 0
    %2739 = vperm.xlu0 %2738, %v2650
    %v2740 = vpop.permute.xlu0 %2739
    %2743 = vset.pattern.permute.xlu0 0
    %2744 = vperm.xlu0 %2743, %v2651
    %v2745 = vpop.permute.xlu0 %2744
    %2748 = vset.pattern.permute.xlu0 0
    %2749 = vperm.xlu0 %2748, %v2653
    %v2750 = vpop.permute.xlu0 %2749
    %2753 = vset.pattern.permute.xlu0 0
    %2754 = vperm.xlu0 %2753, %v2654
    %v2755 = vpop.permute.xlu0 %2754
    %2758 = vset.pattern.permute.xlu0 0
    %2759 = vperm.xlu0 %2758, %v2655
    %v2760 = vpop.permute.xlu0 %2759
    %2763 = vset.pattern.permute.xlu0 0
    %2764 = vperm.xlu0 %2763, %v2656
    %v2765 = vpop.permute.xlu0 %2764
    %2768 = vset.pattern.permute.xlu0 0
    %2769 = vperm.xlu0 %2768, %v2658
    %v2770 = vpop.permute.xlu0 %2769
    %2773 = vset.pattern.permute.xlu0 0
    %2774 = vperm.xlu0 %2773, %v2659
    %v2775 = vpop.permute.xlu0 %2774
    %2778 = vset.pattern.permute.xlu0 0
    %2779 = vperm.xlu0 %2778, %v2660
    %v2780 = vpop.permute.xlu0 %2779
    %2783 = vset.pattern.permute.xlu0 0
    %2784 = vperm.xlu0 %2783, %v2661
    %v2785 = vpop.permute.xlu0 %2784
    %2788 = vset.pattern.permute.xlu0 0
    %2789 = vperm.xlu0 %2788, %v2663
    %v2790 = vpop.permute.xlu0 %2789
    %2793 = vset.pattern.permute.xlu0 0
    %2794 = vperm.xlu0 %2793, %v2664
    %v2795 = vpop.permute.xlu0 %2794
    %2798 = vset.pattern.permute.xlu0 0
    %2799 = vperm.xlu0 %2798, %v2665
    %v2800 = vpop.permute.xlu0 %2799
    %2803 = vset.pattern.permute.xlu0 0
    %2804 = vperm.xlu0 %2803, %v2666
    %v2805 = vpop.permute.xlu0 %2804
    %2808 = vset.pattern.permute.xlu0 0
    %2809 = vperm.xlu0 %2808, %v2668
    %v2810 = vpop.permute.xlu0 %2809
    %2813 = vset.pattern.permute.xlu0 0
    %2814 = vperm.xlu0 %2813, %v2669
    %v2815 = vpop.permute.xlu0 %2814
    %2818 = vset.pattern.permute.xlu0 0
    %2819 = vperm.xlu0 %2818, %v2670
    %v2820 = vpop.permute.xlu0 %2819
    %2823 = vset.pattern.permute.xlu0 0
    %2824 = vperm.xlu0 %2823, %v2671
    %v2825 = vpop.permute.xlu0 %2824
    %2828 = vset.pattern.permute.xlu0 0
    %2829 = vperm.xlu0 %2828, %v2673
    %v2830 = vpop.permute.xlu0 %2829
    %2833 = vset.pattern.permute.xlu0 0
    %2834 = vperm.xlu0 %2833, %v2674
    %v2835 = vpop.permute.xlu0 %2834
    %2838 = vset.pattern.permute.xlu0 0
    %2839 = vperm.xlu0 %2838, %v2675
    %v2840 = vpop.permute.xlu0 %2839
    %2843 = vset.pattern.permute.xlu0 0
    %2844 = vperm.xlu0 %2843, %v2676
    %v2845 = vpop.permute.xlu0 %2844
    %2848 = vset.pattern.permute.xlu0 0
    %2849 = vperm.xlu0 %2848, %v2678
    %v2850 = vpop.permute.xlu0 %2849
    %2853 = vset.pattern.permute.xlu0 0
    %2854 = vperm.xlu0 %2853, %v2679
    %v2855 = vpop.permute.xlu0 %2854
    %2858 = vset.pattern.permute.xlu0 0
    %2859 = vperm.xlu0 %2858, %v2680
    %v2860 = vpop.permute.xlu0 %2859
    %2863 = vset.pattern.permute.xlu0 0
    %2864 = vperm.xlu0 %2863, %v2681
    %v2865 = vpop.permute.xlu0 %2864
    %2868 = vset.pattern.permute.xlu0 0
    %2869 = vperm.xlu0 %2868, %v2683
    %v2870 = vpop.permute.xlu0 %2869
    %2873 = vset.pattern.permute.xlu0 0
    %2874 = vperm.xlu0 %2873, %v2684
    %v2875 = vpop.permute.xlu0 %2874
    %2878 = vset.pattern.permute.xlu0 0
    %2879 = vperm.xlu0 %2878, %v2685
    %v2880 = vpop.permute.xlu0 %2879
    %2883 = vset.pattern.permute.xlu0 0
    %2884 = vperm.xlu0 %2883, %v2686
    %v2885 = vpop.permute.xlu0 %2884
    %2888 = vset.pattern.permute.xlu0 0
    %2889 = vperm.xlu0 %2888, %v2688
    %v2890 = vpop.permute.xlu0 %2889
    %2893 = vset.pattern.permute.xlu0 0
    %2894 = vperm.xlu0 %2893, %v2689
    %v2895 = vpop.permute.xlu0 %2894
    %2898 = vset.pattern.permute.xlu0 0
    %2899 = vperm.xlu0 %2898, %v2690
    %v2900 = vpop.permute.xlu0 %2899
    %2903 = vset.pattern.permute.xlu0 0
    %2904 = vperm.xlu0 %2903, %v2691
    %v2905 = vpop.permute.xlu0 %2904
    %2908 = vset.pattern.permute.xlu0 0
    %2909 = vperm.xlu0 %2908, %v2693
    %v2910 = vpop.permute.xlu0 %2909
    %2913 = vset.pattern.permute.xlu0 0
    %2914 = vperm.xlu0 %2913, %v2694
    %v2915 = vpop.permute.xlu0 %2914
    %2918 = vset.pattern.permute.xlu0 0
    %2919 = vperm.xlu0 %2918, %v2695
    %v2920 = vpop.permute.xlu0 %2919
    %2923 = vset.pattern.permute.xlu0 0
    %2924 = vperm.xlu0 %2923, %v2696
    %v2925 = vpop.permute.xlu0 %2924
    %2928 = vset.pattern.permute.xlu0 0
    %2929 = vperm.xlu0 %2928, %v2698
    %v2930 = vpop.permute.xlu0 %2929
    %2933 = vset.pattern.permute.xlu0 0
    %2934 = vperm.xlu0 %2933, %v2699
    %v2935 = vpop.permute.xlu0 %2934
    %2938 = vset.pattern.permute.xlu0 0
    %2939 = vperm.xlu0 %2938, %v2700
    %v2940 = vpop.permute.xlu0 %2939
    %2943 = vset.pattern.permute.xlu0 0
    %2944 = vperm.xlu0 %2943, %v2701
    %v2945 = vpop.permute.xlu0 %2944
    %2948 = vset.pattern.permute.xlu0 0
    %2949 = vperm.xlu0 %2948, %v2703
    %v2950 = vpop.permute.xlu0 %2949
    %2953 = vset.pattern.permute.xlu0 0
    %2954 = vperm.xlu0 %2953, %v2704
    %v2955 = vpop.permute.xlu0 %2954
    %2958 = vset.pattern.permute.xlu0 0
    %2959 = vperm.xlu0 %2958, %v2705
    %v2960 = vpop.permute.xlu0 %2959
    %2963 = vset.pattern.permute.xlu0 0
    %2964 = vperm.xlu0 %2963, %v2706
    %v2965 = vpop.permute.xlu0 %2964
    %2968 = vset.pattern.permute.xlu0 0
    %2969 = vperm.xlu0 %2968, %v2708
    %v2970 = vpop.permute.xlu0 %2969
    %2973 = vset.pattern.permute.xlu0 0
    %2974 = vperm.xlu0 %2973, %v2709
    %v2975 = vpop.permute.xlu0 %2974
    %2978 = vset.pattern.permute.xlu0 0
    %2979 = vperm.xlu0 %2978, %v2710
    %v2980 = vpop.permute.xlu0 %2979
    %2983 = vset.pattern.permute.xlu0 0
    %2984 = vperm.xlu0 %2983, %v2711
    %v2985 = vpop.permute.xlu0 %2984
    %2988 = vset.pattern.permute.xlu0 0
    %2989 = vperm.xlu0 %2988, %v2713
    %v2990 = vpop.permute.xlu0 %2989
    %2993 = vset.pattern.permute.xlu0 0
    %2994 = vperm.xlu0 %2993, %v2714
    %v2995 = vpop.permute.xlu0 %2994
    %2998 = vset.pattern.permute.xlu0 0
    %2999 = vperm.xlu0 %2998, %v2715
    %v3000 = vpop.permute.xlu0 %2999
    %3003 = vset.pattern.permute.xlu0 0
    %3004 = vperm.xlu0 %3003, %v2716
    %v3005 = vpop.permute.xlu0 %3004
    %3008 = vset.pattern.permute.xlu0 0
    %3009 = vperm.xlu0 %3008, %v2718
    %v3010 = vpop.permute.xlu0 %3009
    %3013 = vset.pattern.permute.xlu0 0
    %3014 = vperm.xlu0 %3013, %v2719
    %v3015 = vpop.permute.xlu0 %3014
    %3018 = vset.pattern.permute.xlu0 0
    %3019 = vperm.xlu0 %3018, %v2720
    %v3020 = vpop.permute.xlu0 %3019
    %3023 = vset.pattern.permute.xlu0 0
    %3024 = vperm.xlu0 %3023, %v2721
    %v3025 = vpop.permute.xlu0 %3024
    %3028 = vset.pattern.permute.xlu0 0
    %3029 = vperm.xlu0 %3028, %v2723
    %v3030 = vpop.permute.xlu0 %3029
    %3033 = vset.pattern.permute.xlu0 0
    %3034 = vperm.xlu0 %3033, %v2724
    %v3035 = vpop.permute.xlu0 %3034
    %3038 = vset.pattern.permute.xlu0 0
    %3039 = vperm.xlu0 %3038, %v2725
    %v3040 = vpop.permute.xlu0 %3039
    %3043 = vset.pattern.permute.xlu0 0
    %3044 = vperm.xlu0 %3043, %v2726
    %v3045 = vpop.permute.xlu0 %3044
    %v3047 = vmul.f32 %v184, %v2730
    %v3048 = vmul.f32 %v185, %v2735
    %v3049 = vmul.f32 %v186, %v2740
    %v3050 = vmul.f32 %v187, %v2745
    %v3051 = vmul.f32 %v188, %v2750
    %v3052 = vmul.f32 %v189, %v2755
    %v3053 = vmul.f32 %v190, %v2760
    %v3054 = vmul.f32 %v191, %v2765
    %v3055 = vmul.f32 %v192, %v2770
    %v3056 = vmul.f32 %v193, %v2775
    %v3057 = vmul.f32 %v194, %v2780
    %v3058 = vmul.f32 %v195, %v2785
    %v3059 = vmul.f32 %v196, %v2790
    %v3060 = vmul.f32 %v197, %v2795
    %v3061 = vmul.f32 %v198, %v2800
    %v3062 = vmul.f32 %v199, %v2805
    %v3063 = vmul.f32 %v200, %v2810
    %v3064 = vmul.f32 %v201, %v2815
    %v3065 = vmul.f32 %v202, %v2820
    %v3066 = vmul.f32 %v203, %v2825
    %v3067 = vmul.f32 %v204, %v2830
    %v3068 = vmul.f32 %v205, %v2835
    %v3069 = vmul.f32 %v206, %v2840
    %v3070 = vmul.f32 %v207, %v2845
    %v3071 = vmul.f32 %v208, %v2850
    %v3072 = vmul.f32 %v209, %v2855
    %v3073 = vmul.f32 %v210, %v2860
    %v3074 = vmul.f32 %v211, %v2865
    %v3075 = vmul.f32 %v212, %v2870
    %v3076 = vmul.f32 %v213, %v2875
    %v3077 = vmul.f32 %v214, %v2880
    %v3078 = vmul.f32 %v215, %v2885
    %v3079 = vmul.f32 %v184, %v2890
    %v3080 = vmul.f32 %v185, %v2895
    %v3081 = vmul.f32 %v186, %v2900
    %v3082 = vmul.f32 %v187, %v2905
    %v3083 = vmul.f32 %v188, %v2910
    %v3084 = vmul.f32 %v189, %v2915
    %v3085 = vmul.f32 %v190, %v2920
    %v3086 = vmul.f32 %v191, %v2925
    %v3087 = vmul.f32 %v192, %v2930
    %v3088 = vmul.f32 %v193, %v2935
    %v3089 = vmul.f32 %v194, %v2940
    %v3090 = vmul.f32 %v195, %v2945
    %v3091 = vmul.f32 %v196, %v2950
    %v3092 = vmul.f32 %v197, %v2955
    %v3093 = vmul.f32 %v198, %v2960
    %v3094 = vmul.f32 %v199, %v2965
    %v3095 = vmul.f32 %v200, %v2970
    %v3096 = vmul.f32 %v201, %v2975
    %v3097 = vmul.f32 %v202, %v2980
    %v3098 = vmul.f32 %v203, %v2985
    %v3099 = vmul.f32 %v204, %v2990
    %v3100 = vmul.f32 %v205, %v2995
    %v3101 = vmul.f32 %v206, %v3000
    %v3102 = vmul.f32 %v207, %v3005
    %v3103 = vmul.f32 %v208, %v3010
    %v3104 = vmul.f32 %v209, %v3015
    %v3105 = vmul.f32 %v210, %v3020
    %v3106 = vmul.f32 %v211, %v3025
    %v3107 = vmul.f32 %v212, %v3030
    %v3108 = vmul.f32 %v213, %v3035
    %v3109 = vmul.f32 %v214, %v3040
    %v3110 = vmul.f32 %v215, %v3045
    %v3111 = vsel %vm255, %v3047, 0.0
    %v3112 = vsel %vm255, %v3048, 0.0
    %v3113 = vadd.f32 %v3111, %v3112
    %v3114 = vsel %vm255, %v3049, 0.0
    %v3115 = vadd.f32 %v3113, %v3114
    %v3116 = vsel %vm255, %v3050, 0.0
    %v3117 = vadd.f32 %v3115, %v3116
    %v3118 = vrot.slane %v3117, 4
    %v3119 = vadd.f32 %v3117, %v3118
    %v3120 = vrot.slane %v3119, 2
    %v3121 = vadd.f32 %v3119, %v3120
    %v3122 = vrot.slane %v3121, 1
    %v3123 = vadd.f32 %v3121, %v3122
    %v3124 = vsel %vm255, %v3051, 0.0
    %v3125 = vsel %vm255, %v3052, 0.0
    %v3126 = vadd.f32 %v3124, %v3125
    %v3127 = vsel %vm255, %v3053, 0.0
    %v3128 = vadd.f32 %v3126, %v3127
    %v3129 = vsel %vm255, %v3054, 0.0
    %v3130 = vadd.f32 %v3128, %v3129
    %v3131 = vrot.slane %v3130, 4
    %v3132 = vadd.f32 %v3130, %v3131
    %v3133 = vrot.slane %v3132, 2
    %v3134 = vadd.f32 %v3132, %v3133
    %v3135 = vrot.slane %v3134, 1
    %v3136 = vadd.f32 %v3134, %v3135
    %v3137 = vsel %vm255, %v3055, 0.0
    %v3138 = vsel %vm255, %v3056, 0.0
    %v3139 = vadd.f32 %v3137, %v3138
    %v3140 = vsel %vm255, %v3057, 0.0
    %v3141 = vadd.f32 %v3139, %v3140
    %v3142 = vsel %vm255, %v3058, 0.0
    %v3143 = vadd.f32 %v3141, %v3142
    %v3144 = vrot.slane %v3143, 4
    %v3145 = vadd.f32 %v3143, %v3144
    %v3146 = vrot.slane %v3145, 2
    %v3147 = vadd.f32 %v3145, %v3146
    %v3148 = vrot.slane %v3147, 1
    %v3149 = vadd.f32 %v3147, %v3148
    %v3150 = vsel %vm255, %v3059, 0.0
    %v3151 = vsel %vm255, %v3060, 0.0
    %v3152 = vadd.f32 %v3150, %v3151
    %v3153 = vsel %vm255, %v3061, 0.0
    %v3154 = vadd.f32 %v3152, %v3153
    %v3155 = vsel %vm255, %v3062, 0.0
    %v3156 = vadd.f32 %v3154, %v3155
    %v3157 = vrot.slane %v3156, 4
    %v3158 = vadd.f32 %v3156, %v3157
    %v3159 = vrot.slane %v3158, 2
    %v3160 = vadd.f32 %v3158, %v3159
    %v3161 = vrot.slane %v3160, 1
    %v3162 = vadd.f32 %v3160, %v3161
    %v3163 = vsel %vm255, %v3063, 0.0
    %v3164 = vsel %vm255, %v3064, 0.0
    %v3165 = vadd.f32 %v3163, %v3164
    %v3166 = vsel %vm255, %v3065, 0.0
    %v3167 = vadd.f32 %v3165, %v3166
    %v3168 = vsel %vm255, %v3066, 0.0
    %v3169 = vadd.f32 %v3167, %v3168
    %v3170 = vrot.slane %v3169, 4
    %v3171 = vadd.f32 %v3169, %v3170
    %v3172 = vrot.slane %v3171, 2
    %v3173 = vadd.f32 %v3171, %v3172
    %v3174 = vrot.slane %v3173, 1
    %v3175 = vadd.f32 %v3173, %v3174
    %v3176 = vsel %vm255, %v3067, 0.0
    %v3177 = vsel %vm255, %v3068, 0.0
    %v3178 = vadd.f32 %v3176, %v3177
    %v3179 = vsel %vm255, %v3069, 0.0
    %v3180 = vadd.f32 %v3178, %v3179
    %v3181 = vsel %vm255, %v3070, 0.0
    %v3182 = vadd.f32 %v3180, %v3181
    %v3183 = vrot.slane %v3182, 4
    %v3184 = vadd.f32 %v3182, %v3183
    %v3185 = vrot.slane %v3184, 2
    %v3186 = vadd.f32 %v3184, %v3185
    %v3187 = vrot.slane %v3186, 1
    %v3188 = vadd.f32 %v3186, %v3187
    %v3189 = vsel %vm255, %v3071, 0.0
    %v3190 = vsel %vm255, %v3072, 0.0
    %v3191 = vadd.f32 %v3189, %v3190
    %v3192 = vsel %vm255, %v3073, 0.0
    %v3193 = vadd.f32 %v3191, %v3192
    %v3194 = vsel %vm255, %v3074, 0.0
    %v3195 = vadd.f32 %v3193, %v3194
    %v3196 = vrot.slane %v3195, 4
    %v3197 = vadd.f32 %v3195, %v3196
    %v3198 = vrot.slane %v3197, 2
    %v3199 = vadd.f32 %v3197, %v3198
    %v3200 = vrot.slane %v3199, 1
    %v3201 = vadd.f32 %v3199, %v3200
    %v3202 = vsel %vm255, %v3075, 0.0
    %v3203 = vsel %vm255, %v3076, 0.0
    %v3204 = vadd.f32 %v3202, %v3203
    %v3205 = vsel %vm255, %v3077, 0.0
    %v3206 = vadd.f32 %v3204, %v3205
    %v3207 = vsel %vm255, %v3078, 0.0
    %v3208 = vadd.f32 %v3206, %v3207
    %v3209 = vrot.slane %v3208, 4
    %v3210 = vadd.f32 %v3208, %v3209
    %v3211 = vrot.slane %v3210, 2
    %v3212 = vadd.f32 %v3210, %v3211
    %v3213 = vrot.slane %v3212, 1
    %v3214 = vadd.f32 %v3212, %v3213
    %v3215 = vsel %vm255, %v3079, 0.0
    %v3216 = vsel %vm255, %v3080, 0.0
    %v3217 = vadd.f32 %v3215, %v3216
    %v3218 = vsel %vm255, %v3081, 0.0
    %v3219 = vadd.f32 %v3217, %v3218
    %v3220 = vsel %vm255, %v3082, 0.0
    %v3221 = vadd.f32 %v3219, %v3220
    %v3222 = vrot.slane %v3221, 4
    %v3223 = vadd.f32 %v3221, %v3222
    %v3224 = vrot.slane %v3223, 2
    %v3225 = vadd.f32 %v3223, %v3224
    %v3226 = vrot.slane %v3225, 1
    %v3227 = vadd.f32 %v3225, %v3226
    %v3228 = vsel %vm255, %v3083, 0.0
    %v3229 = vsel %vm255, %v3084, 0.0
    %v3230 = vadd.f32 %v3228, %v3229
    %v3231 = vsel %vm255, %v3085, 0.0
    %v3232 = vadd.f32 %v3230, %v3231
    %v3233 = vsel %vm255, %v3086, 0.0
    %v3234 = vadd.f32 %v3232, %v3233
    %v3235 = vrot.slane %v3234, 4
    %v3236 = vadd.f32 %v3234, %v3235
    %v3237 = vrot.slane %v3236, 2
    %v3238 = vadd.f32 %v3236, %v3237
    %v3239 = vrot.slane %v3238, 1
    %v3240 = vadd.f32 %v3238, %v3239
    %v3241 = vsel %vm255, %v3087, 0.0
    %v3242 = vsel %vm255, %v3088, 0.0
    %v3243 = vadd.f32 %v3241, %v3242
    %v3244 = vsel %vm255, %v3089, 0.0
    %v3245 = vadd.f32 %v3243, %v3244
    %v3246 = vsel %vm255, %v3090, 0.0
    %v3247 = vadd.f32 %v3245, %v3246
    %v3248 = vrot.slane %v3247, 4
    %v3249 = vadd.f32 %v3247, %v3248
    %v3250 = vrot.slane %v3249, 2
    %v3251 = vadd.f32 %v3249, %v3250
    %v3252 = vrot.slane %v3251, 1
    %v3253 = vadd.f32 %v3251, %v3252
    %v3254 = vsel %vm255, %v3091, 0.0
    %v3255 = vsel %vm255, %v3092, 0.0
    %v3256 = vadd.f32 %v3254, %v3255
    %v3257 = vsel %vm255, %v3093, 0.0
    %v3258 = vadd.f32 %v3256, %v3257
    %v3259 = vsel %vm255, %v3094, 0.0
    %v3260 = vadd.f32 %v3258, %v3259
    %v3261 = vrot.slane %v3260, 4
    %v3262 = vadd.f32 %v3260, %v3261
    %v3263 = vrot.slane %v3262, 2
    %v3264 = vadd.f32 %v3262, %v3263
    %v3265 = vrot.slane %v3264, 1
    %v3266 = vadd.f32 %v3264, %v3265
    %v3267 = vsel %vm255, %v3095, 0.0
    %v3268 = vsel %vm255, %v3096, 0.0
    %v3269 = vadd.f32 %v3267, %v3268
    %v3270 = vsel %vm255, %v3097, 0.0
    %v3271 = vadd.f32 %v3269, %v3270
    %v3272 = vsel %vm255, %v3098, 0.0
    %v3273 = vadd.f32 %v3271, %v3272
    %v3274 = vrot.slane %v3273, 4
    %v3275 = vadd.f32 %v3273, %v3274
    %v3276 = vrot.slane %v3275, 2
    %v3277 = vadd.f32 %v3275, %v3276
    %v3278 = vrot.slane %v3277, 1
    %v3279 = vadd.f32 %v3277, %v3278
    %v3280 = vsel %vm255, %v3099, 0.0
    %v3281 = vsel %vm255, %v3100, 0.0
    %v3282 = vadd.f32 %v3280, %v3281
    %v3283 = vsel %vm255, %v3101, 0.0
    %v3284 = vadd.f32 %v3282, %v3283
    %v3285 = vsel %vm255, %v3102, 0.0
    %v3286 = vadd.f32 %v3284, %v3285
    %v3287 = vrot.slane %v3286, 4
    %v3288 = vadd.f32 %v3286, %v3287
    %v3289 = vrot.slane %v3288, 2
    %v3290 = vadd.f32 %v3288, %v3289
    %v3291 = vrot.slane %v3290, 1
    %v3292 = vadd.f32 %v3290, %v3291
    %v3293 = vsel %vm255, %v3103, 0.0
    %v3294 = vsel %vm255, %v3104, 0.0
    %v3295 = vadd.f32 %v3293, %v3294
    %v3296 = vsel %vm255, %v3105, 0.0
    %v3297 = vadd.f32 %v3295, %v3296
    %v3298 = vsel %vm255, %v3106, 0.0
    %v3299 = vadd.f32 %v3297, %v3298
    %v3300 = vrot.slane %v3299, 4
    %v3301 = vadd.f32 %v3299, %v3300
    %v3302 = vrot.slane %v3301, 2
    %v3303 = vadd.f32 %v3301, %v3302
    %v3304 = vrot.slane %v3303, 1
    %v3305 = vadd.f32 %v3303, %v3304
    %v3306 = vsel %vm255, %v3107, 0.0
    %v3307 = vsel %vm255, %v3108, 0.0
    %v3308 = vadd.f32 %v3306, %v3307
    %v3309 = vsel %vm255, %v3109, 0.0
    %v3310 = vadd.f32 %v3308, %v3309
    %v3311 = vsel %vm255, %v3110, 0.0
    %v3312 = vadd.f32 %v3310, %v3311
    %v3313 = vrot.slane %v3312, 4
    %v3314 = vadd.f32 %v3312, %v3313
    %v3315 = vrot.slane %v3314, 2
    %v3316 = vadd.f32 %v3314, %v3315
    %v3317 = vrot.slane %v3316, 1
    %v3318 = vadd.f32 %v3316, %v3317
    %v3319 = vld [vmem:[%s2] sm:$0xff]
    %v3320 = vld [vmem:[%s3] sm:$0xff]
    %3322 = vrot.lane.b32.xlu0 %v3320, 32
    %v3323 = vpop.permute.xlu0 %3322
    %v3333 = vsel %vm1680, %v3136, %v3123
    %v3334 = vsel %vm1682, %v3149, %v3333
    %v3335 = vsel %vm1684, %v3162, %v3334
    %v3336 = vsel %vm1686, %v3175, %v3335
    %v3337 = vsel %vm1688, %v3188, %v3336
    %v3338 = vsel %vm1690, %v3201, %v3337
    %v3339 = vsel %vm1692, %v3214, %v3338
    %3340 = vrot.lane.b32.xlu0 %v3339, 64
    %v3341 = vpop.permute.xlu0 %3340
    %v3343 = vsel %vm255, %v183, %v3323
    %vm3344 = vcmask 523264
    %v3345 = vsel %vm3344, %v3343, %v3341
    %v3346 = vpack.c.bf16 %v3345, %v3345
    %v3347 = vld [vmem:[#allocation18] sm:$0xff]
    %v3348 = vld [vmem:[#allocation18 + $0x8] sm:$0xff]
    %v3349 = vld [vmem:[#allocation18 + $0x10] sm:$0xff]
    %v3350 = vld [vmem:[#allocation18 + $0x18] sm:$0xff]
    %v3351 = vld [vmem:[#allocation18 + $0x20] sm:$0xff]
    %v3352 = vld [vmem:[#allocation18 + $0x28] sm:$0xff]
    %v3353 = vld [vmem:[#allocation18 + $0x30] sm:$0xff]
    %v3354 = vld [vmem:[#allocation18 + $0x38] sm:$0xff]
    %v3355 = vld [vmem:[#allocation18 + $0x40] sm:$0xff]
    %v3356 = vld [vmem:[#allocation18 + $0x48] sm:$0xff]
    %v3357 = vld [vmem:[#allocation18 + $0x50] sm:$0xff]
    %v3358 = vld [vmem:[#allocation18 + $0x58] sm:$0xff]
    %v3359 = vld [vmem:[%s15] sm:$0x3]
    %v3361 = vlaneseq
    %v3362 = vshrl.u32 %v3361, 7
    %v3363 = vsub.s32 0, %v3362
    %v3364 = vrot.slane %v3359, %v3363
    %v3365 = vlaneseq
    %v3366 = vshrl.u32 %v3365, 7
    %v3367 = vsub.s32 1, %v3366
    %v3368 = vrot.slane %v3359, %v3367
    %v3383 = vunpack.c.l.b16 %v3347
    %v3384 = vunpack.c.h.b16 %v3347
    %v3385 = vunpack.c.l.b16 %v3348
    %v3386 = vunpack.c.h.b16 %v3348
    %v3387 = vunpack.c.l.b16 %v3349
    %v3388 = vunpack.c.h.b16 %v3349
    %v3389 = vunpack.c.l.b16 %v3350
    %v3390 = vunpack.c.h.b16 %v3350
    %v3391 = vunpack.c.l.b16 %v3351
    %v3392 = vunpack.c.h.b16 %v3351
    %v3393 = vunpack.c.l.b16 %v3352
    %v3394 = vunpack.c.h.b16 %v3352
    %v3395 = vunpack.c.l.b16 %v3353
    %v3396 = vunpack.c.h.b16 %v3353
    %v3397 = vunpack.c.l.b16 %v3354
    %v3398 = vunpack.c.h.b16 %v3354
    %v3399 = vunpack.c.l.b16 %v3355
    %v3400 = vunpack.c.h.b16 %v3355
    %v3401 = vunpack.c.l.b16 %v3356
    %v3402 = vunpack.c.h.b16 %v3356
    %v3403 = vunpack.c.l.b16 %v3357
    %v3404 = vunpack.c.h.b16 %v3357
    %v3405 = vunpack.c.l.b16 %v3358
    %v3406 = vunpack.c.h.b16 %v3358
    %v3407 = vpack.c.b16 %v3385, %v3383
    %v3408 = vpack.c.b16 %v3386, %v3384
    %v3409 = vpack.c.b16 %v3389, %v3387
    %v3410 = vpack.c.b16 %v3390, %v3388
    %v3411 = vpack.c.b16 %v3393, %v3391
    %v3412 = vpack.c.b16 %v3394, %v3392
    %v3413 = vpack.c.b16 %v3397, %v3395
    %v3414 = vpack.c.b16 %v3398, %v3396
    %v3415 = vpack.c.b16 %v3401, %v3399
    %v3416 = vpack.c.b16 %v3402, %v3400
    %v3417 = vpack.c.b16 %v3405, %v3403
    %v3418 = vpack.c.b16 %v3406, %v3404
    %vm3431 = vcmask 785408
    %v3433 = vsel %vm3431, %v3346, 0
    %3435 = vmatprep.subr.bf16.mxu0 0
    %3436 = vmatpush1.bf16.msra.mxu0 0
    %3437 = vmatprep.subr.bf16.mxu0 0
    %3438 = vmatpush1.bf16.msra.mxu0 0
    %3439 = vmatprep.subr.bf16.mxu0 %v3418
    %3440 = vmatpush1.bf16.msra.mxu0 %v3417
    %3441 = vmatprep.subr.bf16.mxu0 %v3416
    %3442 = vmatpush1.bf16.msra.mxu0 %v3415
    %3443 = vmatprep.subr.bf16.mxu0 %v3414
    %3444 = vmatpush1.bf16.msra.mxu0 %v3413
    %3445 = vmatprep.subr.bf16.mxu0 %v3412
    %3446 = vmatpush1.bf16.msra.mxu0 %v3411
    %3447 = vmatprep.subr.bf16.mxu0 %v3410
    %3448 = vmatpush1.bf16.msra.mxu0 %v3409
    %3449 = vmatprep.subr.bf16.mxu0 %v3408
    %3450 = vmatpush1.bf16.msra.mxu0 %v3407
    %3451 = vmatprep.subr.bf16.mxu0 0
    %3452 = vmatpush2.bf16.msra.mxu0 0
    %3453 = vmatprep.subr.bf16.mxu0 0
    %3454 = vmatpush2.bf16.msra.mxu0 0
    %3455 = vmatprep.subr.bf16.mxu0 0
    %3456 = vmatpush2.bf16.msra.mxu0 0
    %3457 = vmatprep.subr.bf16.mxu0 0
    %3458 = vmatpush2.bf16.msra.mxu0 0
    %3459 = vmatprep.subr.bf16.mxu0 0
    %3460 = vmatpush2.bf16.msra.mxu0 0
    %3461 = vmatprep.subr.bf16.mxu0 0
    %3462 = vmatpush2.bf16.msra.mxu0 0
    %3463 = vmatprep.subr.bf16.mxu0 0
    %3464 = vmatpush2.bf16.msra.mxu0 0
    %3465 = vmatprep.subr.bf16.mxu0 0
    %3466 = vmatpush2.bf16.msra.mxu0 0
    %3467 = vmatprep.mubr.bf16.mxu0 0
    %3468 = vmatmul.mubr.bf16.gmra.mxu0 %v3433
    %v3469 = vpop.f32.mrf.mxu0
    %v3470 = vadd.f32 %v3364, %v3469
    %v3471 = vpop.f32.mrf.mxu0
    %v3472 = vadd.f32 %v3368, %v3471
    %v3473 = vpop.f32.mrf.mxu0
    %v3474 = vpop.f32.mrf.mxu0
    %3475 = vdwg.mxu0
    %v3476 = vadd.s32 %v1369, 128
    %vm3477 = vcmp.lt.s32.totalorder %v1369, 192
    %vm3478 = vcmp.lt.s32.totalorder %v3476, 192
    %v3479 = vmul.f32 %v3470, 0.5
    %v3480 = vmul.f32 %v3472, 0.5
    %v3481 = vsel %vm3477, %v3479, %v3470
    %v3482 = vsel %vm3478, %v3480, %v3472
    %v3483 = vtanh.pop %v3481
    %v3484 = vtanh.pop %v3482
    %v3485 = vadd.f32 %v3483, 1.0
    %v3486 = vadd.f32 %v3484, 1.0
    %v3487 = vmul.f32 %v3485, 0.5
    %v3488 = vmul.f32 %v3486, 0.5
    %v3489 = vsel %vm3477, %v3487, %v3483
    %v3490 = vsel %vm3478, %v3488, %v3484
    %3492 = vrot.lane.b32.xlu0 %v3319, 32
    %v3493 = vpop.permute.xlu0 %3492
    %v3495 = vsel %vm255, %v3319, %v3493
    %3497 = vrot.lane.b32.xlu0 %v3495, 64
    %v3498 = vpop.permute.xlu0 %3497
    %v3500 = vmul.f32 %v3489, %v3498
    %3502 = vrot.lane.b32.xlu0 %v3490, 64
    %v3503 = vpop.permute.xlu0 %3502
    %v3505 = vmul.f32 %v3489, %v3503
    %3507 = vrot.lane.b32.xlu0 %v3505, 64
    %v3508 = vpop.permute.xlu0 %3507
    %v3510 = vadd.f32 %v3500, %v3508
    %v3511 = vtanh.pop %v3510
    %3513 = vrot.lane.b32.xlu0 %v3511, 64
    %v3514 = vpop.permute.xlu0 %3513
    %v3516 = vmul.f32 %v3490, %v3514
    %v3517 = vadd.f32 %v3510, 0.0
    %3519 = vrot.lane.b32.xlu0 %v3510, 96
    %v3520 = vpop.permute.xlu0 %3519
    %v3522 = vadd.f32 %v3517, %v3520
    %v3523 = vmul.f32 %v3522, 0.5
    %v3524 = vadd.f32 %v3516, 0.0
    %3526 = vrot.lane.b32.xlu0 %v3516, 96
    %v3527 = vpop.permute.xlu0 %3526
    %v3529 = vadd.f32 %v3524, %v3527
    %v3530 = vmul.f32 %v3529, 0.5
    %v3531 = vpack.c.bf16 %v3530, %v3530
    %v3532 = vld [vmem:[#allocation15] sm:$0xf]
    %v3533 = vld [vmem:[#allocation15 + $0x4] sm:$0xf]
    %v3534 = vld [vmem:[#allocation15 + $0x8] sm:$0xf]
    %v3535 = vld [vmem:[#allocation15 + $0xc] sm:$0xf]
    %v3536 = vld [vmem:[#allocation16] sm:$0x1]
    %v3538 = vlaneseq
    %v3539 = vshrl.u32 %v3538, 7
    %v3540 = vsub.s32 0, %v3539
    %v3541 = vrot.slane %v3536, %v3540
    %v3547 = vunpack.c.l.b16 %v3532
    %v3548 = vunpack.c.l.b16 %v3533
    %v3549 = vunpack.c.l.b16 %v3534
    %v3550 = vunpack.c.l.b16 %v3535
    %v3551 = vpack.c.b16 %v3548, %v3547
    %v3552 = vpack.c.b16 %v3550, %v3549
    %v3556 = vsel %vm255, %v3531, 0
    %3558 = vmatprep.subr.bf16.mxu0 0
    %3559 = vmatpush1.bf16.msra.mxu0 0
    %3560 = vmatprep.subr.bf16.mxu0 0
    %3561 = vmatpush1.bf16.msra.mxu0 0
    %3562 = vmatprep.subr.bf16.mxu0 0
    %3563 = vmatpush1.bf16.msra.mxu0 0
    %3564 = vmatprep.subr.bf16.mxu0 0
    %3565 = vmatpush1.bf16.msra.mxu0 0
    %3566 = vmatprep.subr.bf16.mxu0 0
    %3567 = vmatpush1.bf16.msra.mxu0 0
    %3568 = vmatprep.subr.bf16.mxu0 0
    %3569 = vmatpush1.bf16.msra.mxu0 0
    %3570 = vmatprep.subr.bf16.mxu0 0
    %3571 = vmatpush1.bf16.msra.mxu0 %v3552
    %3572 = vmatprep.subr.bf16.mxu0 0
    %3573 = vmatpush1.bf16.msra.mxu0 %v3551
    %3574 = vmatprep.subr.bf16.mxu0 0
    %3575 = vmatpush2.bf16.msra.mxu0 0
    %3576 = vmatprep.subr.bf16.mxu0 0
    %3577 = vmatpush2.bf16.msra.mxu0 0
    %3578 = vmatprep.subr.bf16.mxu0 0
    %3579 = vmatpush2.bf16.msra.mxu0 0
    %3580 = vmatprep.subr.bf16.mxu0 0
    %3581 = vmatpush2.bf16.msra.mxu0 0
    %3582 = vmatprep.subr.bf16.mxu0 0
    %3583 = vmatpush2.bf16.msra.mxu0 0
    %3584 = vmatprep.subr.bf16.mxu0 0
    %3585 = vmatpush2.bf16.msra.mxu0 0
    %3586 = vmatprep.subr.bf16.mxu0 0
    %3587 = vmatpush2.bf16.msra.mxu0 0
    %3588 = vmatprep.subr.bf16.mxu0 0
    %3589 = vmatpush2.bf16.msra.mxu0 0
    %3590 = vmatprep.mubr.bf16.mxu0 0
    %3591 = vmatmul.mubr.bf16.gmra.mxu0 %v3556
    %v3592 = vpop.f32.mrf.mxu0
    %v3593 = vadd.f32 %v3541, %v3592
    %v3594 = vpop.f32.mrf.mxu0
    %v3595 = vpop.f32.mrf.mxu0
    %v3596 = vpop.f32.mrf.mxu0
    %3597 = vdwg.mxu0
    %v3598 = vlaneseq
    %v3599 = vshrl.u32 %v3598, 7
    %v3600 = vsub.s32 0, %v3599
    %v3601 = vrot.slane %v3593, %v3600
    %3603 = vbcast.lane.b32.xlu0 %v3601, 256
    %v3604 = vpop.permute.xlu0 %3603
    %s3606 = sor.u32 256, 8
    %3607 = vbcast.lane.b32.xlu0 %v3601, %s3606
    %v3608 = vpop.permute.xlu0 %3607
    %s3610 = sor.u32 256, 16
    %3611 = vbcast.lane.b32.xlu0 %v3601, %s3610
    %v3612 = vpop.permute.xlu0 %3611
    %s3614 = sor.u32 256, 24
    %3615 = vbcast.lane.b32.xlu0 %v3601, %s3614
    %v3616 = vpop.permute.xlu0 %3615
    %v3617 = vlaneseq
    %v3618 = vshrl.u32 %v3617, 7
    %v3619 = vsub.s32 1, %v3618
    %v3620 = vrot.slane %v3593, %v3619
    %3622 = vbcast.lane.b32.xlu0 %v3620, 256
    %v3623 = vpop.permute.xlu0 %3622
    %s3625 = sor.u32 256, 8
    %3626 = vbcast.lane.b32.xlu0 %v3620, %s3625
    %v3627 = vpop.permute.xlu0 %3626
    %s3629 = sor.u32 256, 16
    %3630 = vbcast.lane.b32.xlu0 %v3620, %s3629
    %v3631 = vpop.permute.xlu0 %3630
    %s3633 = sor.u32 256, 24
    %3634 = vbcast.lane.b32.xlu0 %v3620, %s3633
    %v3635 = vpop.permute.xlu0 %3634
    %v3636 = vlaneseq
    %v3637 = vshrl.u32 %v3636, 7
    %v3638 = vsub.s32 2, %v3637
    %v3639 = vrot.slane %v3593, %v3638
    %3641 = vbcast.lane.b32.xlu0 %v3639, 256
    %v3642 = vpop.permute.xlu0 %3641
    %s3644 = sor.u32 256, 8
    %3645 = vbcast.lane.b32.xlu0 %v3639, %s3644
    %v3646 = vpop.permute.xlu0 %3645
    %s3648 = sor.u32 256, 16
    %3649 = vbcast.lane.b32.xlu0 %v3639, %s3648
    %v3650 = vpop.permute.xlu0 %3649
    %s3652 = sor.u32 256, 24
    %3653 = vbcast.lane.b32.xlu0 %v3639, %s3652
    %v3654 = vpop.permute.xlu0 %3653
    %v3655 = vlaneseq
    %v3656 = vshrl.u32 %v3655, 7
    %v3657 = vsub.s32 3, %v3656
    %v3658 = vrot.slane %v3593, %v3657
    %3660 = vbcast.lane.b32.xlu0 %v3658, 256
    %v3661 = vpop.permute.xlu0 %3660
    %s3663 = sor.u32 256, 8
    %3664 = vbcast.lane.b32.xlu0 %v3658, %s3663
    %v3665 = vpop.permute.xlu0 %3664
    %s3667 = sor.u32 256, 16
    %3668 = vbcast.lane.b32.xlu0 %v3658, %s3667
    %v3669 = vpop.permute.xlu0 %3668
    %s3671 = sor.u32 256, 24
    %3672 = vbcast.lane.b32.xlu0 %v3658, %s3671
    %v3673 = vpop.permute.xlu0 %3672
    %v3674 = vlaneseq
    %v3675 = vshrl.u32 %v3674, 7
    %v3676 = vsub.s32 4, %v3675
    %v3677 = vrot.slane %v3593, %v3676
    %3679 = vbcast.lane.b32.xlu0 %v3677, 256
    %v3680 = vpop.permute.xlu0 %3679
    %s3682 = sor.u32 256, 8
    %3683 = vbcast.lane.b32.xlu0 %v3677, %s3682
    %v3684 = vpop.permute.xlu0 %3683
    %s3686 = sor.u32 256, 16
    %3687 = vbcast.lane.b32.xlu0 %v3677, %s3686
    %v3688 = vpop.permute.xlu0 %3687
    %s3690 = sor.u32 256, 24
    %3691 = vbcast.lane.b32.xlu0 %v3677, %s3690
    %v3692 = vpop.permute.xlu0 %3691
    %v3693 = vlaneseq
    %v3694 = vshrl.u32 %v3693, 7
    %v3695 = vsub.s32 5, %v3694
    %v3696 = vrot.slane %v3593, %v3695
    %3698 = vbcast.lane.b32.xlu0 %v3696, 256
    %v3699 = vpop.permute.xlu0 %3698
    %s3701 = sor.u32 256, 8
    %3702 = vbcast.lane.b32.xlu0 %v3696, %s3701
    %v3703 = vpop.permute.xlu0 %3702
    %s3705 = sor.u32 256, 16
    %3706 = vbcast.lane.b32.xlu0 %v3696, %s3705
    %v3707 = vpop.permute.xlu0 %3706
    %s3709 = sor.u32 256, 24
    %3710 = vbcast.lane.b32.xlu0 %v3696, %s3709
    %v3711 = vpop.permute.xlu0 %3710
    %v3712 = vlaneseq
    %v3713 = vshrl.u32 %v3712, 7
    %v3714 = vsub.s32 6, %v3713
    %v3715 = vrot.slane %v3593, %v3714
    %3717 = vbcast.lane.b32.xlu0 %v3715, 256
    %v3718 = vpop.permute.xlu0 %3717
    %s3720 = sor.u32 256, 8
    %3721 = vbcast.lane.b32.xlu0 %v3715, %s3720
    %v3722 = vpop.permute.xlu0 %3721
    %s3724 = sor.u32 256, 16
    %3725 = vbcast.lane.b32.xlu0 %v3715, %s3724
    %v3726 = vpop.permute.xlu0 %3725
    %s3728 = sor.u32 256, 24
    %3729 = vbcast.lane.b32.xlu0 %v3715, %s3728
    %v3730 = vpop.permute.xlu0 %3729
    %v3731 = vlaneseq
    %v3732 = vshrl.u32 %v3731, 7
    %v3733 = vsub.s32 7, %v3732
    %v3734 = vrot.slane %v3593, %v3733
    %3736 = vbcast.lane.b32.xlu0 %v3734, 256
    %v3737 = vpop.permute.xlu0 %3736
    %s3739 = sor.u32 256, 8
    %3740 = vbcast.lane.b32.xlu0 %v3734, %s3739
    %v3741 = vpop.permute.xlu0 %3740
    %s3743 = sor.u32 256, 16
    %3744 = vbcast.lane.b32.xlu0 %v3734, %s3743
    %v3745 = vpop.permute.xlu0 %3744
    %s3747 = sor.u32 256, 24
    %3748 = vbcast.lane.b32.xlu0 %v3734, %s3747
    %v3749 = vpop.permute.xlu0 %3748
    %v3750 = vadd.f32 %v339, %v3604
    %v3751 = vadd.f32 %v342, %v3608
    %v3752 = vadd.f32 %v347, %v3612
    %v3753 = vadd.f32 %v350, %v3616
    %v3754 = vadd.f32 %v355, %v3623
    %v3755 = vadd.f32 %v358, %v3627
    %v3756 = vadd.f32 %v363, %v3631
    %v3757 = vadd.f32 %v366, %v3635
    %v3758 = vadd.f32 %v371, %v3642
    %v3759 = vadd.f32 %v374, %v3646
    %v3760 = vadd.f32 %v379, %v3650
    %v3761 = vadd.f32 %v382, %v3654
    %v3762 = vadd.f32 %v387, %v3661
    %v3763 = vadd.f32 %v390, %v3665
    %v3764 = vadd.f32 %v395, %v3669
    %v3765 = vadd.f32 %v398, %v3673
    %v3766 = vadd.f32 %v403, %v3680
    %v3767 = vadd.f32 %v406, %v3684
    %v3768 = vadd.f32 %v411, %v3688
    %v3769 = vadd.f32 %v414, %v3692
    %v3770 = vadd.f32 %v419, %v3699
    %v3771 = vadd.f32 %v422, %v3703
    %v3772 = vadd.f32 %v427, %v3707
    %v3773 = vadd.f32 %v430, %v3711
    %v3774 = vadd.f32 %v435, %v3718
    %v3775 = vadd.f32 %v438, %v3722
    %v3776 = vadd.f32 %v443, %v3726
    %v3777 = vadd.f32 %v446, %v3730
    %v3778 = vadd.f32 %v451, %v3737
    %v3779 = vadd.f32 %v454, %v3741
    %v3780 = vadd.f32 %v459, %v3745
    %v3781 = vadd.f32 %v462, %v3749
    %v3782 = vtanh.pop %v3750
    %v3783 = vtanh.pop %v3751
    %v3784 = vtanh.pop %v3752
    %v3785 = vtanh.pop %v3753
    %v3786 = vtanh.pop %v3754
    %v3787 = vtanh.pop %v3755
    %v3788 = vtanh.pop %v3756
    %v3789 = vtanh.pop %v3757
    %v3790 = vtanh.pop %v3758
    %v3791 = vtanh.pop %v3759
    %v3792 = vtanh.pop %v3760
    %v3793 = vtanh.pop %v3761
    %v3794 = vtanh.pop %v3762
    %v3795 = vtanh.pop %v3763
    %v3796 = vtanh.pop %v3764
    %v3797 = vtanh.pop %v3765
    %v3798 = vtanh.pop %v3766
    %v3799 = vtanh.pop %v3767
    %v3800 = vtanh.pop %v3768
    %v3801 = vtanh.pop %v3769
    %v3802 = vtanh.pop %v3770
    %v3803 = vtanh.pop %v3771
    %v3804 = vtanh.pop %v3772
    %v3805 = vtanh.pop %v3773
    %v3806 = vtanh.pop %v3774
    %v3807 = vtanh.pop %v3775
    %v3808 = vtanh.pop %v3776
    %v3809 = vtanh.pop %v3777
    %v3810 = vtanh.pop %v3778
    %v3811 = vtanh.pop %v3779
    %v3812 = vtanh.pop %v3780
    %v3813 = vtanh.pop %v3781
    %v3814 = vld [vmem:[%s12] sm:$0x1]
    %v3816 = vlaneseq
    %v3817 = vshrl.u32 %v3816, 7
    %v3818 = vsub.s32 0, %v3817
    %v3819 = vrot.slane %v3814, %v3818
    %3820 = vrot.lane.b32.xlu0 %v3819, 32
    %v3821 = vpop.permute.xlu0 %3820
    %v3823 = vmul.f32 %v3782, %v3821
    %v3824 = vmul.f32 %v3783, %v3821
    %v3825 = vmul.f32 %v3784, %v3821
    %v3826 = vmul.f32 %v3785, %v3821
    %v3827 = vmul.f32 %v3786, %v3821
    %v3828 = vmul.f32 %v3787, %v3821
    %v3829 = vmul.f32 %v3788, %v3821
    %v3830 = vmul.f32 %v3789, %v3821
    %v3831 = vmul.f32 %v3790, %v3821
    %v3832 = vmul.f32 %v3791, %v3821
    %v3833 = vmul.f32 %v3792, %v3821
    %v3834 = vmul.f32 %v3793, %v3821
    %v3835 = vmul.f32 %v3794, %v3821
    %v3836 = vmul.f32 %v3795, %v3821
    %v3837 = vmul.f32 %v3796, %v3821
    %v3838 = vmul.f32 %v3797, %v3821
    %v3839 = vmul.f32 %v3798, %v3821
    %v3840 = vmul.f32 %v3799, %v3821
    %v3841 = vmul.f32 %v3800, %v3821
    %v3842 = vmul.f32 %v3801, %v3821
    %v3843 = vmul.f32 %v3802, %v3821
    %v3844 = vmul.f32 %v3803, %v3821
    %v3845 = vmul.f32 %v3804, %v3821
    %v3846 = vmul.f32 %v3805, %v3821
    %v3847 = vmul.f32 %v3806, %v3821
    %v3848 = vmul.f32 %v3807, %v3821
    %v3849 = vmul.f32 %v3808, %v3821
    %v3850 = vmul.f32 %v3809, %v3821
    %v3851 = vmul.f32 %v3810, %v3821
    %v3852 = vmul.f32 %v3811, %v3821
    %v3853 = vmul.f32 %v3812, %v3821
    %v3854 = vmul.f32 %v3813, %v3821
    %3887 = vrot.lane.b32.xlu0 %v3823, 96
    %v3888 = vpop.permute.xlu0 %3887
    %3889 = vrot.lane.b32.xlu0 %v3824, 96
    %v3890 = vpop.permute.xlu0 %3889
    %3891 = vrot.lane.b32.xlu0 %v3825, 96
    %v3892 = vpop.permute.xlu0 %3891
    %3893 = vrot.lane.b32.xlu0 %v3826, 96
    %v3894 = vpop.permute.xlu0 %3893
    %3895 = vrot.lane.b32.xlu0 %v3827, 96
    %v3896 = vpop.permute.xlu0 %3895
    %3897 = vrot.lane.b32.xlu0 %v3828, 96
    %v3898 = vpop.permute.xlu0 %3897
    %3899 = vrot.lane.b32.xlu0 %v3829, 96
    %v3900 = vpop.permute.xlu0 %3899
    %3901 = vrot.lane.b32.xlu0 %v3830, 96
    %v3902 = vpop.permute.xlu0 %3901
    %3903 = vrot.lane.b32.xlu0 %v3831, 96
    %v3904 = vpop.permute.xlu0 %3903
    %3905 = vrot.lane.b32.xlu0 %v3832, 96
    %v3906 = vpop.permute.xlu0 %3905
    %3907 = vrot.lane.b32.xlu0 %v3833, 96
    %v3908 = vpop.permute.xlu0 %3907
    %3909 = vrot.lane.b32.xlu0 %v3834, 96
    %v3910 = vpop.permute.xlu0 %3909
    %3911 = vrot.lane.b32.xlu0 %v3835, 96
    %v3912 = vpop.permute.xlu0 %3911
    %3913 = vrot.lane.b32.xlu0 %v3836, 96
    %v3914 = vpop.permute.xlu0 %3913
    %3915 = vrot.lane.b32.xlu0 %v3837, 96
    %v3916 = vpop.permute.xlu0 %3915
    %3917 = vrot.lane.b32.xlu0 %v3838, 96
    %v3918 = vpop.permute.xlu0 %3917
    %3919 = vrot.lane.b32.xlu0 %v3839, 96
    %v3920 = vpop.permute.xlu0 %3919
    %3921 = vrot.lane.b32.xlu0 %v3840, 96
    %v3922 = vpop.permute.xlu0 %3921
    %3923 = vrot.lane.b32.xlu0 %v3841, 96
    %v3924 = vpop.permute.xlu0 %3923
    %3925 = vrot.lane.b32.xlu0 %v3842, 96
    %v3926 = vpop.permute.xlu0 %3925
    %3927 = vrot.lane.b32.xlu0 %v3843, 96
    %v3928 = vpop.permute.xlu0 %3927
    %3929 = vrot.lane.b32.xlu0 %v3844, 96
    %v3930 = vpop.permute.xlu0 %3929
    %3931 = vrot.lane.b32.xlu0 %v3845, 96
    %v3932 = vpop.permute.xlu0 %3931
    %3933 = vrot.lane.b32.xlu0 %v3846, 96
    %v3934 = vpop.permute.xlu0 %3933
    %3935 = vrot.lane.b32.xlu0 %v3847, 96
    %v3936 = vpop.permute.xlu0 %3935
    %3937 = vrot.lane.b32.xlu0 %v3848, 96
    %v3938 = vpop.permute.xlu0 %3937
    %3939 = vrot.lane.b32.xlu0 %v3849, 96
    %v3940 = vpop.permute.xlu0 %3939
    %3941 = vrot.lane.b32.xlu0 %v3850, 96
    %v3942 = vpop.permute.xlu0 %3941
    %3943 = vrot.lane.b32.xlu0 %v3851, 96
    %v3944 = vpop.permute.xlu0 %3943
    %3945 = vrot.lane.b32.xlu0 %v3852, 96
    %v3946 = vpop.permute.xlu0 %3945
    %3947 = vrot.lane.b32.xlu0 %v3853, 96
    %v3948 = vpop.permute.xlu0 %3947
    %3949 = vrot.lane.b32.xlu0 %v3854, 96
    %v3950 = vpop.permute.xlu0 %3949
    %v3983 = vsel %vm255, %v3888, 0.0
    %3984 = vadd.xlane.f32.xlu0 %v3983
    %v3985 = vpop.xlane.xlu0 %3984
    %v3986 = vsel %vm255, %v3890, 0.0
    %3987 = vadd.xlane.f32.xlu0 %v3986
    %v3988 = vpop.xlane.xlu0 %3987
    %v3989 = vsel %vm255, %v3892, 0.0
    %3990 = vadd.xlane.f32.xlu0 %v3989
    %v3991 = vpop.xlane.xlu0 %3990
    %v3992 = vsel %vm255, %v3894, 0.0
    %3993 = vadd.xlane.f32.xlu0 %v3992
    %v3994 = vpop.xlane.xlu0 %3993
    %v3995 = vsel %vm255, %v3896, 0.0
    %3996 = vadd.xlane.f32.xlu0 %v3995
    %v3997 = vpop.xlane.xlu0 %3996
    %v3998 = vsel %vm255, %v3898, 0.0
    %3999 = vadd.xlane.f32.xlu0 %v3998
    %v4000 = vpop.xlane.xlu0 %3999
    %v4001 = vsel %vm255, %v3900, 0.0
    %4002 = vadd.xlane.f32.xlu0 %v4001
    %v4003 = vpop.xlane.xlu0 %4002
    %v4004 = vsel %vm255, %v3902, 0.0
    %4005 = vadd.xlane.f32.xlu0 %v4004
    %v4006 = vpop.xlane.xlu0 %4005
    %v4007 = vsel %vm255, %v3904, 0.0
    %4008 = vadd.xlane.f32.xlu0 %v4007
    %v4009 = vpop.xlane.xlu0 %4008
    %v4010 = vsel %vm255, %v3906, 0.0
    %4011 = vadd.xlane.f32.xlu0 %v4010
    %v4012 = vpop.xlane.xlu0 %4011
    %v4013 = vsel %vm255, %v3908, 0.0
    %4014 = vadd.xlane.f32.xlu0 %v4013
    %v4015 = vpop.xlane.xlu0 %4014
    %v4016 = vsel %vm255, %v3910, 0.0
    %4017 = vadd.xlane.f32.xlu0 %v4016
    %v4018 = vpop.xlane.xlu0 %4017
    %v4019 = vsel %vm255, %v3912, 0.0
    %4020 = vadd.xlane.f32.xlu0 %v4019
    %v4021 = vpop.xlane.xlu0 %4020
    %v4022 = vsel %vm255, %v3914, 0.0
    %4023 = vadd.xlane.f32.xlu0 %v4022
    %v4024 = vpop.xlane.xlu0 %4023
    %v4025 = vsel %vm255, %v3916, 0.0
    %4026 = vadd.xlane.f32.xlu0 %v4025
    %v4027 = vpop.xlane.xlu0 %4026
    %v4028 = vsel %vm255, %v3918, 0.0
    %4029 = vadd.xlane.f32.xlu0 %v4028
    %v4030 = vpop.xlane.xlu0 %4029
    %v4031 = vsel %vm255, %v3920, 0.0
    %4032 = vadd.xlane.f32.xlu0 %v4031
    %v4033 = vpop.xlane.xlu0 %4032
    %v4034 = vsel %vm255, %v3922, 0.0
    %4035 = vadd.xlane.f32.xlu0 %v4034
    %v4036 = vpop.xlane.xlu0 %4035
    %v4037 = vsel %vm255, %v3924, 0.0
    %4038 = vadd.xlane.f32.xlu0 %v4037
    %v4039 = vpop.xlane.xlu0 %4038
    %v4040 = vsel %vm255, %v3926, 0.0
    %4041 = vadd.xlane.f32.xlu0 %v4040
    %v4042 = vpop.xlane.xlu0 %4041
    %v4043 = vsel %vm255, %v3928, 0.0
    %4044 = vadd.xlane.f32.xlu0 %v4043
    %v4045 = vpop.xlane.xlu0 %4044
    %v4046 = vsel %vm255, %v3930, 0.0
    %4047 = vadd.xlane.f32.xlu0 %v4046
    %v4048 = vpop.xlane.xlu0 %4047
    %v4049 = vsel %vm255, %v3932, 0.0
    %4050 = vadd.xlane.f32.xlu0 %v4049
    %v4051 = vpop.xlane.xlu0 %4050
    %v4052 = vsel %vm255, %v3934, 0.0
    %4053 = vadd.xlane.f32.xlu0 %v4052
    %v4054 = vpop.xlane.xlu0 %4053
    %v4055 = vsel %vm255, %v3936, 0.0
    %4056 = vadd.xlane.f32.xlu0 %v4055
    %v4057 = vpop.xlane.xlu0 %4056
    %v4058 = vsel %vm255, %v3938, 0.0
    %4059 = vadd.xlane.f32.xlu0 %v4058
    %v4060 = vpop.xlane.xlu0 %4059
    %v4061 = vsel %vm255, %v3940, 0.0
    %4062 = vadd.xlane.f32.xlu0 %v4061
    %v4063 = vpop.xlane.xlu0 %4062
    %v4064 = vsel %vm255, %v3942, 0.0
    %4065 = vadd.xlane.f32.xlu0 %v4064
    %v4066 = vpop.xlane.xlu0 %4065
    %v4067 = vsel %vm255, %v3944, 0.0
    %4068 = vadd.xlane.f32.xlu0 %v4067
    %v4069 = vpop.xlane.xlu0 %4068
    %v4070 = vsel %vm255, %v3946, 0.0
    %4071 = vadd.xlane.f32.xlu0 %v4070
    %v4072 = vpop.xlane.xlu0 %4071
    %v4073 = vsel %vm255, %v3948, 0.0
    %4074 = vadd.xlane.f32.xlu0 %v4073
    %v4075 = vpop.xlane.xlu0 %4074
    %v4076 = vsel %vm255, %v3950, 0.0
    %4077 = vadd.xlane.f32.xlu0 %v4076
    %v4078 = vpop.xlane.xlu0 %4077
    %v4079 = vld [vmem:[#allocation3] sm:$0x1]
    %v4081 = vlaneseq
    %v4082 = vshrl.u32 %v4081, 7
    %v4083 = vsub.s32 0, %v4082
    %v4084 = vrot.slane %v4079, %v4083
    %4085 = vset.pattern.permute.xlu0 0
    %4086 = vperm.xlu0 %4085, %v4084
    %v4087 = vpop.permute.xlu0 %4086
    %v4089 = vadd.f32 %v3985, %v4087
    %v4090 = vadd.f32 %v3988, %v4087
    %v4091 = vadd.f32 %v3991, %v4087
    %v4092 = vadd.f32 %v3994, %v4087
    %v4093 = vadd.f32 %v3997, %v4087
    %v4094 = vadd.f32 %v4000, %v4087
    %v4095 = vadd.f32 %v4003, %v4087
    %v4096 = vadd.f32 %v4006, %v4087
    %v4097 = vadd.f32 %v4009, %v4087
    %v4098 = vadd.f32 %v4012, %v4087
    %v4099 = vadd.f32 %v4015, %v4087
    %v4100 = vadd.f32 %v4018, %v4087
    %v4101 = vadd.f32 %v4021, %v4087
    %v4102 = vadd.f32 %v4024, %v4087
    %v4103 = vadd.f32 %v4027, %v4087
    %v4104 = vadd.f32 %v4030, %v4087
    %v4105 = vadd.f32 %v4033, %v4087
    %v4106 = vadd.f32 %v4036, %v4087
    %v4107 = vadd.f32 %v4039, %v4087
    %v4108 = vadd.f32 %v4042, %v4087
    %v4109 = vadd.f32 %v4045, %v4087
    %v4110 = vadd.f32 %v4048, %v4087
    %v4111 = vadd.f32 %v4051, %v4087
    %v4112 = vadd.f32 %v4054, %v4087
    %v4113 = vadd.f32 %v4057, %v4087
    %v4114 = vadd.f32 %v4060, %v4087
    %v4115 = vadd.f32 %v4063, %v4087
    %v4116 = vadd.f32 %v4066, %v4087
    %v4117 = vadd.f32 %v4069, %v4087
    %v4118 = vadd.f32 %v4072, %v4087
    %v4119 = vadd.f32 %v4075, %v4087
    %v4120 = vadd.f32 %v4078, %v4087
    %v4153 = vlaneseq
    %v4154 = vshrl.u32 %v4153, 7
    %v4155 = vsub.s32 %v1369, %v4154
    %v4156 = vrot.slane %v4089, %v4155
    %v4157 = vlaneseq
    %v4158 = vshrl.u32 %v4157, 7
    %v4159 = vsub.s32 %v1374, %v4158
    %v4160 = vrot.slane %v4090, %v4159
    %v4161 = vsel %vm1379, %v4160, %v4156
    %v4162 = vlaneseq
    %v4163 = vshrl.u32 %v4162, 7
    %v4164 = vsub.s32 %v1381, %v4163
    %v4165 = vrot.slane %v4091, %v4164
    %v4166 = vsel %vm1386, %v4165, %v4161
    %v4167 = vlaneseq
    %v4168 = vshrl.u32 %v4167, 7
    %v4169 = vsub.s32 %v1388, %v4168
    %v4170 = vrot.slane %v4092, %v4169
    %v4171 = vsel %vm1393, %v4170, %v4166
    %v4172 = vlaneseq
    %v4173 = vshrl.u32 %v4172, 7
    %v4174 = vsub.s32 %v1369, %v4173
    %v4175 = vrot.slane %v4093, %v4174
    %v4176 = vlaneseq
    %v4177 = vshrl.u32 %v4176, 7
    %v4178 = vsub.s32 %v1374, %v4177
    %v4179 = vrot.slane %v4094, %v4178
    %v4180 = vsel %vm1379, %v4179, %v4175
    %v4181 = vlaneseq
    %v4182 = vshrl.u32 %v4181, 7
    %v4183 = vsub.s32 %v1381, %v4182
    %v4184 = vrot.slane %v4095, %v4183
    %v4185 = vsel %vm1386, %v4184, %v4180
    %v4186 = vlaneseq
    %v4187 = vshrl.u32 %v4186, 7
    %v4188 = vsub.s32 %v1388, %v4187
    %v4189 = vrot.slane %v4096, %v4188
    %v4190 = vsel %vm1393, %v4189, %v4185
    %v4191 = vlaneseq
    %v4192 = vshrl.u32 %v4191, 7
    %v4193 = vsub.s32 %v1369, %v4192
    %v4194 = vrot.slane %v4097, %v4193
    %v4195 = vlaneseq
    %v4196 = vshrl.u32 %v4195, 7
    %v4197 = vsub.s32 %v1374, %v4196
    %v4198 = vrot.slane %v4098, %v4197
    %v4199 = vsel %vm1379, %v4198, %v4194
    %v4200 = vlaneseq
    %v4201 = vshrl.u32 %v4200, 7
    %v4202 = vsub.s32 %v1381, %v4201
    %v4203 = vrot.slane %v4099, %v4202
    %v4204 = vsel %vm1386, %v4203, %v4199
    %v4205 = vlaneseq
    %v4206 = vshrl.u32 %v4205, 7
    %v4207 = vsub.s32 %v1388, %v4206
    %v4208 = vrot.slane %v4100, %v4207
    %v4209 = vsel %vm1393, %v4208, %v4204
    %v4210 = vlaneseq
    %v4211 = vshrl.u32 %v4210, 7
    %v4212 = vsub.s32 %v1369, %v4211
    %v4213 = vrot.slane %v4101, %v4212
    %v4214 = vlaneseq
    %v4215 = vshrl.u32 %v4214, 7
    %v4216 = vsub.s32 %v1374, %v4215
    %v4217 = vrot.slane %v4102, %v4216
    %v4218 = vsel %vm1379, %v4217, %v4213
    %v4219 = vlaneseq
    %v4220 = vshrl.u32 %v4219, 7
    %v4221 = vsub.s32 %v1381, %v4220
    %v4222 = vrot.slane %v4103, %v4221
    %v4223 = vsel %vm1386, %v4222, %v4218
    %v4224 = vlaneseq
    %v4225 = vshrl.u32 %v4224, 7
    %v4226 = vsub.s32 %v1388, %v4225
    %v4227 = vrot.slane %v4104, %v4226
    %v4228 = vsel %vm1393, %v4227, %v4223
    %v4229 = vlaneseq
    %v4230 = vshrl.u32 %v4229, 7
    %v4231 = vsub.s32 %v1369, %v4230
    %v4232 = vrot.slane %v4105, %v4231
    %v4233 = vlaneseq
    %v4234 = vshrl.u32 %v4233, 7
    %v4235 = vsub.s32 %v1374, %v4234
    %v4236 = vrot.slane %v4106, %v4235
    %v4237 = vsel %vm1379, %v4236, %v4232
    %v4238 = vlaneseq
    %v4239 = vshrl.u32 %v4238, 7
    %v4240 = vsub.s32 %v1381, %v4239
    %v4241 = vrot.slane %v4107, %v4240
    %v4242 = vsel %vm1386, %v4241, %v4237
    %v4243 = vlaneseq
    %v4244 = vshrl.u32 %v4243, 7
    %v4245 = vsub.s32 %v1388, %v4244
    %v4246 = vrot.slane %v4108, %v4245
    %v4247 = vsel %vm1393, %v4246, %v4242
    %v4248 = vlaneseq
    %v4249 = vshrl.u32 %v4248, 7
    %v4250 = vsub.s32 %v1369, %v4249
    %v4251 = vrot.slane %v4109, %v4250
    %v4252 = vlaneseq
    %v4253 = vshrl.u32 %v4252, 7
    %v4254 = vsub.s32 %v1374, %v4253
    %v4255 = vrot.slane %v4110, %v4254
    %v4256 = vsel %vm1379, %v4255, %v4251
    %v4257 = vlaneseq
    %v4258 = vshrl.u32 %v4257, 7
    %v4259 = vsub.s32 %v1381, %v4258
    %v4260 = vrot.slane %v4111, %v4259
    %v4261 = vsel %vm1386, %v4260, %v4256
    %v4262 = vlaneseq
    %v4263 = vshrl.u32 %v4262, 7
    %v4264 = vsub.s32 %v1388, %v4263
    %v4265 = vrot.slane %v4112, %v4264
    %v4266 = vsel %vm1393, %v4265, %v4261
    %v4267 = vlaneseq
    %v4268 = vshrl.u32 %v4267, 7
    %v4269 = vsub.s32 %v1369, %v4268
    %v4270 = vrot.slane %v4113, %v4269
    %v4271 = vlaneseq
    %v4272 = vshrl.u32 %v4271, 7
    %v4273 = vsub.s32 %v1374, %v4272
    %v4274 = vrot.slane %v4114, %v4273
    %v4275 = vsel %vm1379, %v4274, %v4270
    %v4276 = vlaneseq
    %v4277 = vshrl.u32 %v4276, 7
    %v4278 = vsub.s32 %v1381, %v4277
    %v4279 = vrot.slane %v4115, %v4278
    %v4280 = vsel %vm1386, %v4279, %v4275
    %v4281 = vlaneseq
    %v4282 = vshrl.u32 %v4281, 7
    %v4283 = vsub.s32 %v1388, %v4282
    %v4284 = vrot.slane %v4116, %v4283
    %v4285 = vsel %vm1393, %v4284, %v4280
    %v4286 = vlaneseq
    %v4287 = vshrl.u32 %v4286, 7
    %v4288 = vsub.s32 %v1369, %v4287
    %v4289 = vrot.slane %v4117, %v4288
    %v4290 = vlaneseq
    %v4291 = vshrl.u32 %v4290, 7
    %v4292 = vsub.s32 %v1374, %v4291
    %v4293 = vrot.slane %v4118, %v4292
    %v4294 = vsel %vm1379, %v4293, %v4289
    %v4295 = vlaneseq
    %v4296 = vshrl.u32 %v4295, 7
    %v4297 = vsub.s32 %v1381, %v4296
    %v4298 = vrot.slane %v4119, %v4297
    %v4299 = vsel %vm1386, %v4298, %v4294
    %v4300 = vlaneseq
    %v4301 = vshrl.u32 %v4300, 7
    %v4302 = vsub.s32 %v1388, %v4301
    %v4303 = vrot.slane %v4120, %v4302
    %v4304 = vsel %vm1393, %v4303, %v4299
    %v4305 = vsel %vm1680, %v4190, %v4171
    %v4306 = vsel %vm1682, %v4209, %v4305
    %v4307 = vsel %vm1684, %v4228, %v4306
    %v4308 = vsel %vm1686, %v4247, %v4307
    %v4309 = vsel %vm1688, %v4266, %v4308
    %v4310 = vsel %vm1690, %v4285, %v4309
    %v4311 = vsel %vm1692, %v4304, %v4310
    %v4313 = vsel %vm255, %v4311, -inf
    %4314 = vmax.xlane.f32.xlu0 %v4313
    %v4315 = vpop.xlane.xlu0 %4314
    %v4317 = vlaneseq
    %v4318 = vshrl.u32 %v4317, 7
    %v4319 = vsub.s32 0, %v4318
    %v4320 = vrot.slane %v4315, %v4319
    %v4321 = vlaneseq
    %v4322 = vshrl.u32 %v4321, 7
    %v4323 = vsub.s32 1, %v4322
    %v4324 = vrot.slane %v4315, %v4323
    %v4325 = vlaneseq
    %v4326 = vshrl.u32 %v4325, 7
    %v4327 = vsub.s32 2, %v4326
    %v4328 = vrot.slane %v4315, %v4327
    %v4329 = vlaneseq
    %v4330 = vshrl.u32 %v4329, 7
    %v4331 = vsub.s32 3, %v4330
    %v4332 = vrot.slane %v4315, %v4331
    %v4333 = vlaneseq
    %v4334 = vshrl.u32 %v4333, 7
    %v4335 = vsub.s32 4, %v4334
    %v4336 = vrot.slane %v4315, %v4335
    %v4337 = vlaneseq
    %v4338 = vshrl.u32 %v4337, 7
    %v4339 = vsub.s32 5, %v4338
    %v4340 = vrot.slane %v4315, %v4339
    %v4341 = vlaneseq
    %v4342 = vshrl.u32 %v4341, 7
    %v4343 = vsub.s32 6, %v4342
    %v4344 = vrot.slane %v4315, %v4343
    %v4345 = vlaneseq
    %v4346 = vshrl.u32 %v4345, 7
    %v4347 = vsub.s32 7, %v4346
    %v4348 = vrot.slane %v4315, %v4347
    %v4357 = vsub.f32 %v4089, %v4320
    %v4358 = vsub.f32 %v4090, %v4320
    %v4359 = vsub.f32 %v4091, %v4320
    %v4360 = vsub.f32 %v4092, %v4320
    %v4361 = vsub.f32 %v4093, %v4324
    %v4362 = vsub.f32 %v4094, %v4324
    %v4363 = vsub.f32 %v4095, %v4324
    %v4364 = vsub.f32 %v4096, %v4324
    %v4365 = vsub.f32 %v4097, %v4328
    %v4366 = vsub.f32 %v4098, %v4328
    %v4367 = vsub.f32 %v4099, %v4328
    %v4368 = vsub.f32 %v4100, %v4328
    %v4369 = vsub.f32 %v4101, %v4332
    %v4370 = vsub.f32 %v4102, %v4332
    %v4371 = vsub.f32 %v4103, %v4332
    %v4372 = vsub.f32 %v4104, %v4332
    %v4373 = vsub.f32 %v4105, %v4336
    %v4374 = vsub.f32 %v4106, %v4336
    %v4375 = vsub.f32 %v4107, %v4336
    %v4376 = vsub.f32 %v4108, %v4336
    %v4377 = vsub.f32 %v4109, %v4340
    %v4378 = vsub.f32 %v4110, %v4340
    %v4379 = vsub.f32 %v4111, %v4340
    %v4380 = vsub.f32 %v4112, %v4340
    %v4381 = vsub.f32 %v4113, %v4344
    %v4382 = vsub.f32 %v4114, %v4344
    %v4383 = vsub.f32 %v4115, %v4344
    %v4384 = vsub.f32 %v4116, %v4344
    %v4385 = vsub.f32 %v4117, %v4348
    %v4386 = vsub.f32 %v4118, %v4348
    %v4387 = vsub.f32 %v4119, %v4348
    %v4388 = vsub.f32 %v4120, %v4348
    %v4389 = vmul.f32 %v4357, 1.442695
    %v4390 = vpow.pop %v4389
    %v4391 = vmul.f32 %v4358, 1.442695
    %v4392 = vpow.pop %v4391
    %v4393 = vmul.f32 %v4359, 1.442695
    %v4394 = vpow.pop %v4393
    %v4395 = vmul.f32 %v4360, 1.442695
    %v4396 = vpow.pop %v4395
    %v4397 = vmul.f32 %v4361, 1.442695
    %v4398 = vpow.pop %v4397
    %v4399 = vmul.f32 %v4362, 1.442695
    %v4400 = vpow.pop %v4399
    %v4401 = vmul.f32 %v4363, 1.442695
    %v4402 = vpow.pop %v4401
    %v4403 = vmul.f32 %v4364, 1.442695
    %v4404 = vpow.pop %v4403
    %v4405 = vmul.f32 %v4365, 1.442695
    %v4406 = vpow.pop %v4405
    %v4407 = vmul.f32 %v4366, 1.442695
    %v4408 = vpow.pop %v4407
    %v4409 = vmul.f32 %v4367, 1.442695
    %v4410 = vpow.pop %v4409
    %v4411 = vmul.f32 %v4368, 1.442695
    %v4412 = vpow.pop %v4411
    %v4413 = vmul.f32 %v4369, 1.442695
    %v4414 = vpow.pop %v4413
    %v4415 = vmul.f32 %v4370, 1.442695
    %v4416 = vpow.pop %v4415
    %v4417 = vmul.f32 %v4371, 1.442695
    %v4418 = vpow.pop %v4417
    %v4419 = vmul.f32 %v4372, 1.442695
    %v4420 = vpow.pop %v4419
    %v4421 = vmul.f32 %v4373, 1.442695
    %v4422 = vpow.pop %v4421
    %v4423 = vmul.f32 %v4374, 1.442695
    %v4424 = vpow.pop %v4423
    %v4425 = vmul.f32 %v4375, 1.442695
    %v4426 = vpow.pop %v4425
    %v4427 = vmul.f32 %v4376, 1.442695
    %v4428 = vpow.pop %v4427
    %v4429 = vmul.f32 %v4377, 1.442695
    %v4430 = vpow.pop %v4429
    %v4431 = vmul.f32 %v4378, 1.442695
    %v4432 = vpow.pop %v4431
    %v4433 = vmul.f32 %v4379, 1.442695
    %v4434 = vpow.pop %v4433
    %v4435 = vmul.f32 %v4380, 1.442695
    %v4436 = vpow.pop %v4435
    %v4437 = vmul.f32 %v4381, 1.442695
    %v4438 = vpow.pop %v4437
    %v4439 = vmul.f32 %v4382, 1.442695
    %v4440 = vpow.pop %v4439
    %v4441 = vmul.f32 %v4383, 1.442695
    %v4442 = vpow.pop %v4441
    %v4443 = vmul.f32 %v4384, 1.442695
    %v4444 = vpow.pop %v4443
    %v4445 = vmul.f32 %v4385, 1.442695
    %v4446 = vpow.pop %v4445
    %v4447 = vmul.f32 %v4386, 1.442695
    %v4448 = vpow.pop %v4447
    %v4449 = vmul.f32 %v4387, 1.442695
    %v4450 = vpow.pop %v4449
    %v4451 = vmul.f32 %v4388, 1.442695
    %v4452 = vpow.pop %v4451
    %4485 = vset.pattern.permute.xlu0 0
    %4486 = vperm.xlu0 %4485, %v4390
    %v4487 = vpop.permute.xlu0 %4486
    %4488 = vset.pattern.permute.xlu0 0
    %4489 = vperm.xlu0 %4488, %v4392
    %v4490 = vpop.permute.xlu0 %4489
    %4491 = vset.pattern.permute.xlu0 0
    %4492 = vperm.xlu0 %4491, %v4394
    %v4493 = vpop.permute.xlu0 %4492
    %4494 = vset.pattern.permute.xlu0 0
    %4495 = vperm.xlu0 %4494, %v4396
    %v4496 = vpop.permute.xlu0 %4495
    %4497 = vset.pattern.permute.xlu0 0
    %4498 = vperm.xlu0 %4497, %v4398
    %v4499 = vpop.permute.xlu0 %4498
    %4500 = vset.pattern.permute.xlu0 0
    %4501 = vperm.xlu0 %4500, %v4400
    %v4502 = vpop.permute.xlu0 %4501
    %4503 = vset.pattern.permute.xlu0 0
    %4504 = vperm.xlu0 %4503, %v4402
    %v4505 = vpop.permute.xlu0 %4504
    %4506 = vset.pattern.permute.xlu0 0
    %4507 = vperm.xlu0 %4506, %v4404
    %v4508 = vpop.permute.xlu0 %4507
    %4509 = vset.pattern.permute.xlu0 0
    %4510 = vperm.xlu0 %4509, %v4406
    %v4511 = vpop.permute.xlu0 %4510
    %4512 = vset.pattern.permute.xlu0 0
    %4513 = vperm.xlu0 %4512, %v4408
    %v4514 = vpop.permute.xlu0 %4513
    %4515 = vset.pattern.permute.xlu0 0
    %4516 = vperm.xlu0 %4515, %v4410
    %v4517 = vpop.permute.xlu0 %4516
    %4518 = vset.pattern.permute.xlu0 0
    %4519 = vperm.xlu0 %4518, %v4412
    %v4520 = vpop.permute.xlu0 %4519
    %4521 = vset.pattern.permute.xlu0 0
    %4522 = vperm.xlu0 %4521, %v4414
    %v4523 = vpop.permute.xlu0 %4522
    %4524 = vset.pattern.permute.xlu0 0
    %4525 = vperm.xlu0 %4524, %v4416
    %v4526 = vpop.permute.xlu0 %4525
    %4527 = vset.pattern.permute.xlu0 0
    %4528 = vperm.xlu0 %4527, %v4418
    %v4529 = vpop.permute.xlu0 %4528
    %4530 = vset.pattern.permute.xlu0 0
    %4531 = vperm.xlu0 %4530, %v4420
    %v4532 = vpop.permute.xlu0 %4531
    %4533 = vset.pattern.permute.xlu0 0
    %4534 = vperm.xlu0 %4533, %v4422
    %v4535 = vpop.permute.xlu0 %4534
    %4536 = vset.pattern.permute.xlu0 0
    %4537 = vperm.xlu0 %4536, %v4424
    %v4538 = vpop.permute.xlu0 %4537
    %4539 = vset.pattern.permute.xlu0 0
    %4540 = vperm.xlu0 %4539, %v4426
    %v4541 = vpop.permute.xlu0 %4540
    %4542 = vset.pattern.permute.xlu0 0
    %4543 = vperm.xlu0 %4542, %v4428
    %v4544 = vpop.permute.xlu0 %4543
    %4545 = vset.pattern.permute.xlu0 0
    %4546 = vperm.xlu0 %4545, %v4430
    %v4547 = vpop.permute.xlu0 %4546
    %4548 = vset.pattern.permute.xlu0 0
    %4549 = vperm.xlu0 %4548, %v4432
    %v4550 = vpop.permute.xlu0 %4549
    %4551 = vset.pattern.permute.xlu0 0
    %4552 = vperm.xlu0 %4551, %v4434
    %v4553 = vpop.permute.xlu0 %4552
    %4554 = vset.pattern.permute.xlu0 0
    %4555 = vperm.xlu0 %4554, %v4436
    %v4556 = vpop.permute.xlu0 %4555
    %4557 = vset.pattern.permute.xlu0 0
    %4558 = vperm.xlu0 %4557, %v4438
    %v4559 = vpop.permute.xlu0 %4558
    %4560 = vset.pattern.permute.xlu0 0
    %4561 = vperm.xlu0 %4560, %v4440
    %v4562 = vpop.permute.xlu0 %4561
    %4563 = vset.pattern.permute.xlu0 0
    %4564 = vperm.xlu0 %4563, %v4442
    %v4565 = vpop.permute.xlu0 %4564
    %4566 = vset.pattern.permute.xlu0 0
    %4567 = vperm.xlu0 %4566, %v4444
    %v4568 = vpop.permute.xlu0 %4567
    %4569 = vset.pattern.permute.xlu0 0
    %4570 = vperm.xlu0 %4569, %v4446
    %v4571 = vpop.permute.xlu0 %4570
    %4572 = vset.pattern.permute.xlu0 0
    %4573 = vperm.xlu0 %4572, %v4448
    %v4574 = vpop.permute.xlu0 %4573
    %4575 = vset.pattern.permute.xlu0 0
    %4576 = vperm.xlu0 %4575, %v4450
    %v4577 = vpop.permute.xlu0 %4576
    %4578 = vset.pattern.permute.xlu0 0
    %4579 = vperm.xlu0 %4578, %v4452
    %v4580 = vpop.permute.xlu0 %4579
    %v4581 = vlaneseq
    %v4582 = vshrl.u32 %v4581, 7
    %v4583 = vsub.s32 %v1369, %v4582
    %v4584 = vrot.slane %v4487, %v4583
    %v4585 = vlaneseq
    %v4586 = vshrl.u32 %v4585, 7
    %v4587 = vsub.s32 %v1374, %v4586
    %v4588 = vrot.slane %v4490, %v4587
    %v4589 = vsel %vm1379, %v4588, %v4584
    %v4590 = vlaneseq
    %v4591 = vshrl.u32 %v4590, 7
    %v4592 = vsub.s32 %v1381, %v4591
    %v4593 = vrot.slane %v4493, %v4592
    %v4594 = vsel %vm1386, %v4593, %v4589
    %v4595 = vlaneseq
    %v4596 = vshrl.u32 %v4595, 7
    %v4597 = vsub.s32 %v1388, %v4596
    %v4598 = vrot.slane %v4496, %v4597
    %v4599 = vsel %vm1393, %v4598, %v4594
    %v4600 = vlaneseq
    %v4601 = vshrl.u32 %v4600, 7
    %v4602 = vsub.s32 %v1369, %v4601
    %v4603 = vrot.slane %v4499, %v4602
    %v4604 = vlaneseq
    %v4605 = vshrl.u32 %v4604, 7
    %v4606 = vsub.s32 %v1374, %v4605
    %v4607 = vrot.slane %v4502, %v4606
    %v4608 = vsel %vm1379, %v4607, %v4603
    %v4609 = vlaneseq
    %v4610 = vshrl.u32 %v4609, 7
    %v4611 = vsub.s32 %v1381, %v4610
    %v4612 = vrot.slane %v4505, %v4611
    %v4613 = vsel %vm1386, %v4612, %v4608
    %v4614 = vlaneseq
    %v4615 = vshrl.u32 %v4614, 7
    %v4616 = vsub.s32 %v1388, %v4615
    %v4617 = vrot.slane %v4508, %v4616
    %v4618 = vsel %vm1393, %v4617, %v4613
    %v4619 = vlaneseq
    %v4620 = vshrl.u32 %v4619, 7
    %v4621 = vsub.s32 %v1369, %v4620
    %v4622 = vrot.slane %v4511, %v4621
    %v4623 = vlaneseq
    %v4624 = vshrl.u32 %v4623, 7
    %v4625 = vsub.s32 %v1374, %v4624
    %v4626 = vrot.slane %v4514, %v4625
    %v4627 = vsel %vm1379, %v4626, %v4622
    %v4628 = vlaneseq
    %v4629 = vshrl.u32 %v4628, 7
    %v4630 = vsub.s32 %v1381, %v4629
    %v4631 = vrot.slane %v4517, %v4630
    %v4632 = vsel %vm1386, %v4631, %v4627
    %v4633 = vlaneseq
    %v4634 = vshrl.u32 %v4633, 7
    %v4635 = vsub.s32 %v1388, %v4634
    %v4636 = vrot.slane %v4520, %v4635
    %v4637 = vsel %vm1393, %v4636, %v4632
    %v4638 = vlaneseq
    %v4639 = vshrl.u32 %v4638, 7
    %v4640 = vsub.s32 %v1369, %v4639
    %v4641 = vrot.slane %v4523, %v4640
    %v4642 = vlaneseq
    %v4643 = vshrl.u32 %v4642, 7
    %v4644 = vsub.s32 %v1374, %v4643
    %v4645 = vrot.slane %v4526, %v4644
    %v4646 = vsel %vm1379, %v4645, %v4641
    %v4647 = vlaneseq
    %v4648 = vshrl.u32 %v4647, 7
    %v4649 = vsub.s32 %v1381, %v4648
    %v4650 = vrot.slane %v4529, %v4649
    %v4651 = vsel %vm1386, %v4650, %v4646
    %v4652 = vlaneseq
    %v4653 = vshrl.u32 %v4652, 7
    %v4654 = vsub.s32 %v1388, %v4653
    %v4655 = vrot.slane %v4532, %v4654
    %v4656 = vsel %vm1393, %v4655, %v4651
    %v4657 = vlaneseq
    %v4658 = vshrl.u32 %v4657, 7
    %v4659 = vsub.s32 %v1369, %v4658
    %v4660 = vrot.slane %v4535, %v4659
    %v4661 = vlaneseq
    %v4662 = vshrl.u32 %v4661, 7
    %v4663 = vsub.s32 %v1374, %v4662
    %v4664 = vrot.slane %v4538, %v4663
    %v4665 = vsel %vm1379, %v4664, %v4660
    %v4666 = vlaneseq
    %v4667 = vshrl.u32 %v4666, 7
    %v4668 = vsub.s32 %v1381, %v4667
    %v4669 = vrot.slane %v4541, %v4668
    %v4670 = vsel %vm1386, %v4669, %v4665
    %v4671 = vlaneseq
    %v4672 = vshrl.u32 %v4671, 7
    %v4673 = vsub.s32 %v1388, %v4672
    %v4674 = vrot.slane %v4544, %v4673
    %v4675 = vsel %vm1393, %v4674, %v4670
    %v4676 = vlaneseq
    %v4677 = vshrl.u32 %v4676, 7
    %v4678 = vsub.s32 %v1369, %v4677
    %v4679 = vrot.slane %v4547, %v4678
    %v4680 = vlaneseq
    %v4681 = vshrl.u32 %v4680, 7
    %v4682 = vsub.s32 %v1374, %v4681
    %v4683 = vrot.slane %v4550, %v4682
    %v4684 = vsel %vm1379, %v4683, %v4679
    %v4685 = vlaneseq
    %v4686 = vshrl.u32 %v4685, 7
    %v4687 = vsub.s32 %v1381, %v4686
    %v4688 = vrot.slane %v4553, %v4687
    %v4689 = vsel %vm1386, %v4688, %v4684
    %v4690 = vlaneseq
    %v4691 = vshrl.u32 %v4690, 7
    %v4692 = vsub.s32 %v1388, %v4691
    %v4693 = vrot.slane %v4556, %v4692
    %v4694 = vsel %vm1393, %v4693, %v4689
    %v4695 = vlaneseq
    %v4696 = vshrl.u32 %v4695, 7
    %v4697 = vsub.s32 %v1369, %v4696
    %v4698 = vrot.slane %v4559, %v4697
    %v4699 = vlaneseq
    %v4700 = vshrl.u32 %v4699, 7
    %v4701 = vsub.s32 %v1374, %v4700
    %v4702 = vrot.slane %v4562, %v4701
    %v4703 = vsel %vm1379, %v4702, %v4698
    %v4704 = vlaneseq
    %v4705 = vshrl.u32 %v4704, 7
    %v4706 = vsub.s32 %v1381, %v4705
    %v4707 = vrot.slane %v4565, %v4706
    %v4708 = vsel %vm1386, %v4707, %v4703
    %v4709 = vlaneseq
    %v4710 = vshrl.u32 %v4709, 7
    %v4711 = vsub.s32 %v1388, %v4710
    %v4712 = vrot.slane %v4568, %v4711
    %v4713 = vsel %vm1393, %v4712, %v4708
    %v4714 = vlaneseq
    %v4715 = vshrl.u32 %v4714, 7
    %v4716 = vsub.s32 %v1369, %v4715
    %v4717 = vrot.slane %v4571, %v4716
    %v4718 = vlaneseq
    %v4719 = vshrl.u32 %v4718, 7
    %v4720 = vsub.s32 %v1374, %v4719
    %v4721 = vrot.slane %v4574, %v4720
    %v4722 = vsel %vm1379, %v4721, %v4717
    %v4723 = vlaneseq
    %v4724 = vshrl.u32 %v4723, 7
    %v4725 = vsub.s32 %v1381, %v4724
    %v4726 = vrot.slane %v4577, %v4725
    %v4727 = vsel %vm1386, %v4726, %v4722
    %v4728 = vlaneseq
    %v4729 = vshrl.u32 %v4728, 7
    %v4730 = vsub.s32 %v1388, %v4729
    %v4731 = vrot.slane %v4580, %v4730
    %v4732 = vsel %vm1393, %v4731, %v4727
    %v4733 = vsel %vm1680, %v4618, %v4599
    %v4734 = vsel %vm1682, %v4637, %v4733
    %v4735 = vsel %vm1684, %v4656, %v4734
    %v4736 = vsel %vm1686, %v4675, %v4735
    %v4737 = vsel %vm1688, %v4694, %v4736
    %v4738 = vsel %vm1690, %v4713, %v4737
    %v4739 = vsel %vm1692, %v4732, %v4738
    %v4741 = vsel %vm255, %v4739, 0.0
    %4742 = vadd.xlane.f32.xlu0 %v4741
    %v4743 = vpop.xlane.xlu0 %4742
    %v4745 = vlaneseq
    %v4746 = vshrl.u32 %v4745, 7
    %v4747 = vsub.s32 0, %v4746
    %v4748 = vrot.slane %v4743, %v4747
    %v4749 = vlaneseq
    %v4750 = vshrl.u32 %v4749, 7
    %v4751 = vsub.s32 1, %v4750
    %v4752 = vrot.slane %v4743, %v4751
    %v4753 = vlaneseq
    %v4754 = vshrl.u32 %v4753, 7
    %v4755 = vsub.s32 2, %v4754
    %v4756 = vrot.slane %v4743, %v4755
    %v4757 = vlaneseq
    %v4758 = vshrl.u32 %v4757, 7
    %v4759 = vsub.s32 3, %v4758
    %v4760 = vrot.slane %v4743, %v4759
    %v4761 = vlaneseq
    %v4762 = vshrl.u32 %v4761, 7
    %v4763 = vsub.s32 4, %v4762
    %v4764 = vrot.slane %v4743, %v4763
    %v4765 = vlaneseq
    %v4766 = vshrl.u32 %v4765, 7
    %v4767 = vsub.s32 5, %v4766
    %v4768 = vrot.slane %v4743, %v4767
    %v4769 = vlaneseq
    %v4770 = vshrl.u32 %v4769, 7
    %v4771 = vsub.s32 6, %v4770
    %v4772 = vrot.slane %v4743, %v4771
    %v4773 = vlaneseq
    %v4774 = vshrl.u32 %v4773, 7
    %v4775 = vsub.s32 7, %v4774
    %v4776 = vrot.slane %v4743, %v4775
    %v4785 = vrcp.pop %v4748
    %v4786 = vmul.f32 %v4390, %v4785
    %v4787 = vmul.f32 %v4392, %v4785
    %v4788 = vmul.f32 %v4394, %v4785
    %v4789 = vmul.f32 %v4396, %v4785
    %v4790 = vrcp.pop %v4752
    %v4791 = vmul.f32 %v4398, %v4790
    %v4792 = vmul.f32 %v4400, %v4790
    %v4793 = vmul.f32 %v4402, %v4790
    %v4794 = vmul.f32 %v4404, %v4790
    %v4795 = vrcp.pop %v4756
    %v4796 = vmul.f32 %v4406, %v4795
    %v4797 = vmul.f32 %v4408, %v4795
    %v4798 = vmul.f32 %v4410, %v4795
    %v4799 = vmul.f32 %v4412, %v4795
    %v4800 = vrcp.pop %v4760
    %v4801 = vmul.f32 %v4414, %v4800
    %v4802 = vmul.f32 %v4416, %v4800
    %v4803 = vmul.f32 %v4418, %v4800
    %v4804 = vmul.f32 %v4420, %v4800
    %v4805 = vrcp.pop %v4764
    %v4806 = vmul.f32 %v4422, %v4805
    %v4807 = vmul.f32 %v4424, %v4805
    %v4808 = vmul.f32 %v4426, %v4805
    %v4809 = vmul.f32 %v4428, %v4805
    %v4810 = vrcp.pop %v4768
    %v4811 = vmul.f32 %v4430, %v4810
    %v4812 = vmul.f32 %v4432, %v4810
    %v4813 = vmul.f32 %v4434, %v4810
    %v4814 = vmul.f32 %v4436, %v4810
    %v4815 = vrcp.pop %v4772
    %v4816 = vmul.f32 %v4438, %v4815
    %v4817 = vmul.f32 %v4440, %v4815
    %v4818 = vmul.f32 %v4442, %v4815
    %v4819 = vmul.f32 %v4444, %v4815
    %v4820 = vrcp.pop %v4776
    %v4821 = vmul.f32 %v4446, %v4820
    %v4822 = vmul.f32 %v4448, %v4820
    %v4823 = vmul.f32 %v4450, %v4820
    %v4824 = vmul.f32 %v4452, %v4820
    %4826 = vset.pattern.permute.xlu0 0
    %4827 = vperm.xlu0 %4826, %v4786
    %v4828 = vpop.permute.xlu0 %4827
    %4831 = vset.pattern.permute.xlu0 0
    %4832 = vperm.xlu0 %4831, %v4787
    %v4833 = vpop.permute.xlu0 %4832
    %4836 = vset.pattern.permute.xlu0 0
    %4837 = vperm.xlu0 %4836, %v4788
    %v4838 = vpop.permute.xlu0 %4837
    %4841 = vset.pattern.permute.xlu0 0
    %4842 = vperm.xlu0 %4841, %v4789
    %v4843 = vpop.permute.xlu0 %4842
    %4846 = vset.pattern.permute.xlu0 0
    %4847 = vperm.xlu0 %4846, %v4791
    %v4848 = vpop.permute.xlu0 %4847
    %4851 = vset.pattern.permute.xlu0 0
    %4852 = vperm.xlu0 %4851, %v4792
    %v4853 = vpop.permute.xlu0 %4852
    %4856 = vset.pattern.permute.xlu0 0
    %4857 = vperm.xlu0 %4856, %v4793
    %v4858 = vpop.permute.xlu0 %4857
    %4861 = vset.pattern.permute.xlu0 0
    %4862 = vperm.xlu0 %4861, %v4794
    %v4863 = vpop.permute.xlu0 %4862
    %4866 = vset.pattern.permute.xlu0 0
    %4867 = vperm.xlu0 %4866, %v4796
    %v4868 = vpop.permute.xlu0 %4867
    %4871 = vset.pattern.permute.xlu0 0
    %4872 = vperm.xlu0 %4871, %v4797
    %v4873 = vpop.permute.xlu0 %4872
    %4876 = vset.pattern.permute.xlu0 0
    %4877 = vperm.xlu0 %4876, %v4798
    %v4878 = vpop.permute.xlu0 %4877
    %4881 = vset.pattern.permute.xlu0 0
    %4882 = vperm.xlu0 %4881, %v4799
    %v4883 = vpop.permute.xlu0 %4882
    %4886 = vset.pattern.permute.xlu0 0
    %4887 = vperm.xlu0 %4886, %v4801
    %v4888 = vpop.permute.xlu0 %4887
    %4891 = vset.pattern.permute.xlu0 0
    %4892 = vperm.xlu0 %4891, %v4802
    %v4893 = vpop.permute.xlu0 %4892
    %4896 = vset.pattern.permute.xlu0 0
    %4897 = vperm.xlu0 %4896, %v4803
    %v4898 = vpop.permute.xlu0 %4897
    %4901 = vset.pattern.permute.xlu0 0
    %4902 = vperm.xlu0 %4901, %v4804
    %v4903 = vpop.permute.xlu0 %4902
    %4906 = vset.pattern.permute.xlu0 0
    %4907 = vperm.xlu0 %4906, %v4806
    %v4908 = vpop.permute.xlu0 %4907
    %4911 = vset.pattern.permute.xlu0 0
    %4912 = vperm.xlu0 %4911, %v4807
    %v4913 = vpop.permute.xlu0 %4912
    %4916 = vset.pattern.permute.xlu0 0
    %4917 = vperm.xlu0 %4916, %v4808
    %v4918 = vpop.permute.xlu0 %4917
    %4921 = vset.pattern.permute.xlu0 0
    %4922 = vperm.xlu0 %4921, %v4809
    %v4923 = vpop.permute.xlu0 %4922
    %4926 = vset.pattern.permute.xlu0 0
    %4927 = vperm.xlu0 %4926, %v4811
    %v4928 = vpop.permute.xlu0 %4927
    %4931 = vset.pattern.permute.xlu0 0
    %4932 = vperm.xlu0 %4931, %v4812
    %v4933 = vpop.permute.xlu0 %4932
    %4936 = vset.pattern.permute.xlu0 0
    %4937 = vperm.xlu0 %4936, %v4813
    %v4938 = vpop.permute.xlu0 %4937
    %4941 = vset.pattern.permute.xlu0 0
    %4942 = vperm.xlu0 %4941, %v4814
    %v4943 = vpop.permute.xlu0 %4942
    %4946 = vset.pattern.permute.xlu0 0
    %4947 = vperm.xlu0 %4946, %v4816
    %v4948 = vpop.permute.xlu0 %4947
    %4951 = vset.pattern.permute.xlu0 0
    %4952 = vperm.xlu0 %4951, %v4817
    %v4953 = vpop.permute.xlu0 %4952
    %4956 = vset.pattern.permute.xlu0 0
    %4957 = vperm.xlu0 %4956, %v4818
    %v4958 = vpop.permute.xlu0 %4957
    %4961 = vset.pattern.permute.xlu0 0
    %4962 = vperm.xlu0 %4961, %v4819
    %v4963 = vpop.permute.xlu0 %4962
    %4966 = vset.pattern.permute.xlu0 0
    %4967 = vperm.xlu0 %4966, %v4821
    %v4968 = vpop.permute.xlu0 %4967
    %4971 = vset.pattern.permute.xlu0 0
    %4972 = vperm.xlu0 %4971, %v4822
    %v4973 = vpop.permute.xlu0 %4972
    %4976 = vset.pattern.permute.xlu0 0
    %4977 = vperm.xlu0 %4976, %v4823
    %v4978 = vpop.permute.xlu0 %4977
    %4981 = vset.pattern.permute.xlu0 0
    %4982 = vperm.xlu0 %4981, %v4824
    %v4983 = vpop.permute.xlu0 %4982
    %v4985 = vmul.f32 %v184, %v4828
    %v4986 = vmul.f32 %v185, %v4833
    %v4987 = vmul.f32 %v186, %v4838
    %v4988 = vmul.f32 %v187, %v4843
    %v4989 = vmul.f32 %v188, %v4848
    %v4990 = vmul.f32 %v189, %v4853
    %v4991 = vmul.f32 %v190, %v4858
    %v4992 = vmul.f32 %v191, %v4863
    %v4993 = vmul.f32 %v192, %v4868
    %v4994 = vmul.f32 %v193, %v4873
    %v4995 = vmul.f32 %v194, %v4878
    %v4996 = vmul.f32 %v195, %v4883
    %v4997 = vmul.f32 %v196, %v4888
    %v4998 = vmul.f32 %v197, %v4893
    %v4999 = vmul.f32 %v198, %v4898
    %v5000 = vmul.f32 %v199, %v4903
    %v5001 = vmul.f32 %v200, %v4908
    %v5002 = vmul.f32 %v201, %v4913
    %v5003 = vmul.f32 %v202, %v4918
    %v5004 = vmul.f32 %v203, %v4923
    %v5005 = vmul.f32 %v204, %v4928
    %v5006 = vmul.f32 %v205, %v4933
    %v5007 = vmul.f32 %v206, %v4938
    %v5008 = vmul.f32 %v207, %v4943
    %v5009 = vmul.f32 %v208, %v4948
    %v5010 = vmul.f32 %v209, %v4953
    %v5011 = vmul.f32 %v210, %v4958
    %v5012 = vmul.f32 %v211, %v4963
    %v5013 = vmul.f32 %v212, %v4968
    %v5014 = vmul.f32 %v213, %v4973
    %v5015 = vmul.f32 %v214, %v4978
    %v5016 = vmul.f32 %v215, %v4983
    %v5017 = vsel %vm255, %v4985, 0.0
    %v5018 = vsel %vm255, %v4986, 0.0
    %v5019 = vadd.f32 %v5017, %v5018
    %v5020 = vsel %vm255, %v4987, 0.0
    %v5021 = vadd.f32 %v5019, %v5020
    %v5022 = vsel %vm255, %v4988, 0.0
    %v5023 = vadd.f32 %v5021, %v5022
    %v5024 = vrot.slane %v5023, 4
    %v5025 = vadd.f32 %v5023, %v5024
    %v5026 = vrot.slane %v5025, 2
    %v5027 = vadd.f32 %v5025, %v5026
    %v5028 = vrot.slane %v5027, 1
    %v5029 = vadd.f32 %v5027, %v5028
    %v5030 = vsel %vm255, %v4989, 0.0
    %v5031 = vsel %vm255, %v4990, 0.0
    %v5032 = vadd.f32 %v5030, %v5031
    %v5033 = vsel %vm255, %v4991, 0.0
    %v5034 = vadd.f32 %v5032, %v5033
    %v5035 = vsel %vm255, %v4992, 0.0
    %v5036 = vadd.f32 %v5034, %v5035
    %v5037 = vrot.slane %v5036, 4
    %v5038 = vadd.f32 %v5036, %v5037
    %v5039 = vrot.slane %v5038, 2
    %v5040 = vadd.f32 %v5038, %v5039
    %v5041 = vrot.slane %v5040, 1
    %v5042 = vadd.f32 %v5040, %v5041
    %v5043 = vsel %vm255, %v4993, 0.0
    %v5044 = vsel %vm255, %v4994, 0.0
    %v5045 = vadd.f32 %v5043, %v5044
    %v5046 = vsel %vm255, %v4995, 0.0
    %v5047 = vadd.f32 %v5045, %v5046
    %v5048 = vsel %vm255, %v4996, 0.0
    %v5049 = vadd.f32 %v5047, %v5048
    %v5050 = vrot.slane %v5049, 4
    %v5051 = vadd.f32 %v5049, %v5050
    %v5052 = vrot.slane %v5051, 2
    %v5053 = vadd.f32 %v5051, %v5052
    %v5054 = vrot.slane %v5053, 1
    %v5055 = vadd.f32 %v5053, %v5054
    %v5056 = vsel %vm255, %v4997, 0.0
    %v5057 = vsel %vm255, %v4998, 0.0
    %v5058 = vadd.f32 %v5056, %v5057
    %v5059 = vsel %vm255, %v4999, 0.0
    %v5060 = vadd.f32 %v5058, %v5059
    %v5061 = vsel %vm255, %v5000, 0.0
    %v5062 = vadd.f32 %v5060, %v5061
    %v5063 = vrot.slane %v5062, 4
    %v5064 = vadd.f32 %v5062, %v5063
    %v5065 = vrot.slane %v5064, 2
    %v5066 = vadd.f32 %v5064, %v5065
    %v5067 = vrot.slane %v5066, 1
    %v5068 = vadd.f32 %v5066, %v5067
    %v5069 = vsel %vm255, %v5001, 0.0
    %v5070 = vsel %vm255, %v5002, 0.0
    %v5071 = vadd.f32 %v5069, %v5070
    %v5072 = vsel %vm255, %v5003, 0.0
    %v5073 = vadd.f32 %v5071, %v5072
    %v5074 = vsel %vm255, %v5004, 0.0
    %v5075 = vadd.f32 %v5073, %v5074
    %v5076 = vrot.slane %v5075, 4
    %v5077 = vadd.f32 %v5075, %v5076
    %v5078 = vrot.slane %v5077, 2
    %v5079 = vadd.f32 %v5077, %v5078
    %v5080 = vrot.slane %v5079, 1
    %v5081 = vadd.f32 %v5079, %v5080
    %v5082 = vsel %vm255, %v5005, 0.0
    %v5083 = vsel %vm255, %v5006, 0.0
    %v5084 = vadd.f32 %v5082, %v5083
    %v5085 = vsel %vm255, %v5007, 0.0
    %v5086 = vadd.f32 %v5084, %v5085
    %v5087 = vsel %vm255, %v5008, 0.0
    %v5088 = vadd.f32 %v5086, %v5087
    %v5089 = vrot.slane %v5088, 4
    %v5090 = vadd.f32 %v5088, %v5089
    %v5091 = vrot.slane %v5090, 2
    %v5092 = vadd.f32 %v5090, %v5091
    %v5093 = vrot.slane %v5092, 1
    %v5094 = vadd.f32 %v5092, %v5093
    %v5095 = vsel %vm255, %v5009, 0.0
    %v5096 = vsel %vm255, %v5010, 0.0
    %v5097 = vadd.f32 %v5095, %v5096
    %v5098 = vsel %vm255, %v5011, 0.0
    %v5099 = vadd.f32 %v5097, %v5098
    %v5100 = vsel %vm255, %v5012, 0.0
    %v5101 = vadd.f32 %v5099, %v5100
    %v5102 = vrot.slane %v5101, 4
    %v5103 = vadd.f32 %v5101, %v5102
    %v5104 = vrot.slane %v5103, 2
    %v5105 = vadd.f32 %v5103, %v5104
    %v5106 = vrot.slane %v5105, 1
    %v5107 = vadd.f32 %v5105, %v5106
    %v5108 = vsel %vm255, %v5013, 0.0
    %v5109 = vsel %vm255, %v5014, 0.0
    %v5110 = vadd.f32 %v5108, %v5109
    %v5111 = vsel %vm255, %v5015, 0.0
    %v5112 = vadd.f32 %v5110, %v5111
    %v5113 = vsel %vm255, %v5016, 0.0
    %v5114 = vadd.f32 %v5112, %v5113
    %v5115 = vrot.slane %v5114, 4
    %v5116 = vadd.f32 %v5114, %v5115
    %v5117 = vrot.slane %v5116, 2
    %v5118 = vadd.f32 %v5116, %v5117
    %v5119 = vrot.slane %v5118, 1
    %v5120 = vadd.f32 %v5118, %v5119
    %v5122 = vrot.slane %v3530, 1
    %v5123 = vrot.slane %v3530, 2
    %v5124 = vrot.slane %v3530, 3
    %v5125 = vrot.slane %v3530, 4
    %v5126 = vrot.slane %v3530, 5
    %v5127 = vrot.slane %v3530, 6
    %v5128 = vrot.slane %v3530, 7
    %v5137 = vadd.f32 %v5029, %v3530
    %v5138 = vadd.f32 %v5042, %v5122
    %v5139 = vadd.f32 %v5055, %v5123
    %v5140 = vadd.f32 %v5068, %v5124
    %v5141 = vadd.f32 %v5081, %v5125
    %v5142 = vadd.f32 %v5094, %v5126
    %v5143 = vadd.f32 %v5107, %v5127
    %v5144 = vadd.f32 %v5120, %v5128
    %5146 = vrot.lane.b32.xlu0 %v3523, 64
    %v5147 = vpop.permute.xlu0 %5146
    %5149 = vst.msk [vmem:[#allocation19] sm:$0xff] %vm255, %v5147
    %v5158 = vrot.slane %v5138, 7
    %v5159 = vsel %vm1680, %v5158, %v5137
    %v5160 = vrot.slane %v5139, 6
    %v5161 = vsel %vm1682, %v5160, %v5159
    %v5162 = vrot.slane %v5140, 5
    %v5163 = vsel %vm1684, %v5162, %v5161
    %v5164 = vrot.slane %v5141, 4
    %v5165 = vsel %vm1686, %v5164, %v5163
    %v5166 = vrot.slane %v5142, 3
    %v5167 = vsel %vm1688, %v5166, %v5165
    %v5168 = vrot.slane %v5143, 2
    %v5169 = vsel %vm1690, %v5168, %v5167
    %v5170 = vrot.slane %v5144, 1
    %v5171 = vsel %vm1692, %v5170, %v5169
    %5173 = vst.msk [vmem:[#allocation20] sm:$0xff] %vm255, %v5171
    %s5174 = scalar_lea.vmem %s2, 8
    %v5175 = vld [vmem:[%s5174] sm:$0xff]
    %s5176 = scalar_lea.vmem %s3, 8
    %v5177 = vld [vmem:[%s5176] sm:$0xff]
    %v5178 = vadd.f32 %v183, %v5171
    %5180 = vrot.lane.b32.xlu0 %v5177, 32
    %v5181 = vpop.permute.xlu0 %5180
    %v5191 = vsel %vm1680, %v3240, %v3227
    %v5192 = vsel %vm1682, %v3253, %v5191
    %v5193 = vsel %vm1684, %v3266, %v5192
    %v5194 = vsel %vm1686, %v3279, %v5193
    %v5195 = vsel %vm1688, %v3292, %v5194
    %v5196 = vsel %vm1690, %v3305, %v5195
    %v5197 = vsel %vm1692, %v3318, %v5196
    %5198 = vrot.lane.b32.xlu0 %v5197, 64
    %v5199 = vpop.permute.xlu0 %5198
    %v5201 = vsel %vm255, %v5178, %v5181
    %v5202 = vsel %vm3344, %v5201, %v5199
    %v5203 = vpack.c.bf16 %v5202, %v5202
    %s5204 = scalar_lea.vmem [#allocation18], 96
    %v5205 = vld [vmem:[%s5204] sm:$0xff]
    %v5206 = vld [vmem:[%s5204 + $0x8] sm:$0xff]
    %v5207 = vld [vmem:[%s5204 + $0x10] sm:$0xff]
    %v5208 = vld [vmem:[%s5204 + $0x18] sm:$0xff]
    %v5209 = vld [vmem:[%s5204 + $0x20] sm:$0xff]
    %v5210 = vld [vmem:[%s5204 + $0x28] sm:$0xff]
    %v5211 = vld [vmem:[%s5204 + $0x30] sm:$0xff]
    %v5212 = vld [vmem:[%s5204 + $0x38] sm:$0xff]
    %v5213 = vld [vmem:[%s5204 + $0x40] sm:$0xff]
    %v5214 = vld [vmem:[%s5204 + $0x48] sm:$0xff]
    %v5215 = vld [vmem:[%s5204 + $0x50] sm:$0xff]
    %v5216 = vld [vmem:[%s5204 + $0x58] sm:$0xff]
    %s5217 = scalar_lea.vmem %s15, 2
    %v5218 = vld [vmem:[%s5217] sm:$0x3]
    %v5220 = vlaneseq
    %v5221 = vshrl.u32 %v5220, 7
    %v5222 = vsub.s32 0, %v5221
    %v5223 = vrot.slane %v5218, %v5222
    %v5224 = vlaneseq
    %v5225 = vshrl.u32 %v5224, 7
    %v5226 = vsub.s32 1, %v5225
    %v5227 = vrot.slane %v5218, %v5226
    %v5242 = vunpack.c.l.b16 %v5205
    %v5243 = vunpack.c.h.b16 %v5205
    %v5244 = vunpack.c.l.b16 %v5206
    %v5245 = vunpack.c.h.b16 %v5206
    %v5246 = vunpack.c.l.b16 %v5207
    %v5247 = vunpack.c.h.b16 %v5207
    %v5248 = vunpack.c.l.b16 %v5208
    %v5249 = vunpack.c.h.b16 %v5208
    %v5250 = vunpack.c.l.b16 %v5209
    %v5251 = vunpack.c.h.b16 %v5209
    %v5252 = vunpack.c.l.b16 %v5210
    %v5253 = vunpack.c.h.b16 %v5210
    %v5254 = vunpack.c.l.b16 %v5211
    %v5255 = vunpack.c.h.b16 %v5211
    %v5256 = vunpack.c.l.b16 %v5212
    %v5257 = vunpack.c.h.b16 %v5212
    %v5258 = vunpack.c.l.b16 %v5213
    %v5259 = vunpack.c.h.b16 %v5213
    %v5260 = vunpack.c.l.b16 %v5214
    %v5261 = vunpack.c.h.b16 %v5214
    %v5262 = vunpack.c.l.b16 %v5215
    %v5263 = vunpack.c.h.b16 %v5215
    %v5264 = vunpack.c.l.b16 %v5216
    %v5265 = vunpack.c.h.b16 %v5216
    %v5266 = vpack.c.b16 %v5244, %v5242
    %v5267 = vpack.c.b16 %v5245, %v5243
    %v5268 = vpack.c.b16 %v5248, %v5246
    %v5269 = vpack.c.b16 %v5249, %v5247
    %v5270 = vpack.c.b16 %v5252, %v5250
    %v5271 = vpack.c.b16 %v5253, %v5251
    %v5272 = vpack.c.b16 %v5256, %v5254
    %v5273 = vpack.c.b16 %v5257, %v5255
    %v5274 = vpack.c.b16 %v5260, %v5258
    %v5275 = vpack.c.b16 %v5261, %v5259
    %v5276 = vpack.c.b16 %v5264, %v5262
    %v5277 = vpack.c.b16 %v5265, %v5263
    %v5291 = vsel %vm3431, %v5203, 0
    %5293 = vmatprep.subr.bf16.mxu0 0
    %5294 = vmatpush1.bf16.msra.mxu0 0
    %5295 = vmatprep.subr.bf16.mxu0 0
    %5296 = vmatpush1.bf16.msra.mxu0 0
    %5297 = vmatprep.subr.bf16.mxu0 %v5277
    %5298 = vmatpush1.bf16.msra.mxu0 %v5276
    %5299 = vmatprep.subr.bf16.mxu0 %v5275
    %5300 = vmatpush1.bf16.msra.mxu0 %v5274
    %5301 = vmatprep.subr.bf16.mxu0 %v5273
    %5302 = vmatpush1.bf16.msra.mxu0 %v5272
    %5303 = vmatprep.subr.bf16.mxu0 %v5271
    %5304 = vmatpush1.bf16.msra.mxu0 %v5270
    %5305 = vmatprep.subr.bf16.mxu0 %v5269
    %5306 = vmatpush1.bf16.msra.mxu0 %v5268
    %5307 = vmatprep.subr.bf16.mxu0 %v5267
    %5308 = vmatpush1.bf16.msra.mxu0 %v5266
    %5309 = vmatprep.subr.bf16.mxu0 0
    %5310 = vmatpush2.bf16.msra.mxu0 0
    %5311 = vmatprep.subr.bf16.mxu0 0
    %5312 = vmatpush2.bf16.msra.mxu0 0
    %5313 = vmatprep.subr.bf16.mxu0 0
    %5314 = vmatpush2.bf16.msra.mxu0 0
    %5315 = vmatprep.subr.bf16.mxu0 0
    %5316 = vmatpush2.bf16.msra.mxu0 0
    %5317 = vmatprep.subr.bf16.mxu0 0
    %5318 = vmatpush2.bf16.msra.mxu0 0
    %5319 = vmatprep.subr.bf16.mxu0 0
    %5320 = vmatpush2.bf16.msra.mxu0 0
    %5321 = vmatprep.subr.bf16.mxu0 0
    %5322 = vmatpush2.bf16.msra.mxu0 0
    %5323 = vmatprep.subr.bf16.mxu0 0
    %5324 = vmatpush2.bf16.msra.mxu0 0
    %5325 = vmatprep.mubr.bf16.mxu0 0
    %5326 = vmatmul.mubr.bf16.gmra.mxu0 %v5291
    %v5327 = vpop.f32.mrf.mxu0
    %v5328 = vadd.f32 %v5223, %v5327
    %v5329 = vpop.f32.mrf.mxu0
    %v5330 = vadd.f32 %v5227, %v5329
    %v5331 = vpop.f32.mrf.mxu0
    %v5332 = vpop.f32.mrf.mxu0
    %5333 = vdwg.mxu0
    %v5334 = vmul.f32 %v5328, 0.5
    %v5335 = vmul.f32 %v5330, 0.5
    %v5336 = vsel %vm3477, %v5334, %v5328
    %v5337 = vsel %vm3478, %v5335, %v5330
    %v5338 = vtanh.pop %v5336
    %v5339 = vtanh.pop %v5337
    %v5340 = vadd.f32 %v5338, 1.0
    %v5341 = vadd.f32 %v5339, 1.0
    %v5342 = vmul.f32 %v5340, 0.5
    %v5343 = vmul.f32 %v5341, 0.5
    %v5344 = vsel %vm3477, %v5342, %v5338
    %v5345 = vsel %vm3478, %v5343, %v5339
    %5347 = vrot.lane.b32.xlu0 %v5175, 32
    %v5348 = vpop.permute.xlu0 %5347
    %v5350 = vsel %vm255, %v5175, %v5348
    %5352 = vrot.lane.b32.xlu0 %v5350, 64
    %v5353 = vpop.permute.xlu0 %5352
    %v5355 = vmul.f32 %v5344, %v5353
    %5357 = vrot.lane.b32.xlu0 %v5345, 64
    %v5358 = vpop.permute.xlu0 %5357
    %v5360 = vmul.f32 %v5344, %v5358
    %5362 = vrot.lane.b32.xlu0 %v5360, 64
    %v5363 = vpop.permute.xlu0 %5362
    %v5365 = vadd.f32 %v5355, %v5363
    %v5366 = vtanh.pop %v5365
    %5368 = vrot.lane.b32.xlu0 %v5366, 64
    %v5369 = vpop.permute.xlu0 %5368
    %v5371 = vmul.f32 %v5345, %v5369
    %v5372 = vadd.f32 %v5365, 0.0
    %5374 = vrot.lane.b32.xlu0 %v5365, 96
    %v5375 = vpop.permute.xlu0 %5374
    %v5377 = vadd.f32 %v5372, %v5375
    %v5378 = vmul.f32 %v5377, 0.5
    %v5379 = vadd.f32 %v5371, 0.0
    %5381 = vrot.lane.b32.xlu0 %v5371, 96
    %v5382 = vpop.permute.xlu0 %5381
    %v5384 = vadd.f32 %v5379, %v5382
    %v5385 = vmul.f32 %v5384, 0.5
    %v5386 = vpack.c.bf16 %v5385, %v5385
    %v5387 = vld [vmem:[#allocation15] sm:$0xf]
    %v5388 = vld [vmem:[#allocation15 + $0x4] sm:$0xf]
    %v5389 = vld [vmem:[#allocation15 + $0x8] sm:$0xf]
    %v5390 = vld [vmem:[#allocation15 + $0xc] sm:$0xf]
    %v5391 = vld [vmem:[#allocation16] sm:$0x1]
    %v5393 = vlaneseq
    %v5394 = vshrl.u32 %v5393, 7
    %v5395 = vsub.s32 0, %v5394
    %v5396 = vrot.slane %v5391, %v5395
    %v5402 = vunpack.c.l.b16 %v5387
    %v5403 = vunpack.c.l.b16 %v5388
    %v5404 = vunpack.c.l.b16 %v5389
    %v5405 = vunpack.c.l.b16 %v5390
    %v5406 = vpack.c.b16 %v5403, %v5402
    %v5407 = vpack.c.b16 %v5405, %v5404
    %v5411 = vsel %vm255, %v5386, 0
    %5413 = vmatprep.subr.bf16.mxu0 0
    %5414 = vmatpush1.bf16.msra.mxu0 0
    %5415 = vmatprep.subr.bf16.mxu0 0
    %5416 = vmatpush1.bf16.msra.mxu0 0
    %5417 = vmatprep.subr.bf16.mxu0 0
    %5418 = vmatpush1.bf16.msra.mxu0 0
    %5419 = vmatprep.subr.bf16.mxu0 0
    %5420 = vmatpush1.bf16.msra.mxu0 0
    %5421 = vmatprep.subr.bf16.mxu0 0
    %5422 = vmatpush1.bf16.msra.mxu0 0
    %5423 = vmatprep.subr.bf16.mxu0 0
    %5424 = vmatpush1.bf16.msra.mxu0 0
    %5425 = vmatprep.subr.bf16.mxu0 0
    %5426 = vmatpush1.bf16.msra.mxu0 %v5407
    %5427 = vmatprep.subr.bf16.mxu0 0
    %5428 = vmatpush1.bf16.msra.mxu0 %v5406
    %5429 = vmatprep.subr.bf16.mxu0 0
    %5430 = vmatpush2.bf16.msra.mxu0 0
    %5431 = vmatprep.subr.bf16.mxu0 0
    %5432 = vmatpush2.bf16.msra.mxu0 0
    %5433 = vmatprep.subr.bf16.mxu0 0
    %5434 = vmatpush2.bf16.msra.mxu0 0
    %5435 = vmatprep.subr.bf16.mxu0 0
    %5436 = vmatpush2.bf16.msra.mxu0 0
    %5437 = vmatprep.subr.bf16.mxu0 0
    %5438 = vmatpush2.bf16.msra.mxu0 0
    %5439 = vmatprep.subr.bf16.mxu0 0
    %5440 = vmatpush2.bf16.msra.mxu0 0
    %5441 = vmatprep.subr.bf16.mxu0 0
    %5442 = vmatpush2.bf16.msra.mxu0 0
    %5443 = vmatprep.subr.bf16.mxu0 0
    %5444 = vmatpush2.bf16.msra.mxu0 0
    %5445 = vmatprep.mubr.bf16.mxu0 0
    %5446 = vmatmul.mubr.bf16.gmra.mxu0 %v5411
    %v5447 = vpop.f32.mrf.mxu0
    %v5448 = vadd.f32 %v5396, %v5447
    %v5449 = vpop.f32.mrf.mxu0
    %v5450 = vpop.f32.mrf.mxu0
    %v5451 = vpop.f32.mrf.mxu0
    %5452 = vdwg.mxu0
    %v5453 = vlaneseq
    %v5454 = vshrl.u32 %v5453, 7
    %v5455 = vsub.s32 0, %v5454
    %v5456 = vrot.slane %v5448, %v5455
    %5458 = vbcast.lane.b32.xlu0 %v5456, 256
    %v5459 = vpop.permute.xlu0 %5458
    %s5461 = sor.u32 256, 8
    %5462 = vbcast.lane.b32.xlu0 %v5456, %s5461
    %v5463 = vpop.permute.xlu0 %5462
    %s5465 = sor.u32 256, 16
    %5466 = vbcast.lane.b32.xlu0 %v5456, %s5465
    %v5467 = vpop.permute.xlu0 %5466
    %s5469 = sor.u32 256, 24
    %5470 = vbcast.lane.b32.xlu0 %v5456, %s5469
    %v5471 = vpop.permute.xlu0 %5470
    %v5472 = vlaneseq
    %v5473 = vshrl.u32 %v5472, 7
    %v5474 = vsub.s32 1, %v5473
    %v5475 = vrot.slane %v5448, %v5474
    %5477 = vbcast.lane.b32.xlu0 %v5475, 256
    %v5478 = vpop.permute.xlu0 %5477
    %s5480 = sor.u32 256, 8
    %5481 = vbcast.lane.b32.xlu0 %v5475, %s5480
    %v5482 = vpop.permute.xlu0 %5481
    %s5484 = sor.u32 256, 16
    %5485 = vbcast.lane.b32.xlu0 %v5475, %s5484
    %v5486 = vpop.permute.xlu0 %5485
    %s5488 = sor.u32 256, 24
    %5489 = vbcast.lane.b32.xlu0 %v5475, %s5488
    %v5490 = vpop.permute.xlu0 %5489
    %v5491 = vlaneseq
    %v5492 = vshrl.u32 %v5491, 7
    %v5493 = vsub.s32 2, %v5492
    %v5494 = vrot.slane %v5448, %v5493
    %5496 = vbcast.lane.b32.xlu0 %v5494, 256
    %v5497 = vpop.permute.xlu0 %5496
    %s5499 = sor.u32 256, 8
    %5500 = vbcast.lane.b32.xlu0 %v5494, %s5499
    %v5501 = vpop.permute.xlu0 %5500
    %s5503 = sor.u32 256, 16
    %5504 = vbcast.lane.b32.xlu0 %v5494, %s5503
    %v5505 = vpop.permute.xlu0 %5504
    %s5507 = sor.u32 256, 24
    %5508 = vbcast.lane.b32.xlu0 %v5494, %s5507
    %v5509 = vpop.permute.xlu0 %5508
    %v5510 = vlaneseq
    %v5511 = vshrl.u32 %v5510, 7
    %v5512 = vsub.s32 3, %v5511
    %v5513 = vrot.slane %v5448, %v5512
    %5515 = vbcast.lane.b32.xlu0 %v5513, 256
    %v5516 = vpop.permute.xlu0 %5515
    %s5518 = sor.u32 256, 8
    %5519 = vbcast.lane.b32.xlu0 %v5513, %s5518
    %v5520 = vpop.permute.xlu0 %5519
    %s5522 = sor.u32 256, 16
    %5523 = vbcast.lane.b32.xlu0 %v5513, %s5522
    %v5524 = vpop.permute.xlu0 %5523
    %s5526 = sor.u32 256, 24
    %5527 = vbcast.lane.b32.xlu0 %v5513, %s5526
    %v5528 = vpop.permute.xlu0 %5527
    %v5529 = vlaneseq
    %v5530 = vshrl.u32 %v5529, 7
    %v5531 = vsub.s32 4, %v5530
    %v5532 = vrot.slane %v5448, %v5531
    %5534 = vbcast.lane.b32.xlu0 %v5532, 256
    %v5535 = vpop.permute.xlu0 %5534
    %s5537 = sor.u32 256, 8
    %5538 = vbcast.lane.b32.xlu0 %v5532, %s5537
    %v5539 = vpop.permute.xlu0 %5538
    %s5541 = sor.u32 256, 16
    %5542 = vbcast.lane.b32.xlu0 %v5532, %s5541
    %v5543 = vpop.permute.xlu0 %5542
    %s5545 = sor.u32 256, 24
    %5546 = vbcast.lane.b32.xlu0 %v5532, %s5545
    %v5547 = vpop.permute.xlu0 %5546
    %v5548 = vlaneseq
    %v5549 = vshrl.u32 %v5548, 7
    %v5550 = vsub.s32 5, %v5549
    %v5551 = vrot.slane %v5448, %v5550
    %5553 = vbcast.lane.b32.xlu0 %v5551, 256
    %v5554 = vpop.permute.xlu0 %5553
    %s5556 = sor.u32 256, 8
    %5557 = vbcast.lane.b32.xlu0 %v5551, %s5556
    %v5558 = vpop.permute.xlu0 %5557
    %s5560 = sor.u32 256, 16
    %5561 = vbcast.lane.b32.xlu0 %v5551, %s5560
    %v5562 = vpop.permute.xlu0 %5561
    %s5564 = sor.u32 256, 24
    %5565 = vbcast.lane.b32.xlu0 %v5551, %s5564
    %v5566 = vpop.permute.xlu0 %5565
    %v5567 = vlaneseq
    %v5568 = vshrl.u32 %v5567, 7
    %v5569 = vsub.s32 6, %v5568
    %v5570 = vrot.slane %v5448, %v5569
    %5572 = vbcast.lane.b32.xlu0 %v5570, 256
    %v5573 = vpop.permute.xlu0 %5572
    %s5575 = sor.u32 256, 8
    %5576 = vbcast.lane.b32.xlu0 %v5570, %s5575
    %v5577 = vpop.permute.xlu0 %5576
    %s5579 = sor.u32 256, 16
    %5580 = vbcast.lane.b32.xlu0 %v5570, %s5579
    %v5581 = vpop.permute.xlu0 %5580
    %s5583 = sor.u32 256, 24
    %5584 = vbcast.lane.b32.xlu0 %v5570, %s5583
    %v5585 = vpop.permute.xlu0 %5584
    %v5586 = vlaneseq
    %v5587 = vshrl.u32 %v5586, 7
    %v5588 = vsub.s32 7, %v5587
    %v5589 = vrot.slane %v5448, %v5588
    %5591 = vbcast.lane.b32.xlu0 %v5589, 256
    %v5592 = vpop.permute.xlu0 %5591
    %s5594 = sor.u32 256, 8
    %5595 = vbcast.lane.b32.xlu0 %v5589, %s5594
    %v5596 = vpop.permute.xlu0 %5595
    %s5598 = sor.u32 256, 16
    %5599 = vbcast.lane.b32.xlu0 %v5589, %s5598
    %v5600 = vpop.permute.xlu0 %5599
    %s5602 = sor.u32 256, 24
    %5603 = vbcast.lane.b32.xlu0 %v5589, %s5602
    %v5604 = vpop.permute.xlu0 %5603
    %v5605 = vadd.f32 %v339, %v5459
    %v5606 = vadd.f32 %v342, %v5463
    %v5607 = vadd.f32 %v347, %v5467
    %v5608 = vadd.f32 %v350, %v5471
    %v5609 = vadd.f32 %v355, %v5478
    %v5610 = vadd.f32 %v358, %v5482
    %v5611 = vadd.f32 %v363, %v5486
    %v5612 = vadd.f32 %v366, %v5490
    %v5613 = vadd.f32 %v371, %v5497
    %v5614 = vadd.f32 %v374, %v5501
    %v5615 = vadd.f32 %v379, %v5505
    %v5616 = vadd.f32 %v382, %v5509
    %v5617 = vadd.f32 %v387, %v5516
    %v5618 = vadd.f32 %v390, %v5520
    %v5619 = vadd.f32 %v395, %v5524
    %v5620 = vadd.f32 %v398, %v5528
    %v5621 = vadd.f32 %v403, %v5535
    %v5622 = vadd.f32 %v406, %v5539
    %v5623 = vadd.f32 %v411, %v5543
    %v5624 = vadd.f32 %v414, %v5547
    %v5625 = vadd.f32 %v419, %v5554
    %v5626 = vadd.f32 %v422, %v5558
    %v5627 = vadd.f32 %v427, %v5562
    %v5628 = vadd.f32 %v430, %v5566
    %v5629 = vadd.f32 %v435, %v5573
    %v5630 = vadd.f32 %v438, %v5577
    %v5631 = vadd.f32 %v443, %v5581
    %v5632 = vadd.f32 %v446, %v5585
    %v5633 = vadd.f32 %v451, %v5592
    %v5634 = vadd.f32 %v454, %v5596
    %v5635 = vadd.f32 %v459, %v5600
    %v5636 = vadd.f32 %v462, %v5604
    %v5637 = vtanh.pop %v5605
    %v5638 = vtanh.pop %v5606
    %v5639 = vtanh.pop %v5607
    %v5640 = vtanh.pop %v5608
    %v5641 = vtanh.pop %v5609
    %v5642 = vtanh.pop %v5610
    %v5643 = vtanh.pop %v5611
    %v5644 = vtanh.pop %v5612
    %v5645 = vtanh.pop %v5613
    %v5646 = vtanh.pop %v5614
    %v5647 = vtanh.pop %v5615
    %v5648 = vtanh.pop %v5616
    %v5649 = vtanh.pop %v5617
    %v5650 = vtanh.pop %v5618
    %v5651 = vtanh.pop %v5619
    %v5652 = vtanh.pop %v5620
    %v5653 = vtanh.pop %v5621
    %v5654 = vtanh.pop %v5622
    %v5655 = vtanh.pop %v5623
    %v5656 = vtanh.pop %v5624
    %v5657 = vtanh.pop %v5625
    %v5658 = vtanh.pop %v5626
    %v5659 = vtanh.pop %v5627
    %v5660 = vtanh.pop %v5628
    %v5661 = vtanh.pop %v5629
    %v5662 = vtanh.pop %v5630
    %v5663 = vtanh.pop %v5631
    %v5664 = vtanh.pop %v5632
    %v5665 = vtanh.pop %v5633
    %v5666 = vtanh.pop %v5634
    %v5667 = vtanh.pop %v5635
    %v5668 = vtanh.pop %v5636
    %v5669 = vld [vmem:[%s12] sm:$0x1]
    %v5671 = vlaneseq
    %v5672 = vshrl.u32 %v5671, 7
    %v5673 = vsub.s32 0, %v5672
    %v5674 = vrot.slane %v5669, %v5673
    %5675 = vrot.lane.b32.xlu0 %v5674, 32
    %v5676 = vpop.permute.xlu0 %5675
    %v5678 = vmul.f32 %v5637, %v5676
    %v5679 = vmul.f32 %v5638, %v5676
    %v5680 = vmul.f32 %v5639, %v5676
    %v5681 = vmul.f32 %v5640, %v5676
    %v5682 = vmul.f32 %v5641, %v5676
    %v5683 = vmul.f32 %v5642, %v5676
    %v5684 = vmul.f32 %v5643, %v5676
    %v5685 = vmul.f32 %v5644, %v5676
    %v5686 = vmul.f32 %v5645, %v5676
    %v5687 = vmul.f32 %v5646, %v5676
    %v5688 = vmul.f32 %v5647, %v5676
    %v5689 = vmul.f32 %v5648, %v5676
    %v5690 = vmul.f32 %v5649, %v5676
    %v5691 = vmul.f32 %v5650, %v5676
    %v5692 = vmul.f32 %v5651, %v5676
    %v5693 = vmul.f32 %v5652, %v5676
    %v5694 = vmul.f32 %v5653, %v5676
    %v5695 = vmul.f32 %v5654, %v5676
    %v5696 = vmul.f32 %v5655, %v5676
    %v5697 = vmul.f32 %v5656, %v5676
    %v5698 = vmul.f32 %v5657, %v5676
    %v5699 = vmul.f32 %v5658, %v5676
    %v5700 = vmul.f32 %v5659, %v5676
    %v5701 = vmul.f32 %v5660, %v5676
    %v5702 = vmul.f32 %v5661, %v5676
    %v5703 = vmul.f32 %v5662, %v5676
    %v5704 = vmul.f32 %v5663, %v5676
    %v5705 = vmul.f32 %v5664, %v5676
    %v5706 = vmul.f32 %v5665, %v5676
    %v5707 = vmul.f32 %v5666, %v5676
    %v5708 = vmul.f32 %v5667, %v5676
    %v5709 = vmul.f32 %v5668, %v5676
    %5742 = vrot.lane.b32.xlu0 %v5678, 96
    %v5743 = vpop.permute.xlu0 %5742
    %5744 = vrot.lane.b32.xlu0 %v5679, 96
    %v5745 = vpop.permute.xlu0 %5744
    %5746 = vrot.lane.b32.xlu0 %v5680, 96
    %v5747 = vpop.permute.xlu0 %5746
    %5748 = vrot.lane.b32.xlu0 %v5681, 96
    %v5749 = vpop.permute.xlu0 %5748
    %5750 = vrot.lane.b32.xlu0 %v5682, 96
    %v5751 = vpop.permute.xlu0 %5750
    %5752 = vrot.lane.b32.xlu0 %v5683, 96
    %v5753 = vpop.permute.xlu0 %5752
    %5754 = vrot.lane.b32.xlu0 %v5684, 96
    %v5755 = vpop.permute.xlu0 %5754
    %5756 = vrot.lane.b32.xlu0 %v5685, 96
    %v5757 = vpop.permute.xlu0 %5756
    %5758 = vrot.lane.b32.xlu0 %v5686, 96
    %v5759 = vpop.permute.xlu0 %5758
    %5760 = vrot.lane.b32.xlu0 %v5687, 96
    %v5761 = vpop.permute.xlu0 %5760
    %5762 = vrot.lane.b32.xlu0 %v5688, 96
    %v5763 = vpop.permute.xlu0 %5762
    %5764 = vrot.lane.b32.xlu0 %v5689, 96
    %v5765 = vpop.permute.xlu0 %5764
    %5766 = vrot.lane.b32.xlu0 %v5690, 96
    %v5767 = vpop.permute.xlu0 %5766
    %5768 = vrot.lane.b32.xlu0 %v5691, 96
    %v5769 = vpop.permute.xlu0 %5768
    %5770 = vrot.lane.b32.xlu0 %v5692, 96
    %v5771 = vpop.permute.xlu0 %5770
    %5772 = vrot.lane.b32.xlu0 %v5693, 96
    %v5773 = vpop.permute.xlu0 %5772
    %5774 = vrot.lane.b32.xlu0 %v5694, 96
    %v5775 = vpop.permute.xlu0 %5774
    %5776 = vrot.lane.b32.xlu0 %v5695, 96
    %v5777 = vpop.permute.xlu0 %5776
    %5778 = vrot.lane.b32.xlu0 %v5696, 96
    %v5779 = vpop.permute.xlu0 %5778
    %5780 = vrot.lane.b32.xlu0 %v5697, 96
    %v5781 = vpop.permute.xlu0 %5780
    %5782 = vrot.lane.b32.xlu0 %v5698, 96
    %v5783 = vpop.permute.xlu0 %5782
    %5784 = vrot.lane.b32.xlu0 %v5699, 96
    %v5785 = vpop.permute.xlu0 %5784
    %5786 = vrot.lane.b32.xlu0 %v5700, 96
    %v5787 = vpop.permute.xlu0 %5786
    %5788 = vrot.lane.b32.xlu0 %v5701, 96
    %v5789 = vpop.permute.xlu0 %5788
    %5790 = vrot.lane.b32.xlu0 %v5702, 96
    %v5791 = vpop.permute.xlu0 %5790
    %5792 = vrot.lane.b32.xlu0 %v5703, 96
    %v5793 = vpop.permute.xlu0 %5792
    %5794 = vrot.lane.b32.xlu0 %v5704, 96
    %v5795 = vpop.permute.xlu0 %5794
    %5796 = vrot.lane.b32.xlu0 %v5705, 96
    %v5797 = vpop.permute.xlu0 %5796
    %5798 = vrot.lane.b32.xlu0 %v5706, 96
    %v5799 = vpop.permute.xlu0 %5798
    %5800 = vrot.lane.b32.xlu0 %v5707, 96
    %v5801 = vpop.permute.xlu0 %5800
    %5802 = vrot.lane.b32.xlu0 %v5708, 96
    %v5803 = vpop.permute.xlu0 %5802
    %5804 = vrot.lane.b32.xlu0 %v5709, 96
    %v5805 = vpop.permute.xlu0 %5804
    %v5838 = vsel %vm255, %v5743, 0.0
    %5839 = vadd.xlane.f32.xlu0 %v5838
    %v5840 = vpop.xlane.xlu0 %5839
    %v5841 = vsel %vm255, %v5745, 0.0
    %5842 = vadd.xlane.f32.xlu0 %v5841
    %v5843 = vpop.xlane.xlu0 %5842
    %v5844 = vsel %vm255, %v5747, 0.0
    %5845 = vadd.xlane.f32.xlu0 %v5844
    %v5846 = vpop.xlane.xlu0 %5845
    %v5847 = vsel %vm255, %v5749, 0.0
    %5848 = vadd.xlane.f32.xlu0 %v5847
    %v5849 = vpop.xlane.xlu0 %5848
    %v5850 = vsel %vm255, %v5751, 0.0
    %5851 = vadd.xlane.f32.xlu0 %v5850
    %v5852 = vpop.xlane.xlu0 %5851
    %v5853 = vsel %vm255, %v5753, 0.0
    %5854 = vadd.xlane.f32.xlu0 %v5853
    %v5855 = vpop.xlane.xlu0 %5854
    %v5856 = vsel %vm255, %v5755, 0.0
    %5857 = vadd.xlane.f32.xlu0 %v5856
    %v5858 = vpop.xlane.xlu0 %5857
    %v5859 = vsel %vm255, %v5757, 0.0
    %5860 = vadd.xlane.f32.xlu0 %v5859
    %v5861 = vpop.xlane.xlu0 %5860
    %v5862 = vsel %vm255, %v5759, 0.0
    %5863 = vadd.xlane.f32.xlu0 %v5862
    %v5864 = vpop.xlane.xlu0 %5863
    %v5865 = vsel %vm255, %v5761, 0.0
    %5866 = vadd.xlane.f32.xlu0 %v5865
    %v5867 = vpop.xlane.xlu0 %5866
    %v5868 = vsel %vm255, %v5763, 0.0
    %5869 = vadd.xlane.f32.xlu0 %v5868
    %v5870 = vpop.xlane.xlu0 %5869
    %v5871 = vsel %vm255, %v5765, 0.0
    %5872 = vadd.xlane.f32.xlu0 %v5871
    %v5873 = vpop.xlane.xlu0 %5872
    %v5874 = vsel %vm255, %v5767, 0.0
    %5875 = vadd.xlane.f32.xlu0 %v5874
    %v5876 = vpop.xlane.xlu0 %5875
    %v5877 = vsel %vm255, %v5769, 0.0
    %5878 = vadd.xlane.f32.xlu0 %v5877
    %v5879 = vpop.xlane.xlu0 %5878
    %v5880 = vsel %vm255, %v5771, 0.0
    %5881 = vadd.xlane.f32.xlu0 %v5880
    %v5882 = vpop.xlane.xlu0 %5881
    %v5883 = vsel %vm255, %v5773, 0.0
    %5884 = vadd.xlane.f32.xlu0 %v5883
    %v5885 = vpop.xlane.xlu0 %5884
    %v5886 = vsel %vm255, %v5775, 0.0
    %5887 = vadd.xlane.f32.xlu0 %v5886
    %v5888 = vpop.xlane.xlu0 %5887
    %v5889 = vsel %vm255, %v5777, 0.0
    %5890 = vadd.xlane.f32.xlu0 %v5889
    %v5891 = vpop.xlane.xlu0 %5890
    %v5892 = vsel %vm255, %v5779, 0.0
    %5893 = vadd.xlane.f32.xlu0 %v5892
    %v5894 = vpop.xlane.xlu0 %5893
    %v5895 = vsel %vm255, %v5781, 0.0
    %5896 = vadd.xlane.f32.xlu0 %v5895
    %v5897 = vpop.xlane.xlu0 %5896
    %v5898 = vsel %vm255, %v5783, 0.0
    %5899 = vadd.xlane.f32.xlu0 %v5898
    %v5900 = vpop.xlane.xlu0 %5899
    %v5901 = vsel %vm255, %v5785, 0.0
    %5902 = vadd.xlane.f32.xlu0 %v5901
    %v5903 = vpop.xlane.xlu0 %5902
    %v5904 = vsel %vm255, %v5787, 0.0
    %5905 = vadd.xlane.f32.xlu0 %v5904
    %v5906 = vpop.xlane.xlu0 %5905
    %v5907 = vsel %vm255, %v5789, 0.0
    %5908 = vadd.xlane.f32.xlu0 %v5907
    %v5909 = vpop.xlane.xlu0 %5908
    %v5910 = vsel %vm255, %v5791, 0.0
    %5911 = vadd.xlane.f32.xlu0 %v5910
    %v5912 = vpop.xlane.xlu0 %5911
    %v5913 = vsel %vm255, %v5793, 0.0
    %5914 = vadd.xlane.f32.xlu0 %v5913
    %v5915 = vpop.xlane.xlu0 %5914
    %v5916 = vsel %vm255, %v5795, 0.0
    %5917 = vadd.xlane.f32.xlu0 %v5916
    %v5918 = vpop.xlane.xlu0 %5917
    %v5919 = vsel %vm255, %v5797, 0.0
    %5920 = vadd.xlane.f32.xlu0 %v5919
    %v5921 = vpop.xlane.xlu0 %5920
    %v5922 = vsel %vm255, %v5799, 0.0
    %5923 = vadd.xlane.f32.xlu0 %v5922
    %v5924 = vpop.xlane.xlu0 %5923
    %v5925 = vsel %vm255, %v5801, 0.0
    %5926 = vadd.xlane.f32.xlu0 %v5925
    %v5927 = vpop.xlane.xlu0 %5926
    %v5928 = vsel %vm255, %v5803, 0.0
    %5929 = vadd.xlane.f32.xlu0 %v5928
    %v5930 = vpop.xlane.xlu0 %5929
    %v5931 = vsel %vm255, %v5805, 0.0
    %5932 = vadd.xlane.f32.xlu0 %v5931
    %v5933 = vpop.xlane.xlu0 %5932
    %v5934 = vld [vmem:[#allocation3] sm:$0x1]
    %v5936 = vlaneseq
    %v5937 = vshrl.u32 %v5936, 7
    %v5938 = vsub.s32 0, %v5937
    %v5939 = vrot.slane %v5934, %v5938
    %5940 = vset.pattern.permute.xlu0 0
    %5941 = vperm.xlu0 %5940, %v5939
    %v5942 = vpop.permute.xlu0 %5941
    %v5944 = vadd.f32 %v5840, %v5942
    %v5945 = vadd.f32 %v5843, %v5942
    %v5946 = vadd.f32 %v5846, %v5942
    %v5947 = vadd.f32 %v5849, %v5942
    %v5948 = vadd.f32 %v5852, %v5942
    %v5949 = vadd.f32 %v5855, %v5942
    %v5950 = vadd.f32 %v5858, %v5942
    %v5951 = vadd.f32 %v5861, %v5942
    %v5952 = vadd.f32 %v5864, %v5942
    %v5953 = vadd.f32 %v5867, %v5942
    %v5954 = vadd.f32 %v5870, %v5942
    %v5955 = vadd.f32 %v5873, %v5942
    %v5956 = vadd.f32 %v5876, %v5942
    %v5957 = vadd.f32 %v5879, %v5942
    %v5958 = vadd.f32 %v5882, %v5942
    %v5959 = vadd.f32 %v5885, %v5942
    %v5960 = vadd.f32 %v5888, %v5942
    %v5961 = vadd.f32 %v5891, %v5942
    %v5962 = vadd.f32 %v5894, %v5942
    %v5963 = vadd.f32 %v5897, %v5942
    %v5964 = vadd.f32 %v5900, %v5942
    %v5965 = vadd.f32 %v5903, %v5942
    %v5966 = vadd.f32 %v5906, %v5942
    %v5967 = vadd.f32 %v5909, %v5942
    %v5968 = vadd.f32 %v5912, %v5942
    %v5969 = vadd.f32 %v5915, %v5942
    %v5970 = vadd.f32 %v5918, %v5942
    %v5971 = vadd.f32 %v5921, %v5942
    %v5972 = vadd.f32 %v5924, %v5942
    %v5973 = vadd.f32 %v5927, %v5942
    %v5974 = vadd.f32 %v5930, %v5942
    %v5975 = vadd.f32 %v5933, %v5942
    %v6008 = vlaneseq
    %v6009 = vshrl.u32 %v6008, 7
    %v6010 = vsub.s32 %v1369, %v6009
    %v6011 = vrot.slane %v5944, %v6010
    %v6012 = vlaneseq
    %v6013 = vshrl.u32 %v6012, 7
    %v6014 = vsub.s32 %v1374, %v6013
    %v6015 = vrot.slane %v5945, %v6014
    %v6016 = vsel %vm1379, %v6015, %v6011
    %v6017 = vlaneseq
    %v6018 = vshrl.u32 %v6017, 7
    %v6019 = vsub.s32 %v1381, %v6018
    %v6020 = vrot.slane %v5946, %v6019
    %v6021 = vsel %vm1386, %v6020, %v6016
    %v6022 = vlaneseq
    %v6023 = vshrl.u32 %v6022, 7
    %v6024 = vsub.s32 %v1388, %v6023
    %v6025 = vrot.slane %v5947, %v6024
    %v6026 = vsel %vm1393, %v6025, %v6021
    %v6027 = vlaneseq
    %v6028 = vshrl.u32 %v6027, 7
    %v6029 = vsub.s32 %v1369, %v6028
    %v6030 = vrot.slane %v5948, %v6029
    %v6031 = vlaneseq
    %v6032 = vshrl.u32 %v6031, 7
    %v6033 = vsub.s32 %v1374, %v6032
    %v6034 = vrot.slane %v5949, %v6033
    %v6035 = vsel %vm1379, %v6034, %v6030
    %v6036 = vlaneseq
    %v6037 = vshrl.u32 %v6036, 7
    %v6038 = vsub.s32 %v1381, %v6037
    %v6039 = vrot.slane %v5950, %v6038
    %v6040 = vsel %vm1386, %v6039, %v6035
    %v6041 = vlaneseq
    %v6042 = vshrl.u32 %v6041, 7
    %v6043 = vsub.s32 %v1388, %v6042
    %v6044 = vrot.slane %v5951, %v6043
    %v6045 = vsel %vm1393, %v6044, %v6040
    %v6046 = vlaneseq
    %v6047 = vshrl.u32 %v6046, 7
    %v6048 = vsub.s32 %v1369, %v6047
    %v6049 = vrot.slane %v5952, %v6048
    %v6050 = vlaneseq
    %v6051 = vshrl.u32 %v6050, 7
    %v6052 = vsub.s32 %v1374, %v6051
    %v6053 = vrot.slane %v5953, %v6052
    %v6054 = vsel %vm1379, %v6053, %v6049
    %v6055 = vlaneseq
    %v6056 = vshrl.u32 %v6055, 7
    %v6057 = vsub.s32 %v1381, %v6056
    %v6058 = vrot.slane %v5954, %v6057
    %v6059 = vsel %vm1386, %v6058, %v6054
    %v6060 = vlaneseq
    %v6061 = vshrl.u32 %v6060, 7
    %v6062 = vsub.s32 %v1388, %v6061
    %v6063 = vrot.slane %v5955, %v6062
    %v6064 = vsel %vm1393, %v6063, %v6059
    %v6065 = vlaneseq
    %v6066 = vshrl.u32 %v6065, 7
    %v6067 = vsub.s32 %v1369, %v6066
    %v6068 = vrot.slane %v5956, %v6067
    %v6069 = vlaneseq
    %v6070 = vshrl.u32 %v6069, 7
    %v6071 = vsub.s32 %v1374, %v6070
    %v6072 = vrot.slane %v5957, %v6071
    %v6073 = vsel %vm1379, %v6072, %v6068
    %v6074 = vlaneseq
    %v6075 = vshrl.u32 %v6074, 7
    %v6076 = vsub.s32 %v1381, %v6075
    %v6077 = vrot.slane %v5958, %v6076
    %v6078 = vsel %vm1386, %v6077, %v6073
    %v6079 = vlaneseq
    %v6080 = vshrl.u32 %v6079, 7
    %v6081 = vsub.s32 %v1388, %v6080
    %v6082 = vrot.slane %v5959, %v6081
    %v6083 = vsel %vm1393, %v6082, %v6078
    %v6084 = vlaneseq
    %v6085 = vshrl.u32 %v6084, 7
    %v6086 = vsub.s32 %v1369, %v6085
    %v6087 = vrot.slane %v5960, %v6086
    %v6088 = vlaneseq
    %v6089 = vshrl.u32 %v6088, 7
    %v6090 = vsub.s32 %v1374, %v6089
    %v6091 = vrot.slane %v5961, %v6090
    %v6092 = vsel %vm1379, %v6091, %v6087
    %v6093 = vlaneseq
    %v6094 = vshrl.u32 %v6093, 7
    %v6095 = vsub.s32 %v1381, %v6094
    %v6096 = vrot.slane %v5962, %v6095
    %v6097 = vsel %vm1386, %v6096, %v6092
    %v6098 = vlaneseq
    %v6099 = vshrl.u32 %v6098, 7
    %v6100 = vsub.s32 %v1388, %v6099
    %v6101 = vrot.slane %v5963, %v6100
    %v6102 = vsel %vm1393, %v6101, %v6097
    %v6103 = vlaneseq
    %v6104 = vshrl.u32 %v6103, 7
    %v6105 = vsub.s32 %v1369, %v6104
    %v6106 = vrot.slane %v5964, %v6105
    %v6107 = vlaneseq
    %v6108 = vshrl.u32 %v6107, 7
    %v6109 = vsub.s32 %v1374, %v6108
    %v6110 = vrot.slane %v5965, %v6109
    %v6111 = vsel %vm1379, %v6110, %v6106
    %v6112 = vlaneseq
    %v6113 = vshrl.u32 %v6112, 7
    %v6114 = vsub.s32 %v1381, %v6113
    %v6115 = vrot.slane %v5966, %v6114
    %v6116 = vsel %vm1386, %v6115, %v6111
    %v6117 = vlaneseq
    %v6118 = vshrl.u32 %v6117, 7
    %v6119 = vsub.s32 %v1388, %v6118
    %v6120 = vrot.slane %v5967, %v6119
    %v6121 = vsel %vm1393, %v6120, %v6116
    %v6122 = vlaneseq
    %v6123 = vshrl.u32 %v6122, 7
    %v6124 = vsub.s32 %v1369, %v6123
    %v6125 = vrot.slane %v5968, %v6124
    %v6126 = vlaneseq
    %v6127 = vshrl.u32 %v6126, 7
    %v6128 = vsub.s32 %v1374, %v6127
    %v6129 = vrot.slane %v5969, %v6128
    %v6130 = vsel %vm1379, %v6129, %v6125
    %v6131 = vlaneseq
    %v6132 = vshrl.u32 %v6131, 7
    %v6133 = vsub.s32 %v1381, %v6132
    %v6134 = vrot.slane %v5970, %v6133
    %v6135 = vsel %vm1386, %v6134, %v6130
    %v6136 = vlaneseq
    %v6137 = vshrl.u32 %v6136, 7
    %v6138 = vsub.s32 %v1388, %v6137
    %v6139 = vrot.slane %v5971, %v6138
    %v6140 = vsel %vm1393, %v6139, %v6135
    %v6141 = vlaneseq
    %v6142 = vshrl.u32 %v6141, 7
    %v6143 = vsub.s32 %v1369, %v6142
    %v6144 = vrot.slane %v5972, %v6143
    %v6145 = vlaneseq
    %v6146 = vshrl.u32 %v6145, 7
    %v6147 = vsub.s32 %v1374, %v6146
    %v6148 = vrot.slane %v5973, %v6147
    %v6149 = vsel %vm1379, %v6148, %v6144
    %v6150 = vlaneseq
    %v6151 = vshrl.u32 %v6150, 7
    %v6152 = vsub.s32 %v1381, %v6151
    %v6153 = vrot.slane %v5974, %v6152
    %v6154 = vsel %vm1386, %v6153, %v6149
    %v6155 = vlaneseq
    %v6156 = vshrl.u32 %v6155, 7
    %v6157 = vsub.s32 %v1388, %v6156
    %v6158 = vrot.slane %v5975, %v6157
    %v6159 = vsel %vm1393, %v6158, %v6154
    %v6160 = vsel %vm1680, %v6045, %v6026
    %v6161 = vsel %vm1682, %v6064, %v6160
    %v6162 = vsel %vm1684, %v6083, %v6161
    %v6163 = vsel %vm1686, %v6102, %v6162
    %v6164 = vsel %vm1688, %v6121, %v6163
    %v6165 = vsel %vm1690, %v6140, %v6164
    %v6166 = vsel %vm1692, %v6159, %v6165
    %v6168 = vsel %vm255, %v6166, -inf
    %6169 = vmax.xlane.f32.xlu0 %v6168
    %v6170 = vpop.xlane.xlu0 %6169
    %v6172 = vlaneseq
    %v6173 = vshrl.u32 %v6172, 7
    %v6174 = vsub.s32 0, %v6173
    %v6175 = vrot.slane %v6170, %v6174
    %v6176 = vlaneseq
    %v6177 = vshrl.u32 %v6176, 7
    %v6178 = vsub.s32 1, %v6177
    %v6179 = vrot.slane %v6170, %v6178
    %v6180 = vlaneseq
    %v6181 = vshrl.u32 %v6180, 7
    %v6182 = vsub.s32 2, %v6181
    %v6183 = vrot.slane %v6170, %v6182
    %v6184 = vlaneseq
    %v6185 = vshrl.u32 %v6184, 7
    %v6186 = vsub.s32 3, %v6185
    %v6187 = vrot.slane %v6170, %v6186
    %v6188 = vlaneseq
    %v6189 = vshrl.u32 %v6188, 7
    %v6190 = vsub.s32 4, %v6189
    %v6191 = vrot.slane %v6170, %v6190
    %v6192 = vlaneseq
    %v6193 = vshrl.u32 %v6192, 7
    %v6194 = vsub.s32 5, %v6193
    %v6195 = vrot.slane %v6170, %v6194
    %v6196 = vlaneseq
    %v6197 = vshrl.u32 %v6196, 7
    %v6198 = vsub.s32 6, %v6197
    %v6199 = vrot.slane %v6170, %v6198
    %v6200 = vlaneseq
    %v6201 = vshrl.u32 %v6200, 7
    %v6202 = vsub.s32 7, %v6201
    %v6203 = vrot.slane %v6170, %v6202
    %v6212 = vsub.f32 %v5944, %v6175
    %v6213 = vsub.f32 %v5945, %v6175
    %v6214 = vsub.f32 %v5946, %v6175
    %v6215 = vsub.f32 %v5947, %v6175
    %v6216 = vsub.f32 %v5948, %v6179
    %v6217 = vsub.f32 %v5949, %v6179
    %v6218 = vsub.f32 %v5950, %v6179
    %v6219 = vsub.f32 %v5951, %v6179
    %v6220 = vsub.f32 %v5952, %v6183
    %v6221 = vsub.f32 %v5953, %v6183
    %v6222 = vsub.f32 %v5954, %v6183
    %v6223 = vsub.f32 %v5955, %v6183
    %v6224 = vsub.f32 %v5956, %v6187
    %v6225 = vsub.f32 %v5957, %v6187
    %v6226 = vsub.f32 %v5958, %v6187
    %v6227 = vsub.f32 %v5959, %v6187
    %v6228 = vsub.f32 %v5960, %v6191
    %v6229 = vsub.f32 %v5961, %v6191
    %v6230 = vsub.f32 %v5962, %v6191
    %v6231 = vsub.f32 %v5963, %v6191
    %v6232 = vsub.f32 %v5964, %v6195
    %v6233 = vsub.f32 %v5965, %v6195
    %v6234 = vsub.f32 %v5966, %v6195
    %v6235 = vsub.f32 %v5967, %v6195
    %v6236 = vsub.f32 %v5968, %v6199
    %v6237 = vsub.f32 %v5969, %v6199
    %v6238 = vsub.f32 %v5970, %v6199
    %v6239 = vsub.f32 %v5971, %v6199
    %v6240 = vsub.f32 %v5972, %v6203
    %v6241 = vsub.f32 %v5973, %v6203
    %v6242 = vsub.f32 %v5974, %v6203
    %v6243 = vsub.f32 %v5975, %v6203
    %v6244 = vmul.f32 %v6212, 1.442695
    %v6245 = vpow.pop %v6244
    %v6246 = vmul.f32 %v6213, 1.442695
    %v6247 = vpow.pop %v6246
    %v6248 = vmul.f32 %v6214, 1.442695
    %v6249 = vpow.pop %v6248
    %v6250 = vmul.f32 %v6215, 1.442695
    %v6251 = vpow.pop %v6250
    %v6252 = vmul.f32 %v6216, 1.442695
    %v6253 = vpow.pop %v6252
    %v6254 = vmul.f32 %v6217, 1.442695
    %v6255 = vpow.pop %v6254
    %v6256 = vmul.f32 %v6218, 1.442695
    %v6257 = vpow.pop %v6256
    %v6258 = vmul.f32 %v6219, 1.442695
    %v6259 = vpow.pop %v6258
    %v6260 = vmul.f32 %v6220, 1.442695
    %v6261 = vpow.pop %v6260
    %v6262 = vmul.f32 %v6221, 1.442695
    %v6263 = vpow.pop %v6262
    %v6264 = vmul.f32 %v6222, 1.442695
    %v6265 = vpow.pop %v6264
    %v6266 = vmul.f32 %v6223, 1.442695
    %v6267 = vpow.pop %v6266
    %v6268 = vmul.f32 %v6224, 1.442695
    %v6269 = vpow.pop %v6268
    %v6270 = vmul.f32 %v6225, 1.442695
    %v6271 = vpow.pop %v6270
    %v6272 = vmul.f32 %v6226, 1.442695
    %v6273 = vpow.pop %v6272
    %v6274 = vmul.f32 %v6227, 1.442695
    %v6275 = vpow.pop %v6274
    %v6276 = vmul.f32 %v6228, 1.442695
    %v6277 = vpow.pop %v6276
    %v6278 = vmul.f32 %v6229, 1.442695
    %v6279 = vpow.pop %v6278
    %v6280 = vmul.f32 %v6230, 1.442695
    %v6281 = vpow.pop %v6280
    %v6282 = vmul.f32 %v6231, 1.442695
    %v6283 = vpow.pop %v6282
    %v6284 = vmul.f32 %v6232, 1.442695
    %v6285 = vpow.pop %v6284
    %v6286 = vmul.f32 %v6233, 1.442695
    %v6287 = vpow.pop %v6286
    %v6288 = vmul.f32 %v6234, 1.442695
    %v6289 = vpow.pop %v6288
    %v6290 = vmul.f32 %v6235, 1.442695
    %v6291 = vpow.pop %v6290
    %v6292 = vmul.f32 %v6236, 1.442695
    %v6293 = vpow.pop %v6292
    %v6294 = vmul.f32 %v6237, 1.442695
    %v6295 = vpow.pop %v6294
    %v6296 = vmul.f32 %v6238, 1.442695
    %v6297 = vpow.pop %v6296
    %v6298 = vmul.f32 %v6239, 1.442695
    %v6299 = vpow.pop %v6298
    %v6300 = vmul.f32 %v6240, 1.442695
    %v6301 = vpow.pop %v6300
    %v6302 = vmul.f32 %v6241, 1.442695
    %v6303 = vpow.pop %v6302
    %v6304 = vmul.f32 %v6242, 1.442695
    %v6305 = vpow.pop %v6304
    %v6306 = vmul.f32 %v6243, 1.442695
    %v6307 = vpow.pop %v6306
    %6340 = vset.pattern.permute.xlu0 0
    %6341 = vperm.xlu0 %6340, %v6245
    %v6342 = vpop.permute.xlu0 %6341
    %6343 = vset.pattern.permute.xlu0 0
    %6344 = vperm.xlu0 %6343, %v6247
    %v6345 = vpop.permute.xlu0 %6344
    %6346 = vset.pattern.permute.xlu0 0
    %6347 = vperm.xlu0 %6346, %v6249
    %v6348 = vpop.permute.xlu0 %6347
    %6349 = vset.pattern.permute.xlu0 0
    %6350 = vperm.xlu0 %6349, %v6251
    %v6351 = vpop.permute.xlu0 %6350
    %6352 = vset.pattern.permute.xlu0 0
    %6353 = vperm.xlu0 %6352, %v6253
    %v6354 = vpop.permute.xlu0 %6353
    %6355 = vset.pattern.permute.xlu0 0
    %6356 = vperm.xlu0 %6355, %v6255
    %v6357 = vpop.permute.xlu0 %6356
    %6358 = vset.pattern.permute.xlu0 0
    %6359 = vperm.xlu0 %6358, %v6257
    %v6360 = vpop.permute.xlu0 %6359
    %6361 = vset.pattern.permute.xlu0 0
    %6362 = vperm.xlu0 %6361, %v6259
    %v6363 = vpop.permute.xlu0 %6362
    %6364 = vset.pattern.permute.xlu0 0
    %6365 = vperm.xlu0 %6364, %v6261
    %v6366 = vpop.permute.xlu0 %6365
    %6367 = vset.pattern.permute.xlu0 0
    %6368 = vperm.xlu0 %6367, %v6263
    %v6369 = vpop.permute.xlu0 %6368
    %6370 = vset.pattern.permute.xlu0 0
    %6371 = vperm.xlu0 %6370, %v6265
    %v6372 = vpop.permute.xlu0 %6371
    %6373 = vset.pattern.permute.xlu0 0
    %6374 = vperm.xlu0 %6373, %v6267
    %v6375 = vpop.permute.xlu0 %6374
    %6376 = vset.pattern.permute.xlu0 0
    %6377 = vperm.xlu0 %6376, %v6269
    %v6378 = vpop.permute.xlu0 %6377
    %6379 = vset.pattern.permute.xlu0 0
    %6380 = vperm.xlu0 %6379, %v6271
    %v6381 = vpop.permute.xlu0 %6380
    %6382 = vset.pattern.permute.xlu0 0
    %6383 = vperm.xlu0 %6382, %v6273
    %v6384 = vpop.permute.xlu0 %6383
    %6385 = vset.pattern.permute.xlu0 0
    %6386 = vperm.xlu0 %6385, %v6275
    %v6387 = vpop.permute.xlu0 %6386
    %6388 = vset.pattern.permute.xlu0 0
    %6389 = vperm.xlu0 %6388, %v6277
    %v6390 = vpop.permute.xlu0 %6389
    %6391 = vset.pattern.permute.xlu0 0
    %6392 = vperm.xlu0 %6391, %v6279
    %v6393 = vpop.permute.xlu0 %6392
    %6394 = vset.pattern.permute.xlu0 0
    %6395 = vperm.xlu0 %6394, %v6281
    %v6396 = vpop.permute.xlu0 %6395
    %6397 = vset.pattern.permute.xlu0 0
    %6398 = vperm.xlu0 %6397, %v6283
    %v6399 = vpop.permute.xlu0 %6398
    %6400 = vset.pattern.permute.xlu0 0
    %6401 = vperm.xlu0 %6400, %v6285
    %v6402 = vpop.permute.xlu0 %6401
    %6403 = vset.pattern.permute.xlu0 0
    %6404 = vperm.xlu0 %6403, %v6287
    %v6405 = vpop.permute.xlu0 %6404
    %6406 = vset.pattern.permute.xlu0 0
    %6407 = vperm.xlu0 %6406, %v6289
    %v6408 = vpop.permute.xlu0 %6407
    %6409 = vset.pattern.permute.xlu0 0
    %6410 = vperm.xlu0 %6409, %v6291
    %v6411 = vpop.permute.xlu0 %6410
    %6412 = vset.pattern.permute.xlu0 0
    %6413 = vperm.xlu0 %6412, %v6293
    %v6414 = vpop.permute.xlu0 %6413
    %6415 = vset.pattern.permute.xlu0 0
    %6416 = vperm.xlu0 %6415, %v6295
    %v6417 = vpop.permute.xlu0 %6416
    %6418 = vset.pattern.permute.xlu0 0
    %6419 = vperm.xlu0 %6418, %v6297
    %v6420 = vpop.permute.xlu0 %6419
    %6421 = vset.pattern.permute.xlu0 0
    %6422 = vperm.xlu0 %6421, %v6299
    %v6423 = vpop.permute.xlu0 %6422
    %6424 = vset.pattern.permute.xlu0 0
    %6425 = vperm.xlu0 %6424, %v6301
    %v6426 = vpop.permute.xlu0 %6425
    %6427 = vset.pattern.permute.xlu0 0
    %6428 = vperm.xlu0 %6427, %v6303
    %v6429 = vpop.permute.xlu0 %6428
    %6430 = vset.pattern.permute.xlu0 0
    %6431 = vperm.xlu0 %6430, %v6305
    %v6432 = vpop.permute.xlu0 %6431
    %6433 = vset.pattern.permute.xlu0 0
    %6434 = vperm.xlu0 %6433, %v6307
    %v6435 = vpop.permute.xlu0 %6434
    %v6436 = vlaneseq
    %v6437 = vshrl.u32 %v6436, 7
    %v6438 = vsub.s32 %v1369, %v6437
    %v6439 = vrot.slane %v6342, %v6438
    %v6440 = vlaneseq
    %v6441 = vshrl.u32 %v6440, 7
    %v6442 = vsub.s32 %v1374, %v6441
    %v6443 = vrot.slane %v6345, %v6442
    %v6444 = vsel %vm1379, %v6443, %v6439
    %v6445 = vlaneseq
    %v6446 = vshrl.u32 %v6445, 7
    %v6447 = vsub.s32 %v1381, %v6446
    %v6448 = vrot.slane %v6348, %v6447
    %v6449 = vsel %vm1386, %v6448, %v6444
    %v6450 = vlaneseq
    %v6451 = vshrl.u32 %v6450, 7
    %v6452 = vsub.s32 %v1388, %v6451
    %v6453 = vrot.slane %v6351, %v6452
    %v6454 = vsel %vm1393, %v6453, %v6449
    %v6455 = vlaneseq
    %v6456 = vshrl.u32 %v6455, 7
    %v6457 = vsub.s32 %v1369, %v6456
    %v6458 = vrot.slane %v6354, %v6457
    %v6459 = vlaneseq
    %v6460 = vshrl.u32 %v6459, 7
    %v6461 = vsub.s32 %v1374, %v6460
    %v6462 = vrot.slane %v6357, %v6461
    %v6463 = vsel %vm1379, %v6462, %v6458
    %v6464 = vlaneseq
    %v6465 = vshrl.u32 %v6464, 7
    %v6466 = vsub.s32 %v1381, %v6465
    %v6467 = vrot.slane %v6360, %v6466
    %v6468 = vsel %vm1386, %v6467, %v6463
    %v6469 = vlaneseq
    %v6470 = vshrl.u32 %v6469, 7
    %v6471 = vsub.s32 %v1388, %v6470
    %v6472 = vrot.slane %v6363, %v6471
    %v6473 = vsel %vm1393, %v6472, %v6468
    %v6474 = vlaneseq
    %v6475 = vshrl.u32 %v6474, 7
    %v6476 = vsub.s32 %v1369, %v6475
    %v6477 = vrot.slane %v6366, %v6476
    %v6478 = vlaneseq
    %v6479 = vshrl.u32 %v6478, 7
    %v6480 = vsub.s32 %v1374, %v6479
    %v6481 = vrot.slane %v6369, %v6480
    %v6482 = vsel %vm1379, %v6481, %v6477
    %v6483 = vlaneseq
    %v6484 = vshrl.u32 %v6483, 7
    %v6485 = vsub.s32 %v1381, %v6484
    %v6486 = vrot.slane %v6372, %v6485
    %v6487 = vsel %vm1386, %v6486, %v6482
    %v6488 = vlaneseq
    %v6489 = vshrl.u32 %v6488, 7
    %v6490 = vsub.s32 %v1388, %v6489
    %v6491 = vrot.slane %v6375, %v6490
    %v6492 = vsel %vm1393, %v6491, %v6487
    %v6493 = vlaneseq
    %v6494 = vshrl.u32 %v6493, 7
    %v6495 = vsub.s32 %v1369, %v6494
    %v6496 = vrot.slane %v6378, %v6495
    %v6497 = vlaneseq
    %v6498 = vshrl.u32 %v6497, 7
    %v6499 = vsub.s32 %v1374, %v6498
    %v6500 = vrot.slane %v6381, %v6499
    %v6501 = vsel %vm1379, %v6500, %v6496
    %v6502 = vlaneseq
    %v6503 = vshrl.u32 %v6502, 7
    %v6504 = vsub.s32 %v1381, %v6503
    %v6505 = vrot.slane %v6384, %v6504
    %v6506 = vsel %vm1386, %v6505, %v6501
    %v6507 = vlaneseq
    %v6508 = vshrl.u32 %v6507, 7
    %v6509 = vsub.s32 %v1388, %v6508
    %v6510 = vrot.slane %v6387, %v6509
    %v6511 = vsel %vm1393, %v6510, %v6506
    %v6512 = vlaneseq
    %v6513 = vshrl.u32 %v6512, 7
    %v6514 = vsub.s32 %v1369, %v6513
    %v6515 = vrot.slane %v6390, %v6514
    %v6516 = vlaneseq
    %v6517 = vshrl.u32 %v6516, 7
    %v6518 = vsub.s32 %v1374, %v6517
    %v6519 = vrot.slane %v6393, %v6518
    %v6520 = vsel %vm1379, %v6519, %v6515
    %v6521 = vlaneseq
    %v6522 = vshrl.u32 %v6521, 7
    %v6523 = vsub.s32 %v1381, %v6522
    %v6524 = vrot.slane %v6396, %v6523
    %v6525 = vsel %vm1386, %v6524, %v6520
    %v6526 = vlaneseq
    %v6527 = vshrl.u32 %v6526, 7
    %v6528 = vsub.s32 %v1388, %v6527
    %v6529 = vrot.slane %v6399, %v6528
    %v6530 = vsel %vm1393, %v6529, %v6525
    %v6531 = vlaneseq
    %v6532 = vshrl.u32 %v6531, 7
    %v6533 = vsub.s32 %v1369, %v6532
    %v6534 = vrot.slane %v6402, %v6533
    %v6535 = vlaneseq
    %v6536 = vshrl.u32 %v6535, 7
    %v6537 = vsub.s32 %v1374, %v6536
    %v6538 = vrot.slane %v6405, %v6537
    %v6539 = vsel %vm1379, %v6538, %v6534
    %v6540 = vlaneseq
    %v6541 = vshrl.u32 %v6540, 7
    %v6542 = vsub.s32 %v1381, %v6541
    %v6543 = vrot.slane %v6408, %v6542
    %v6544 = vsel %vm1386, %v6543, %v6539
    %v6545 = vlaneseq
    %v6546 = vshrl.u32 %v6545, 7
    %v6547 = vsub.s32 %v1388, %v6546
    %v6548 = vrot.slane %v6411, %v6547
    %v6549 = vsel %vm1393, %v6548, %v6544
    %v6550 = vlaneseq
    %v6551 = vshrl.u32 %v6550, 7
    %v6552 = vsub.s32 %v1369, %v6551
    %v6553 = vrot.slane %v6414, %v6552
    %v6554 = vlaneseq
    %v6555 = vshrl.u32 %v6554, 7
    %v6556 = vsub.s32 %v1374, %v6555
    %v6557 = vrot.slane %v6417, %v6556
    %v6558 = vsel %vm1379, %v6557, %v6553
    %v6559 = vlaneseq
    %v6560 = vshrl.u32 %v6559, 7
    %v6561 = vsub.s32 %v1381, %v6560
    %v6562 = vrot.slane %v6420, %v6561
    %v6563 = vsel %vm1386, %v6562, %v6558
    %v6564 = vlaneseq
    %v6565 = vshrl.u32 %v6564, 7
    %v6566 = vsub.s32 %v1388, %v6565
    %v6567 = vrot.slane %v6423, %v6566
    %v6568 = vsel %vm1393, %v6567, %v6563
    %v6569 = vlaneseq
    %v6570 = vshrl.u32 %v6569, 7
    %v6571 = vsub.s32 %v1369, %v6570
    %v6572 = vrot.slane %v6426, %v6571
    %v6573 = vlaneseq
    %v6574 = vshrl.u32 %v6573, 7
    %v6575 = vsub.s32 %v1374, %v6574
    %v6576 = vrot.slane %v6429, %v6575
    %v6577 = vsel %vm1379, %v6576, %v6572
    %v6578 = vlaneseq
    %v6579 = vshrl.u32 %v6578, 7
    %v6580 = vsub.s32 %v1381, %v6579
    %v6581 = vrot.slane %v6432, %v6580
    %v6582 = vsel %vm1386, %v6581, %v6577
    %v6583 = vlaneseq
    %v6584 = vshrl.u32 %v6583, 7
    %v6585 = vsub.s32 %v1388, %v6584
    %v6586 = vrot.slane %v6435, %v6585
    %v6587 = vsel %vm1393, %v6586, %v6582
    %v6588 = vsel %vm1680, %v6473, %v6454
    %v6589 = vsel %vm1682, %v6492, %v6588
    %v6590 = vsel %vm1684, %v6511, %v6589
    %v6591 = vsel %vm1686, %v6530, %v6590
    %v6592 = vsel %vm1688, %v6549, %v6591
    %v6593 = vsel %vm1690, %v6568, %v6592
    %v6594 = vsel %vm1692, %v6587, %v6593
    %v6596 = vsel %vm255, %v6594, 0.0
    %6597 = vadd.xlane.f32.xlu0 %v6596
    %v6598 = vpop.xlane.xlu0 %6597
    %v6600 = vlaneseq
    %v6601 = vshrl.u32 %v6600, 7
    %v6602 = vsub.s32 0, %v6601
    %v6603 = vrot.slane %v6598, %v6602
    %v6604 = vlaneseq
    %v6605 = vshrl.u32 %v6604, 7
    %v6606 = vsub.s32 1, %v6605
    %v6607 = vrot.slane %v6598, %v6606
    %v6608 = vlaneseq
    %v6609 = vshrl.u32 %v6608, 7
    %v6610 = vsub.s32 2, %v6609
    %v6611 = vrot.slane %v6598, %v6610
    %v6612 = vlaneseq
    %v6613 = vshrl.u32 %v6612, 7
    %v6614 = vsub.s32 3, %v6613
    %v6615 = vrot.slane %v6598, %v6614
    %v6616 = vlaneseq
    %v6617 = vshrl.u32 %v6616, 7
    %v6618 = vsub.s32 4, %v6617
    %v6619 = vrot.slane %v6598, %v6618
    %v6620 = vlaneseq
    %v6621 = vshrl.u32 %v6620, 7
    %v6622 = vsub.s32 5, %v6621
    %v6623 = vrot.slane %v6598, %v6622
    %v6624 = vlaneseq
    %v6625 = vshrl.u32 %v6624, 7
    %v6626 = vsub.s32 6, %v6625
    %v6627 = vrot.slane %v6598, %v6626
    %v6628 = vlaneseq
    %v6629 = vshrl.u32 %v6628, 7
    %v6630 = vsub.s32 7, %v6629
    %v6631 = vrot.slane %v6598, %v6630
    %v6640 = vrcp.pop %v6603
    %v6641 = vmul.f32 %v6245, %v6640
    %v6642 = vmul.f32 %v6247, %v6640
    %v6643 = vmul.f32 %v6249, %v6640
    %v6644 = vmul.f32 %v6251, %v6640
    %v6645 = vrcp.pop %v6607
    %v6646 = vmul.f32 %v6253, %v6645
    %v6647 = vmul.f32 %v6255, %v6645
    %v6648 = vmul.f32 %v6257, %v6645
    %v6649 = vmul.f32 %v6259, %v6645
    %v6650 = vrcp.pop %v6611
    %v6651 = vmul.f32 %v6261, %v6650
    %v6652 = vmul.f32 %v6263, %v6650
    %v6653 = vmul.f32 %v6265, %v6650
    %v6654 = vmul.f32 %v6267, %v6650
    %v6655 = vrcp.pop %v6615
    %v6656 = vmul.f32 %v6269, %v6655
    %v6657 = vmul.f32 %v6271, %v6655
    %v6658 = vmul.f32 %v6273, %v6655
    %v6659 = vmul.f32 %v6275, %v6655
    %v6660 = vrcp.pop %v6619
    %v6661 = vmul.f32 %v6277, %v6660
    %v6662 = vmul.f32 %v6279, %v6660
    %v6663 = vmul.f32 %v6281, %v6660
    %v6664 = vmul.f32 %v6283, %v6660
    %v6665 = vrcp.pop %v6623
    %v6666 = vmul.f32 %v6285, %v6665
    %v6667 = vmul.f32 %v6287, %v6665
    %v6668 = vmul.f32 %v6289, %v6665
    %v6669 = vmul.f32 %v6291, %v6665
    %v6670 = vrcp.pop %v6627
    %v6671 = vmul.f32 %v6293, %v6670
    %v6672 = vmul.f32 %v6295, %v6670
    %v6673 = vmul.f32 %v6297, %v6670
    %v6674 = vmul.f32 %v6299, %v6670
    %v6675 = vrcp.pop %v6631
    %v6676 = vmul.f32 %v6301, %v6675
    %v6677 = vmul.f32 %v6303, %v6675
    %v6678 = vmul.f32 %v6305, %v6675
    %v6679 = vmul.f32 %v6307, %v6675
    %6681 = vset.pattern.permute.xlu0 0
    %6682 = vperm.xlu0 %6681, %v6641
    %v6683 = vpop.permute.xlu0 %6682
    %6686 = vset.pattern.permute.xlu0 0
    %6687 = vperm.xlu0 %6686, %v6642
    %v6688 = vpop.permute.xlu0 %6687
    %6691 = vset.pattern.permute.xlu0 0
    %6692 = vperm.xlu0 %6691, %v6643
    %v6693 = vpop.permute.xlu0 %6692
    %6696 = vset.pattern.permute.xlu0 0
    %6697 = vperm.xlu0 %6696, %v6644
    %v6698 = vpop.permute.xlu0 %6697
    %6701 = vset.pattern.permute.xlu0 0
    %6702 = vperm.xlu0 %6701, %v6646
    %v6703 = vpop.permute.xlu0 %6702
    %6706 = vset.pattern.permute.xlu0 0
    %6707 = vperm.xlu0 %6706, %v6647
    %v6708 = vpop.permute.xlu0 %6707
    %6711 = vset.pattern.permute.xlu0 0
    %6712 = vperm.xlu0 %6711, %v6648
    %v6713 = vpop.permute.xlu0 %6712
    %6716 = vset.pattern.permute.xlu0 0
    %6717 = vperm.xlu0 %6716, %v6649
    %v6718 = vpop.permute.xlu0 %6717
    %6721 = vset.pattern.permute.xlu0 0
    %6722 = vperm.xlu0 %6721, %v6651
    %v6723 = vpop.permute.xlu0 %6722
    %6726 = vset.pattern.permute.xlu0 0
    %6727 = vperm.xlu0 %6726, %v6652
    %v6728 = vpop.permute.xlu0 %6727
    %6731 = vset.pattern.permute.xlu0 0
    %6732 = vperm.xlu0 %6731, %v6653
    %v6733 = vpop.permute.xlu0 %6732
    %6736 = vset.pattern.permute.xlu0 0
    %6737 = vperm.xlu0 %6736, %v6654
    %v6738 = vpop.permute.xlu0 %6737
    %6741 = vset.pattern.permute.xlu0 0
    %6742 = vperm.xlu0 %6741, %v6656
    %v6743 = vpop.permute.xlu0 %6742
    %6746 = vset.pattern.permute.xlu0 0
    %6747 = vperm.xlu0 %6746, %v6657
    %v6748 = vpop.permute.xlu0 %6747
    %6751 = vset.pattern.permute.xlu0 0
    %6752 = vperm.xlu0 %6751, %v6658
    %v6753 = vpop.permute.xlu0 %6752
    %6756 = vset.pattern.permute.xlu0 0
    %6757 = vperm.xlu0 %6756, %v6659
    %v6758 = vpop.permute.xlu0 %6757
    %6761 = vset.pattern.permute.xlu0 0
    %6762 = vperm.xlu0 %6761, %v6661
    %v6763 = vpop.permute.xlu0 %6762
    %6766 = vset.pattern.permute.xlu0 0
    %6767 = vperm.xlu0 %6766, %v6662
    %v6768 = vpop.permute.xlu0 %6767
    %6771 = vset.pattern.permute.xlu0 0
    %6772 = vperm.xlu0 %6771, %v6663
    %v6773 = vpop.permute.xlu0 %6772
    %6776 = vset.pattern.permute.xlu0 0
    %6777 = vperm.xlu0 %6776, %v6664
    %v6778 = vpop.permute.xlu0 %6777
    %6781 = vset.pattern.permute.xlu0 0
    %6782 = vperm.xlu0 %6781, %v6666
    %v6783 = vpop.permute.xlu0 %6782
    %6786 = vset.pattern.permute.xlu0 0
    %6787 = vperm.xlu0 %6786, %v6667
    %v6788 = vpop.permute.xlu0 %6787
    %6791 = vset.pattern.permute.xlu0 0
    %6792 = vperm.xlu0 %6791, %v6668
    %v6793 = vpop.permute.xlu0 %6792
    %6796 = vset.pattern.permute.xlu0 0
    %6797 = vperm.xlu0 %6796, %v6669
    %v6798 = vpop.permute.xlu0 %6797
    %6801 = vset.pattern.permute.xlu0 0
    %6802 = vperm.xlu0 %6801, %v6671
    %v6803 = vpop.permute.xlu0 %6802
    %6806 = vset.pattern.permute.xlu0 0
    %6807 = vperm.xlu0 %6806, %v6672
    %v6808 = vpop.permute.xlu0 %6807
    %6811 = vset.pattern.permute.xlu0 0
    %6812 = vperm.xlu0 %6811, %v6673
    %v6813 = vpop.permute.xlu0 %6812
    %6816 = vset.pattern.permute.xlu0 0
    %6817 = vperm.xlu0 %6816, %v6674
    %v6818 = vpop.permute.xlu0 %6817
    %6821 = vset.pattern.permute.xlu0 0
    %6822 = vperm.xlu0 %6821, %v6676
    %v6823 = vpop.permute.xlu0 %6822
    %6826 = vset.pattern.permute.xlu0 0
    %6827 = vperm.xlu0 %6826, %v6677
    %v6828 = vpop.permute.xlu0 %6827
    %6831 = vset.pattern.permute.xlu0 0
    %6832 = vperm.xlu0 %6831, %v6678
    %v6833 = vpop.permute.xlu0 %6832
    %6836 = vset.pattern.permute.xlu0 0
    %6837 = vperm.xlu0 %6836, %v6679
    %v6838 = vpop.permute.xlu0 %6837
    %v6840 = vmul.f32 %v184, %v6683
    %v6841 = vmul.f32 %v185, %v6688
    %v6842 = vmul.f32 %v186, %v6693
    %v6843 = vmul.f32 %v187, %v6698
    %v6844 = vmul.f32 %v188, %v6703
    %v6845 = vmul.f32 %v189, %v6708
    %v6846 = vmul.f32 %v190, %v6713
    %v6847 = vmul.f32 %v191, %v6718
    %v6848 = vmul.f32 %v192, %v6723
    %v6849 = vmul.f32 %v193, %v6728
    %v6850 = vmul.f32 %v194, %v6733
    %v6851 = vmul.f32 %v195, %v6738
    %v6852 = vmul.f32 %v196, %v6743
    %v6853 = vmul.f32 %v197, %v6748
    %v6854 = vmul.f32 %v198, %v6753
    %v6855 = vmul.f32 %v199, %v6758
    %v6856 = vmul.f32 %v200, %v6763
    %v6857 = vmul.f32 %v201, %v6768
    %v6858 = vmul.f32 %v202, %v6773
    %v6859 = vmul.f32 %v203, %v6778
    %v6860 = vmul.f32 %v204, %v6783
    %v6861 = vmul.f32 %v205, %v6788
    %v6862 = vmul.f32 %v206, %v6793
    %v6863 = vmul.f32 %v207, %v6798
    %v6864 = vmul.f32 %v208, %v6803
    %v6865 = vmul.f32 %v209, %v6808
    %v6866 = vmul.f32 %v210, %v6813
    %v6867 = vmul.f32 %v211, %v6818
    %v6868 = vmul.f32 %v212, %v6823
    %v6869 = vmul.f32 %v213, %v6828
    %v6870 = vmul.f32 %v214, %v6833
    %v6871 = vmul.f32 %v215, %v6838
    %v6872 = vsel %vm255, %v6840, 0.0
    %v6873 = vsel %vm255, %v6841, 0.0
    %v6874 = vadd.f32 %v6872, %v6873
    %v6875 = vsel %vm255, %v6842, 0.0
    %v6876 = vadd.f32 %v6874, %v6875
    %v6877 = vsel %vm255, %v6843, 0.0
    %v6878 = vadd.f32 %v6876, %v6877
    %v6879 = vrot.slane %v6878, 4
    %v6880 = vadd.f32 %v6878, %v6879
    %v6881 = vrot.slane %v6880, 2
    %v6882 = vadd.f32 %v6880, %v6881
    %v6883 = vrot.slane %v6882, 1
    %v6884 = vadd.f32 %v6882, %v6883
    %v6885 = vsel %vm255, %v6844, 0.0
    %v6886 = vsel %vm255, %v6845, 0.0
    %v6887 = vadd.f32 %v6885, %v6886
    %v6888 = vsel %vm255, %v6846, 0.0
    %v6889 = vadd.f32 %v6887, %v6888
    %v6890 = vsel %vm255, %v6847, 0.0
    %v6891 = vadd.f32 %v6889, %v6890
    %v6892 = vrot.slane %v6891, 4
    %v6893 = vadd.f32 %v6891, %v6892
    %v6894 = vrot.slane %v6893, 2
    %v6895 = vadd.f32 %v6893, %v6894
    %v6896 = vrot.slane %v6895, 1
    %v6897 = vadd.f32 %v6895, %v6896
    %v6898 = vsel %vm255, %v6848, 0.0
    %v6899 = vsel %vm255, %v6849, 0.0
    %v6900 = vadd.f32 %v6898, %v6899
    %v6901 = vsel %vm255, %v6850, 0.0
    %v6902 = vadd.f32 %v6900, %v6901
    %v6903 = vsel %vm255, %v6851, 0.0
    %v6904 = vadd.f32 %v6902, %v6903
    %v6905 = vrot.slane %v6904, 4
    %v6906 = vadd.f32 %v6904, %v6905
    %v6907 = vrot.slane %v6906, 2
    %v6908 = vadd.f32 %v6906, %v6907
    %v6909 = vrot.slane %v6908, 1
    %v6910 = vadd.f32 %v6908, %v6909
    %v6911 = vsel %vm255, %v6852, 0.0
    %v6912 = vsel %vm255, %v6853, 0.0
    %v6913 = vadd.f32 %v6911, %v6912
    %v6914 = vsel %vm255, %v6854, 0.0
    %v6915 = vadd.f32 %v6913, %v6914
    %v6916 = vsel %vm255, %v6855, 0.0
    %v6917 = vadd.f32 %v6915, %v6916
    %v6918 = vrot.slane %v6917, 4
    %v6919 = vadd.f32 %v6917, %v6918
    %v6920 = vrot.slane %v6919, 2
    %v6921 = vadd.f32 %v6919, %v6920
    %v6922 = vrot.slane %v6921, 1
    %v6923 = vadd.f32 %v6921, %v6922
    %v6924 = vsel %vm255, %v6856, 0.0
    %v6925 = vsel %vm255, %v6857, 0.0
    %v6926 = vadd.f32 %v6924, %v6925
    %v6927 = vsel %vm255, %v6858, 0.0
    %v6928 = vadd.f32 %v6926, %v6927
    %v6929 = vsel %vm255, %v6859, 0.0
    %v6930 = vadd.f32 %v6928, %v6929
    %v6931 = vrot.slane %v6930, 4
    %v6932 = vadd.f32 %v6930, %v6931
    %v6933 = vrot.slane %v6932, 2
    %v6934 = vadd.f32 %v6932, %v6933
    %v6935 = vrot.slane %v6934, 1
    %v6936 = vadd.f32 %v6934, %v6935
    %v6937 = vsel %vm255, %v6860, 0.0
    %v6938 = vsel %vm255, %v6861, 0.0
    %v6939 = vadd.f32 %v6937, %v6938
    %v6940 = vsel %vm255, %v6862, 0.0
    %v6941 = vadd.f32 %v6939, %v6940
    %v6942 = vsel %vm255, %v6863, 0.0
    %v6943 = vadd.f32 %v6941, %v6942
    %v6944 = vrot.slane %v6943, 4
    %v6945 = vadd.f32 %v6943, %v6944
    %v6946 = vrot.slane %v6945, 2
    %v6947 = vadd.f32 %v6945, %v6946
    %v6948 = vrot.slane %v6947, 1
    %v6949 = vadd.f32 %v6947, %v6948
    %v6950 = vsel %vm255, %v6864, 0.0
    %v6951 = vsel %vm255, %v6865, 0.0
    %v6952 = vadd.f32 %v6950, %v6951
    %v6953 = vsel %vm255, %v6866, 0.0
    %v6954 = vadd.f32 %v6952, %v6953
    %v6955 = vsel %vm255, %v6867, 0.0
    %v6956 = vadd.f32 %v6954, %v6955
    %v6957 = vrot.slane %v6956, 4
    %v6958 = vadd.f32 %v6956, %v6957
    %v6959 = vrot.slane %v6958, 2
    %v6960 = vadd.f32 %v6958, %v6959
    %v6961 = vrot.slane %v6960, 1
    %v6962 = vadd.f32 %v6960, %v6961
    %v6963 = vsel %vm255, %v6868, 0.0
    %v6964 = vsel %vm255, %v6869, 0.0
    %v6965 = vadd.f32 %v6963, %v6964
    %v6966 = vsel %vm255, %v6870, 0.0
    %v6967 = vadd.f32 %v6965, %v6966
    %v6968 = vsel %vm255, %v6871, 0.0
    %v6969 = vadd.f32 %v6967, %v6968
    %v6970 = vrot.slane %v6969, 4
    %v6971 = vadd.f32 %v6969, %v6970
    %v6972 = vrot.slane %v6971, 2
    %v6973 = vadd.f32 %v6971, %v6972
    %v6974 = vrot.slane %v6973, 1
    %v6975 = vadd.f32 %v6973, %v6974
    %v6977 = vrot.slane %v5385, 1
    %v6978 = vrot.slane %v5385, 2
    %v6979 = vrot.slane %v5385, 3
    %v6980 = vrot.slane %v5385, 4
    %v6981 = vrot.slane %v5385, 5
    %v6982 = vrot.slane %v5385, 6
    %v6983 = vrot.slane %v5385, 7
    %v6992 = vadd.f32 %v6884, %v5385
    %v6993 = vadd.f32 %v6897, %v6977
    %v6994 = vadd.f32 %v6910, %v6978
    %v6995 = vadd.f32 %v6923, %v6979
    %v6996 = vadd.f32 %v6936, %v6980
    %v6997 = vadd.f32 %v6949, %v6981
    %v6998 = vadd.f32 %v6962, %v6982
    %v6999 = vadd.f32 %v6975, %v6983
    %7001 = vrot.lane.b32.xlu0 %v5378, 64
    %v7002 = vpop.permute.xlu0 %7001
    %s7004 = scalar_lea.vmem [#allocation19], 8
    %7005 = vst.msk [vmem:[%s7004] sm:$0xff] %vm255, %v7002
    %v7014 = vrot.slane %v6993, 7
    %v7015 = vsel %vm1680, %v7014, %v6992
    %v7016 = vrot.slane %v6994, 6
    %v7017 = vsel %vm1682, %v7016, %v7015
    %v7018 = vrot.slane %v6995, 5
    %v7019 = vsel %vm1684, %v7018, %v7017
    %v7020 = vrot.slane %v6996, 4
    %v7021 = vsel %vm1686, %v7020, %v7019
    %v7022 = vrot.slane %v6997, 3
    %v7023 = vsel %vm1688, %v7022, %v7021
    %v7024 = vrot.slane %v6998, 2
    %v7025 = vsel %vm1690, %v7024, %v7023
    %v7026 = vrot.slane %v6999, 1
    %v7027 = vsel %vm1692, %v7026, %v7025
    %s7029 = scalar_lea.vmem [#allocation20], 8
    %7030 = vst.msk [vmem:[%s7029] sm:$0xff] %vm255, %v7027
    %v7031 = vpack.c.bf16 %v6992, %v6992
    %v7032 = vpack.c.bf16 %v6993, %v6993
    %v7033 = vpack.c.bf16 %v6994, %v6994
    %v7034 = vpack.c.bf16 %v6995, %v6995
    %v7035 = vpack.c.bf16 %v6996, %v6996
    %v7036 = vpack.c.bf16 %v6997, %v6997
    %v7037 = vpack.c.bf16 %v6998, %v6998
    %v7038 = vpack.c.bf16 %v6999, %v6999
    %v7039 = vld [vmem:[%s16] sm:$0xf]
    %v7040 = vld [vmem:[%s16 + $0x4] sm:$0xf]
    %v7041 = vld [vmem:[%s16 + $0x8] sm:$0xf]
    %v7042 = vld [vmem:[%s16 + $0xc] sm:$0xf]
    %v7043 = vld [vmem:[%s17] sm:$0x1]
    %v7045 = vlaneseq
    %v7046 = vshrl.u32 %v7045, 7
    %v7047 = vsub.s32 0, %v7046
    %v7048 = vrot.slane %v7043, %v7047
    %v7058 = vunpack.c.l.b16 %v7031
    %v7059 = vunpack.c.l.b16 %v7032
    %v7060 = vunpack.c.l.b16 %v7033
    %v7061 = vunpack.c.l.b16 %v7034
    %v7062 = vunpack.c.l.b16 %v7035
    %v7063 = vunpack.c.l.b16 %v7036
    %v7064 = vunpack.c.l.b16 %v7037
    %v7065 = vunpack.c.l.b16 %v7038
    %v7066 = vrot.slane %v7059, 7
    %v7067 = vsel %vm1680, %v7066, %v7058
    %v7068 = vrot.slane %v7060, 6
    %v7069 = vsel %vm1682, %v7068, %v7067
    %v7070 = vrot.slane %v7061, 5
    %v7071 = vsel %vm1684, %v7070, %v7069
    %v7072 = vrot.slane %v7062, 4
    %v7073 = vsel %vm1686, %v7072, %v7071
    %v7074 = vrot.slane %v7063, 3
    %v7075 = vsel %vm1688, %v7074, %v7073
    %v7076 = vrot.slane %v7064, 2
    %v7077 = vsel %vm1690, %v7076, %v7075
    %v7078 = vrot.slane %v7065, 1
    %v7079 = vsel %vm1692, %v7078, %v7077
    %v7080 = vpack.c.b16 %v7079, %v7079
    %v7085 = vunpack.c.l.b16 %v7039
    %v7086 = vunpack.c.l.b16 %v7040
    %v7087 = vunpack.c.l.b16 %v7041
    %v7088 = vunpack.c.l.b16 %v7042
    %v7089 = vpack.c.b16 %v7086, %v7085
    %v7090 = vpack.c.b16 %v7088, %v7087
    %v7094 = vsel %vm255, %v7080, 0
    %7096 = vmatprep.subr.bf16.mxu0 0
    %7097 = vmatpush1.bf16.msra.mxu0 0
    %7098 = vmatprep.subr.bf16.mxu0 0
    %7099 = vmatpush1.bf16.msra.mxu0 0
    %7100 = vmatprep.subr.bf16.mxu0 0
    %7101 = vmatpush1.bf16.msra.mxu0 0
    %7102 = vmatprep.subr.bf16.mxu0 0
    %7103 = vmatpush1.bf16.msra.mxu0 0
    %7104 = vmatprep.subr.bf16.mxu0 0
    %7105 = vmatpush1.bf16.msra.mxu0 0
    %7106 = vmatprep.subr.bf16.mxu0 0
    %7107 = vmatpush1.bf16.msra.mxu0 0
    %7108 = vmatprep.subr.bf16.mxu0 0
    %7109 = vmatpush1.bf16.msra.mxu0 %v7090
    %7110 = vmatprep.subr.bf16.mxu0 0
    %7111 = vmatpush1.bf16.msra.mxu0 %v7089
    %7112 = vmatprep.subr.bf16.mxu0 0
    %7113 = vmatpush2.bf16.msra.mxu0 0
    %7114 = vmatprep.subr.bf16.mxu0 0
    %7115 = vmatpush2.bf16.msra.mxu0 0
    %7116 = vmatprep.subr.bf16.mxu0 0
    %7117 = vmatpush2.bf16.msra.mxu0 0
    %7118 = vmatprep.subr.bf16.mxu0 0
    %7119 = vmatpush2.bf16.msra.mxu0 0
    %7120 = vmatprep.subr.bf16.mxu0 0
    %7121 = vmatpush2.bf16.msra.mxu0 0
    %7122 = vmatprep.subr.bf16.mxu0 0
    %7123 = vmatpush2.bf16.msra.mxu0 0
    %7124 = vmatprep.subr.bf16.mxu0 0
    %7125 = vmatpush2.bf16.msra.mxu0 0
    %7126 = vmatprep.subr.bf16.mxu0 0
    %7127 = vmatpush2.bf16.msra.mxu0 0
    %7128 = vmatprep.mubr.bf16.mxu0 0
    %7129 = vmatmul.mubr.bf16.gmra.mxu0 %v7094
    %v7130 = vpop.f32.mrf.mxu0
    %v7131 = vadd.f32 %v7048, %v7130
    %v7132 = vpop.f32.mrf.mxu0
    %v7133 = vpop.f32.mrf.mxu0
    %v7134 = vpop.f32.mrf.mxu0
    %7135 = vdwg.mxu0
    %vm7136 = vcmask 130048
    %v7137 = vsel %vm7136, %v7131, -inf
    %7138 = vmax.xlane.f32.xlu0 %v7137
    %v7139 = vpop.xlane.xlu0 %7138
    %v7140 = vsub.f32 %v7131, %v7139
    %v7141 = vmul.f32 %v7140, 1.442695
    %v7142 = vpow.pop %v7141
    %v7143 = vsel %vm7136, %v7142, 0.0
    %7144 = vadd.xlane.f32.xlu0 %v7143
    %v7145 = vpop.xlane.xlu0 %7144
    %v7146 = vlog2.pop %v7145
    %v7147 = vmul.f32 %v7146, 0.6931472
    %v7148 = vsub.f32 %v7140, %v7147
    %7149 = vst.msk [vmem:[#allocation22] sm:$0xff] %vm7136, %v7148
    // Predicated region
    $region110: #{tpu_custom_call.1} parent=1 // pred_check
      _
    $region111: #{tpu_custom_call.1} parent=1 // pred_check_branch
      %7151 = sbr.rel (0) target = $region113
    $region112: #{tpu_custom_call.1} parent=1 // pred_region
      %s7153 = ssub.s32 256, 256
      %7154 = vsyncadd [#allocation6], %s7153
      %s7155 = sshll.u32 [#allocation19], 4
      %s7156 = int_to_ptr.vmem [resolvable:$true] %s7155
      %7161 = dma.vmem_to_hbm [thread:$0]  %s7156, 256, %s18, [#allocation6], 128, 128, 8
    $region113: #{tpu_custom_call.1} parent=1 // pred_fallthru
      _
    // Predicated region
    $region114: #{tpu_custom_call.1} parent=1 // pred_check
      _
    $region115: #{tpu_custom_call.1} parent=1 // pred_check_branch
      %7163 = sbr.rel (0) target = $region117
    $region116: #{tpu_custom_call.1} parent=1 // pred_region
      %s7165 = ssub.s32 256, 256
      %7166 = vsyncadd [#allocation21], %s7165
      %s7167 = sshll.u32 [#allocation20], 4
      %s7168 = int_to_ptr.vmem [resolvable:$true] %s7167
      %7173 = dma.vmem_to_hbm [thread:$0]  %s7168, 256, %s19, [#allocation21], 128, 128, 8
    $region117: #{tpu_custom_call.1} parent=1 // pred_fallthru
      _
    // Predicated region
    $region118: #{tpu_custom_call.1} parent=1 // pred_check
      _
    $region119: #{tpu_custom_call.1} parent=1 // pred_check_branch
      %7175 = sbr.rel (0) target = $region121
    $region120: #{tpu_custom_call.1} parent=1 // pred_region
      %s7177 = ssub.s32 128, 128
      %7178 = vsyncadd [#allocation21], %s7177
      %s7180 = sshll.u32 [#allocation22], 4
      %s7181 = int_to_ptr.vmem [resolvable:$true] %s7180
      %7183 = dma.vmem_to_hbm [thread:$0]  %s7181, 128, %s20, [#allocation21]
    $region121: #{tpu_custom_call.1} parent=1 // pred_fallthru
      _
    // Predicated region
    $region122: #{tpu_custom_call.1} parent=1 // pred_check
      _
    $region123: #{tpu_custom_call.1} parent=1 // pred_check_branch
      %7185 = sbr.rel (0) target = $region125
    $region124: #{tpu_custom_call.1} parent=1 // pred_region
      %7186 = dma.done [#allocation6], 256
    $region125: #{tpu_custom_call.1} parent=1 // pred_fallthru
      _
    // Predicated region
    $region126: #{tpu_custom_call.1} parent=1 // pred_check
      _
    $region127: #{tpu_custom_call.1} parent=1 // pred_check_branch
      %7188 = sbr.rel (0) target = $region129
    $region128: #{tpu_custom_call.1} parent=1 // pred_region
      %7189 = dma.done [#allocation21], 256
    $region129: #{tpu_custom_call.1} parent=1 // pred_fallthru
      _
    // Predicated region
    $region130: #{tpu_custom_call.1} parent=1 // pred_check
      _
    $region131: #{tpu_custom_call.1} parent=1 // pred_check_branch
      %7191 = sbr.rel (0) target = $region133
    $region132: #{tpu_custom_call.1} parent=1 // pred_region
      %7192 = dma.done [#allocation21], 128
    $region133: #{tpu_custom_call.1} parent=1 // pred_fallthru
      _
    %7193 = vsyncpa [#allocation5], 1
    %7194 = vsyncpa [#allocation8], 1
    %7195 = vsyncpa [#allocation11], 1
    %7196 = vsyncpa [#allocation14], 1
    %7197 = vsyncpa [#allocation17], 1
    %7198 = vsyncpa [#allocation6], 1
    %7199 = vsyncpa [#allocation21], 1

</llo_original>
